<compile_context>
chip_gen: v7x
topology: tpu7x:2x2x1
jax: 0.10.0
libtpu: 0.0.40
codegen_flags: <defaults>
</compile_context>

<pallas_src>
import math

import jax
import jax.numpy as jnp
from jax import lax
from jax.experimental import pallas as pl
from jax.experimental.pallas import tpu as pltpu


# ----------------------------- hardware-aware config --------------------------

def _vmem_capacity_bytes():
    try:
        info = pltpu.get_tpu_info()
        cap = getattr(info, "vmem_capacity_bytes", None)
        if cap:
            return int(cap)
    except Exception:
        pass
    return 64 * 1024 * 1024  # conservative fallback: v7x per-TensorCore VMEM


def _round_up(x, m):
    return ((x + m - 1) // m) * m


def _pick_div_tile(total, cap):
    """Largest nice row tile that divides `total`, fits `cap`, and (if possible)
    leaves >= 2 blocks so v7x's two TensorCores both get work."""
    cands = (4096, 2048, 1024, 512, 256, 128, 64, 32, 16, 8)
    for c in cands:
        if c <= cap and total % c == 0 and total // c >= 2:
            return c
    for c in cands:
        if c <= cap and total % c == 0:
            return c
    return total  # single full-extent block (always BlockSpec-legal)


# ----------------------------- fused conv + BN-stats kernel -------------------

def _make_conv_kernel(KH, KW, OH, OW, stride):
    T, OHW = KH * KW, OH * OW

    def kernel(x_ref, w_ref, y_ref, psum_ref, pssq_ref):
        # x_ref : (Hp, Wp, Cg)  padded input window (one image, one group), compute dtype
        # w_ref : (T, Cg, tn)   per-tap weights for this C_out tile
        # y_ref : (OHW, tn)     conv output tile (compute dtype)
        # psum/pssq : (8, tn)   f32 per-channel partial stats, folded to 8 sublanes
        cg = x_ref.shape[-1]
        tn = y_ref.shape[-1]
        acc = jnp.zeros((OHW, tn), jnp.float32)
        for i in range(KH):              # in-kernel tap accumulation (no im2col in HBM)
            for j in range(KW):
                if stride == 1:
                    slab = x_ref[i:i + OH, j:j + OW, :]
                else:
                    slab = x_ref[pl.ds(i, OH, stride=stride),
                                 pl.ds(j, OW, stride=stride), :]
                acc = acc + jnp.dot(slab.reshape(OHW, cg), w_ref[i * KW + j],
                                    preferred_element_type=jnp.float32)
        y_ref[...] = acc.astype(y_ref.dtype)

        # Fused BN statistics from the f32 accumulator (before any downcast).
        if OHW % 8 == 0:
            # split the sublane axis -> pure VPU adds; cross-sublane finish is in JAX.
            psum_ref[...] = acc.reshape(OHW // 8, 8, tn).sum(axis=0)
            pssq_ref[...] = (acc * acc).reshape(OHW // 8, 8, tn).sum(axis=0)
        else:
            s = jnp.sum(acc, axis=0, keepdims=True)
            q = jnp.sum(acc * acc, axis=0, keepdims=True)
            # /8 then 8 broadcast rows re-sum to (numerically) the same total.
            psum_ref[...] = jnp.broadcast_to(s * 0.125, (8, tn))
            pssq_ref[...] = jnp.broadcast_to(q * 0.125, (8, tn))

    return kernel


def _conv_bn_stats(x5, w5, *, KH, KW, OH, OW, stride, tn, compute_dtype, vmem_limit):
    G, N, Hp, Wp, Cg = x5.shape
    _, T, _, Cgp = w5.shape
    OHW = OH * OW
    NJ = Cgp // tn
    Ctot = G * Cgp
    kernel = _make_conv_kernel(KH, KW, OH, OW, stride)
    return pl.pallas_call(
        kernel,
        out_shape=(jax.ShapeDtypeStruct((N, OHW, Ctot), compute_dtype),
                   jax.ShapeDtypeStruct((N * 8, Ctot), jnp.float32),
                   jax.ShapeDtypeStruct((N * 8, Ctot), jnp.float32)),
        grid_spec=pltpu.PrefetchScalarGridSpec(
            num_scalar_prefetch=0,
            grid=(G, N, NJ),
            in_specs=[
                # whole padded image window for (group g, image n); resident across j
                pl.BlockSpec((None, None, Hp, Wp, Cg),
                             lambda g, n, j: (g, n, 0, 0, 0)),
                pl.BlockSpec((None, T, Cg, tn), lambda g, n, j: (g, 0, 0, j)),
            ],
            out_specs=[
                pl.BlockSpec((None, OHW, tn), lambda g, n, j: (n, 0, g * NJ + j)),
                pl.BlockSpec((8, tn), lambda g, n, j: (n, g * NJ + j)),
                pl.BlockSpec((8, tn), lambda g, n, j: (n, g * NJ + j)),
            ]),
        compiler_params=pltpu.CompilerParams(
            dimension_semantics=("parallel", "parallel", "parallel"),
            vmem_limit_bytes=vmem_limit),
    )(x5, w5)


# ----------------------------- BN apply (tiled, optionally in place) ----------

def _bn_apply_kernel(y_ref, scale_ref, shift_ref, o_ref):
    o_ref[...] = (y_ref[...].astype(jnp.float32) * scale_ref[...]
                  + shift_ref[...]).astype(o_ref.dtype)


def _bn_apply(y2d, scale, shift, *, tm, out_dtype, vmem_limit):
    Mr, C = y2d.shape
    if Mr % tm != 0:                     # safety; _pick_div_tile guarantees divisibility
        tm = Mr
    alias = {0: 0} if y2d.dtype == jnp.dtype(out_dtype) else {}
    return pl.pallas_call(
        _bn_apply_kernel,
        out_shape=jax.ShapeDtypeStruct((Mr, C), out_dtype),
        grid_spec=pltpu.PrefetchScalarGridSpec(
            num_scalar_prefetch=0,
            grid=(Mr // tm,),
            in_specs=[pl.BlockSpec((tm, C), lambda i: (i, 0)),
                      pl.BlockSpec((1, C), lambda i: (0, 0)),
                      pl.BlockSpec((1, C), lambda i: (0, 0))],
            out_specs=pl.BlockSpec((tm, C), lambda i: (i, 0))),
        compiler_params=pltpu.CompilerParams(
            dimension_semantics=("parallel",),
            vmem_limit_bytes=vmem_limit),
        input_output_aliases=alias,
    )(y2d, scale, shift)


# ----------------------------- forward -----------------------------------------

def conv_bn_forward(x_nchw, weight, gamma, beta, *, stride=1, padding=0, groups=1,
                    eps=1e-5, compute_dtype=jnp.bfloat16, fold_small_groups=True,
                    data_format="NCHW"):
    """ConvBN forward: Conv2d(bias=False) + BatchNorm2d (fresh module => train-mode
    batch statistics).  x: [N, Cin, H, W]; weight: [Cout, Cin//groups, KH, KW] (OIHW).
    Returns float32 [N, Cout, OH, OW] (or NHWC when data_format="NHWC")."""
    N, Cin, H, W = x_nchw.shape
    Cout, Cin_g, KH, KW = weight.shape
    assert Cin_g * groups == Cin and Cout % groups == 0
    cout_g = Cout // groups
    OH = (H + 2 * padding - KH) // stride + 1
    OW = (W + 2 * padding - KW) // stride + 1
    M = N * OH * OW
    Hp, Wp = H + 2 * padding, W + 2 * padding

    # --- weights: OIHW -> [G, KH*KW, Cin_g, cout_g] (tap-major, channel-minor) ---
    w_g = jnp.transpose(weight.reshape(groups, cout_g, Cin_g, KH, KW), (0, 3, 4, 2, 1))
    # Small-group folding: when a group's C_out is far below one 128-lane tile, fold all
    # groups into a single GEMM with a block-diagonal weight so lane padding (and the BN
    # column padding) is paid once instead of per group.
    if (groups > 1 and fold_small_groups and cout_g < 128
            and Cin * Cout * KH * KW <= (1 << 22)):
        wbd = jnp.zeros((KH, KW, Cin, Cout), weight.dtype)
        for g in range(groups):
            wbd = wbd.at[:, :, g * Cin_g:(g + 1) * Cin_g,
                         g * cout_g:(g + 1) * cout_g].set(w_g[g])
        w_g = wbd[None]
        G, cg_in, cg_out = 1, Cin, Cout
    else:
        G, cg_in, cg_out = groups, Cin_g, cout_g

    Cgp = _round_up(cg_out, 128)                      # lane-dense output stores
    cgp_in = _round_up(cg_in, 8)                      # sublane-align the tap contraction
    w5 = w_g.reshape(G, KH * KW, cg_in, cg_out)
    w5 = jnp.pad(w5, ((0, 0), (0, 0), (0, cgp_in - cg_in), (0, Cgp - cg_out)))
    w5 = w5.astype(compute_dtype)

    # --- activations: NCHW -> padded NHWC, grouped on a leading axis (input-sized pass)
    xp = jnp.pad(jnp.transpose(x_nchw, (0, 2, 3, 1)),
                 ((0, 0), (padding, padding), (padding, padding), (0, 0)))
    if G == 1:
        x5 = xp.reshape(1, N, Hp, Wp, Cin)
    else:
        x5 = jnp.transpose(xp.reshape(N, Hp, Wp, G, cg_in), (3, 0, 1, 2, 4))
    if cgp_in != cg_in:
        x5 = jnp.pad(x5, ((0, 0), (0, 0), (0, 0), (0, 0), (0, cgp_in - cg_in)))
    x5 = x5.astype(compute_dtype)

    # --- generation-aware VMEM budget & tile choice ---
    vmem_cap = _vmem_capacity_bytes()
    vmem_limit = vmem_cap * 5 // 8        # headroom for compiler scratch (v7x: 64 MiB)
    big_vmem = vmem_cap >= (96 << 20)     # v5e / v6e: 128 MiB -> bigger tiles
    tn = 128
    for cand in ((512, 256, 128) if big_vmem else (256, 128)):
        if Cgp % cand == 0:
            tn = cand
            break

    # --- conv + fused BN statistics (single pass over activations) ---
    y, psum, pssq = _conv_bn_stats(
        x5, w5, KH=KH, KW=KW, OH=OH, OW=OW, stride=stride, tn=tn,
        compute_dtype=compute_dtype, vmem_limit=vmem_limit)
    Ctot = G * Cgp

    # --- finish BN statistics in plain JAX (tiny [N*8, Ctot] partials) ---
    s = jnp.sum(psum, axis=0)
    ss = jnp.sum(pssq, axis=0)
    mean = s / jnp.float32(M)
    var = jnp.maximum(ss / jnp.float32(M) - mean * mean, 0.0)    # biased batch variance
    pad_c = Cgp - cg_out
    gamma_p = jnp.pad(gamma.astype(jnp.float32).reshape(G, cg_out),
                      ((0, 0), (0, pad_c)), constant_values=1.0).reshape(-1)
    beta_p = jnp.pad(beta.astype(jnp.float32).reshape(G, cg_out),
                     ((0, 0), (0, pad_c))).reshape(-1)
    scale_vec = gamma_p * lax.rsqrt(var + eps)
    scale = scale_vec.reshape(1, Ctot)
    shift = (beta_p - mean * scale_vec).reshape(1, Ctot)

    # --- BN apply: one FMA per element, tiled, in place when dtypes match ---
    y2d = y.reshape(M, Ctot)
    row_bytes = Ctot * (jnp.dtype(compute_dtype).itemsize + 4) * 2
    row_cap = min(2048 if big_vmem else 1024,
                  max(8, (vmem_limit // 3) // max(row_bytes, 1)))
    tm_a = _pick_div_tile(M, row_cap)
    out2d = _bn_apply(y2d, scale, shift, tm=tm_a, out_dtype=jnp.float32,
                      vmem_limit=vmem_limit)

    # --- strip channel padding, restore requested layout ---
    if Cgp != cg_out:
        out2d = out2d.reshape(M, G, Cgp)[:, :, :cg_out].reshape(M, Cout)
    out = out2d.reshape(N, OH, OW, Cout)
    if data_format == "NHWC":
        return out                       # consumers that take NHWC skip the transpose
    return jnp.transpose(out, (0, 3, 1, 2))


# ----------------------------- reference & test ---------------------------------

def _reference(x, w, gamma, beta, *, stride, padding, groups, eps):
    y = lax.conv_general_dilated(
        x, w, window_strides=(stride, stride),
        padding=[(padding, padding), (padding, padding)],
        dimension_numbers=("NCHW", "OIHW", "NCHW"),
        feature_group_count=groups)
    mean = jnp.mean(y, axis=(0, 2, 3), keepdims=True)
    var = jnp.mean((y - mean) ** 2, axis=(0, 2, 3), keepdims=True)
    return ((y - mean) * lax.rsqrt(var + eps) * gamma.reshape(1, -1, 1, 1)
            + beta.reshape(1, -1, 1, 1))


if __name__ == "__main__":
    # Small shapes consistent with ConvBN(ch_in=4, ch_out=8, kernel_size=3, stride=1, padding=1)
    N, CH_IN, CH_OUT, H, W = 2, 4, 8, 16, 16
    KSZ, STRIDE, PAD, EPS = 3, 1, 1, 1e-5

    key = jax.random.PRNGKey(0)
    kx, kw1, kw2, kg, kb = jax.random.split(key, 5)
    x = jax.random.normal(kx, (N, CH_IN, H, W), dtype=jnp.float32)

    fwd = jax.jit(conv_bn_forward,
                  static_argnames=("stride", "padding", "groups", "eps",
                                   "compute_dtype", "fold_small_groups", "data_format"))

    def check(out, ref, atol, rtol, name):
        assert out.shape == ref.shape, name
        ok = bool(jnp.allclose(out, ref, atol=atol, rtol=rtol))
        assert ok, (name, float(jnp.max(jnp.abs(out - ref))))

    # BatchNorm2d default affine params (gamma=1, beta=0) plus a non-trivial affine state.
    gamma1 = jnp.ones((CH_OUT,), jnp.float32)
    beta1 = jnp.zeros((CH_OUT,), jnp.float32)
    gamma2 = 1.0 + 0.1 * jax.random.normal(kg, (CH_OUT,), jnp.float32)
    beta2 = 0.1 * jax.random.normal(kb, (CH_OUT,), jnp.float32)

    # --- groups=1, f32 MXU feeds (tight numerical check) ---
    fan_in1 = CH_IN * KSZ * KSZ           # kaiming_normal_: std = sqrt(2 / fan_in)
    w1 = math.sqrt(2.0 / fan_in1) * jax.random.normal(
        kw1, (CH_OUT, CH_IN, KSZ, KSZ), dtype=jnp.float32)
    out = jax.block_until_ready(fwd(x, w1, gamma1, beta1, stride=STRIDE, padding=PAD,
                                    groups=1, eps=EPS, compute_dtype=jnp.float32))
    ref = _reference(x, w1, gamma1, beta1, stride=STRIDE, padding=PAD, groups=1, eps=EPS)
    check(out, ref, 1e-4, 1e-4, "g1_f32")

    # --- groups=1, default bf16 MXU feeds (dtype-dependent tolerance) ---
    out = jax.block_until_ready(fwd(x, w1, gamma2, beta2, stride=STRIDE, padding=PAD,
                                    groups=1, eps=EPS))
    ref = _reference(x, w1, gamma2, beta2, stride=STRIDE, padding=PAD, groups=1, eps=EPS)
    check(out, ref, 5e-2, 5e-2, "g1_bf16")

    # --- groups=2, default path: small groups folded into a block-diagonal GEMM ---
    GROUPS = 2
    fan_in2 = (CH_IN // GROUPS) * KSZ * KSZ
    w2 = math.sqrt(2.0 / fan_in2) * jax.random.normal(
        kw2, (CH_OUT, CH_IN // GROUPS, KSZ, KSZ), dtype=jnp.float32)
    out = jax.block_until_ready(fwd(x, w2, gamma2, beta2, stride=STRIDE, padding=PAD,
                                    groups=GROUPS, eps=EPS))
    ref = _reference(x, w2, gamma2, beta2, stride=STRIDE, padding=PAD,
                     groups=GROUPS, eps=EPS)
    check(out, ref, 5e-2, 5e-2, "g2_bf16_folded")

    # --- groups=2, true per-group grid path (folding off), f32 tight ---
    out = jax.block_until_ready(fwd(x, w2, gamma1, beta1, stride=STRIDE, padding=PAD,
                                    groups=GROUPS, eps=EPS, compute_dtype=jnp.float32,
                                    fold_small_groups=False))
    ref = _reference(x, w2, gamma1, beta1, stride=STRIDE, padding=PAD,
                     groups=GROUPS, eps=EPS)
    check(out, ref, 1e-4, 1e-4, "g2_f32_grouped")

    print("KERNEL_OK")
</pallas_src>

<mosaic_0001>
module attributes {stable_mosaic.version = 11 : i64} {
  func.func @kernel(%arg0: i32, %arg1: i32, %arg2: i32, %arg3: memref<1x1x18x18x8xf32, #tpu.memory_space<vmem>>, %arg4: memref<1x9x8x128xf32, #tpu.memory_space<vmem>>, %arg5: memref<1x256x128xf32, #tpu.memory_space<vmem>>, %arg6: memref<8x128xf32, #tpu.memory_space<vmem>>, %arg7: memref<8x128xf32, #tpu.memory_space<vmem>>) attributes {dimension_semantics = [#tpu.dimension_semantics<parallel>, #tpu.dimension_semantics<parallel>, #tpu.dimension_semantics<parallel>], iteration_bounds = array<i64: 1, 2, 1>, scalar_prefetch = 0 : i64, scratch_operands = 0 : i64, tpu.core_type = #tpu.core_type<tc>, window_params = [{transform_indices = @transform_0, window_bounds = array<i64: 1, 1, 18, 18, 8>}, {transform_indices = @transform_1, window_bounds = array<i64: 1, 9, 8, 128>}, {transform_indices = @transform_2, window_bounds = array<i64: 1, 256, 128>}, {transform_indices = @transform_3, window_bounds = array<i64: 8, 128>}, {transform_indices = @transform_4, window_bounds = array<i64: 8, 128>}]} {
    %cst = arith.constant 0.000000e+00 : f32
    %0 = vector.broadcast %cst : f32 to vector<256x128xf32>
    %c0 = arith.constant 0 : index
    %c0_0 = arith.constant 0 : index
    %c0_1 = arith.constant 0 : index
    %c0_2 = arith.constant 0 : index
    %c0_3 = arith.constant 0 : index
    %1 = vector.load %arg3[%c0, %c0_0, %c0_1, %c0_2, %c0_3] : memref<1x1x18x18x8xf32, #tpu.memory_space<vmem>>, vector<1x1x16x16x8xf32>
    %2 = vector.shape_cast %1 : vector<1x1x16x16x8xf32> to vector<16x16x8xf32>
    %3 = vector.shape_cast %2 : vector<16x16x8xf32> to vector<256x8xf32>
    %c0_4 = arith.constant 0 : index
    %c0_5 = arith.constant 0 : index
    %c0_6 = arith.constant 0 : index
    %c0_7 = arith.constant 0 : index
    %4 = vector.load %arg4[%c0_4, %c0_5, %c0_6, %c0_7] : memref<1x9x8x128xf32, #tpu.memory_space<vmem>>, vector<1x1x8x128xf32>
    %5 = vector.shape_cast %4 : vector<1x1x8x128xf32> to vector<8x128xf32>
    %cst_8 = arith.constant dense<0.000000e+00> : vector<256x128xf32>
    %6 = tpu.matmul %3, %5, %cst_8 {dimension_numbers = #tpu.dot_dimension_numbers<[1], [0], [0], [1], [0, 0, 1, 1], [], []>} : vector<256x8xf32>, vector<8x128xf32>, vector<256x128xf32> -> vector<256x128xf32>
    %7 = arith.addf %0, %6 : vector<256x128xf32>
    %c0_9 = arith.constant 0 : index
    %c0_10 = arith.constant 0 : index
    %c0_11 = arith.constant 0 : index
    %c1 = arith.constant 1 : index
    %c0_12 = arith.constant 0 : index
    %8 = vector.load %arg3[%c0_9, %c0_10, %c0_11, %c1, %c0_12] : memref<1x1x18x18x8xf32, #tpu.memory_space<vmem>>, vector<1x1x16x16x8xf32>
    %9 = vector.shape_cast %8 : vector<1x1x16x16x8xf32> to vector<16x16x8xf32>
    %10 = vector.shape_cast %9 : vector<16x16x8xf32> to vector<256x8xf32>
    %c0_13 = arith.constant 0 : index
    %c1_14 = arith.constant 1 : index
    %c0_15 = arith.constant 0 : index
    %c0_16 = arith.constant 0 : index
    %11 = vector.load %arg4[%c0_13, %c1_14, %c0_15, %c0_16] : memref<1x9x8x128xf32, #tpu.memory_space<vmem>>, vector<1x1x8x128xf32>
    %12 = vector.shape_cast %11 : vector<1x1x8x128xf32> to vector<8x128xf32>
    %cst_17 = arith.constant dense<0.000000e+00> : vector<256x128xf32>
    %13 = tpu.matmul %10, %12, %cst_17 {dimension_numbers = #tpu.dot_dimension_numbers<[1], [0], [0], [1], [0, 0, 1, 1], [], []>} : vector<256x8xf32>, vector<8x128xf32>, vector<256x128xf32> -> vector<256x128xf32>
    %14 = arith.addf %7, %13 : vector<256x128xf32>
    %c0_18 = arith.constant 0 : index
    %c0_19 = arith.constant 0 : index
    %c0_20 = arith.constant 0 : index
    %c2 = arith.constant 2 : index
    %c0_21 = arith.constant 0 : index
    %15 = vector.load %arg3[%c0_18, %c0_19, %c0_20, %c2, %c0_21] : memref<1x1x18x18x8xf32, #tpu.memory_space<vmem>>, vector<1x1x16x16x8xf32>
    %16 = vector.shape_cast %15 : vector<1x1x16x16x8xf32> to vector<16x16x8xf32>
    %17 = vector.shape_cast %16 : vector<16x16x8xf32> to vector<256x8xf32>
    %c0_22 = arith.constant 0 : index
    %c2_23 = arith.constant 2 : index
    %c0_24 = arith.constant 0 : index
    %c0_25 = arith.constant 0 : index
    %18 = vector.load %arg4[%c0_22, %c2_23, %c0_24, %c0_25] : memref<1x9x8x128xf32, #tpu.memory_space<vmem>>, vector<1x1x8x128xf32>
    %19 = vector.shape_cast %18 : vector<1x1x8x128xf32> to vector<8x128xf32>
    %cst_26 = arith.constant dense<0.000000e+00> : vector<256x128xf32>
    %20 = tpu.matmul %17, %19, %cst_26 {dimension_numbers = #tpu.dot_dimension_numbers<[1], [0], [0], [1], [0, 0, 1, 1], [], []>} : vector<256x8xf32>, vector<8x128xf32>, vector<256x128xf32> -> vector<256x128xf32>
    %21 = arith.addf %14, %20 : vector<256x128xf32>
    %c0_27 = arith.constant 0 : index
    %c0_28 = arith.constant 0 : index
    %c1_29 = arith.constant 1 : index
    %c0_30 = arith.constant 0 : index
    %c0_31 = arith.constant 0 : index
    %22 = vector.load %arg3[%c0_27, %c0_28, %c1_29, %c0_30, %c0_31] : memref<1x1x18x18x8xf32, #tpu.memory_space<vmem>>, vector<1x1x16x16x8xf32>
    %23 = vector.shape_cast %22 : vector<1x1x16x16x8xf32> to vector<16x16x8xf32>
    %24 = vector.shape_cast %23 : vector<16x16x8xf32> to vector<256x8xf32>
    %c0_32 = arith.constant 0 : index
    %c3 = arith.constant 3 : index
    %c0_33 = arith.constant 0 : index
    %c0_34 = arith.constant 0 : index
    %25 = vector.load %arg4[%c0_32, %c3, %c0_33, %c0_34] : memref<1x9x8x128xf32, #tpu.memory_space<vmem>>, vector<1x1x8x128xf32>
    %26 = vector.shape_cast %25 : vector<1x1x8x128xf32> to vector<8x128xf32>
    %cst_35 = arith.constant dense<0.000000e+00> : vector<256x128xf32>
    %27 = tpu.matmul %24, %26, %cst_35 {dimension_numbers = #tpu.dot_dimension_numbers<[1], [0], [0], [1], [0, 0, 1, 1], [], []>} : vector<256x8xf32>, vector<8x128xf32>, vector<256x128xf32> -> vector<256x128xf32>
    %28 = arith.addf %21, %27 : vector<256x128xf32>
    %c0_36 = arith.constant 0 : index
    %c0_37 = arith.constant 0 : index
    %c1_38 = arith.constant 1 : index
    %c1_39 = arith.constant 1 : index
    %c0_40 = arith.constant 0 : index
    %29 = vector.load %arg3[%c0_36, %c0_37, %c1_38, %c1_39, %c0_40] : memref<1x1x18x18x8xf32, #tpu.memory_space<vmem>>, vector<1x1x16x16x8xf32>
    %30 = vector.shape_cast %29 : vector<1x1x16x16x8xf32> to vector<16x16x8xf32>
    %31 = vector.shape_cast %30 : vector<16x16x8xf32> to vector<256x8xf32>
    %c0_41 = arith.constant 0 : index
    %c4 = arith.constant 4 : index
    %c0_42 = arith.constant 0 : index
    %c0_43 = arith.constant 0 : index
    %32 = vector.load %arg4[%c0_41, %c4, %c0_42, %c0_43] : memref<1x9x8x128xf32, #tpu.memory_space<vmem>>, vector<1x1x8x128xf32>
    %33 = vector.shape_cast %32 : vector<1x1x8x128xf32> to vector<8x128xf32>
    %cst_44 = arith.constant dense<0.000000e+00> : vector<256x128xf32>
    %34 = tpu.matmul %31, %33, %cst_44 {dimension_numbers = #tpu.dot_dimension_numbers<[1], [0], [0], [1], [0, 0, 1, 1], [], []>} : vector<256x8xf32>, vector<8x128xf32>, vector<256x128xf32> -> vector<256x128xf32>
    %35 = arith.addf %28, %34 : vector<256x128xf32>
    %c0_45 = arith.constant 0 : index
    %c0_46 = arith.constant 0 : index
    %c1_47 = arith.constant 1 : index
    %c2_48 = arith.constant 2 : index
    %c0_49 = arith.constant 0 : index
    %36 = vector.load %arg3[%c0_45, %c0_46, %c1_47, %c2_48, %c0_49] : memref<1x1x18x18x8xf32, #tpu.memory_space<vmem>>, vector<1x1x16x16x8xf32>
    %37 = vector.shape_cast %36 : vector<1x1x16x16x8xf32> to vector<16x16x8xf32>
    %38 = vector.shape_cast %37 : vector<16x16x8xf32> to vector<256x8xf32>
    %c0_50 = arith.constant 0 : index
    %c5 = arith.constant 5 : index
    %c0_51 = arith.constant 0 : index
    %c0_52 = arith.constant 0 : index
    %39 = vector.load %arg4[%c0_50, %c5, %c0_51, %c0_52] : memref<1x9x8x128xf32, #tpu.memory_space<vmem>>, vector<1x1x8x128xf32>
    %40 = vector.shape_cast %39 : vector<1x1x8x128xf32> to vector<8x128xf32>
    %cst_53 = arith.constant dense<0.000000e+00> : vector<256x128xf32>
    %41 = tpu.matmul %38, %40, %cst_53 {dimension_numbers = #tpu.dot_dimension_numbers<[1], [0], [0], [1], [0, 0, 1, 1], [], []>} : vector<256x8xf32>, vector<8x128xf32>, vector<256x128xf32> -> vector<256x128xf32>
    %42 = arith.addf %35, %41 : vector<256x128xf32>
    %c0_54 = arith.constant 0 : index
    %c0_55 = arith.constant 0 : index
    %c2_56 = arith.constant 2 : index
    %c0_57 = arith.constant 0 : index
    %c0_58 = arith.constant 0 : index
    %43 = vector.load %arg3[%c0_54, %c0_55, %c2_56, %c0_57, %c0_58] : memref<1x1x18x18x8xf32, #tpu.memory_space<vmem>>, vector<1x1x16x16x8xf32>
    %44 = vector.shape_cast %43 : vector<1x1x16x16x8xf32> to vector<16x16x8xf32>
    %45 = vector.shape_cast %44 : vector<16x16x8xf32> to vector<256x8xf32>
    %c0_59 = arith.constant 0 : index
    %c6 = arith.constant 6 : index
    %c0_60 = arith.constant 0 : index
    %c0_61 = arith.constant 0 : index
    %46 = vector.load %arg4[%c0_59, %c6, %c0_60, %c0_61] : memref<1x9x8x128xf32, #tpu.memory_space<vmem>>, vector<1x1x8x128xf32>
    %47 = vector.shape_cast %46 : vector<1x1x8x128xf32> to vector<8x128xf32>
    %cst_62 = arith.constant dense<0.000000e+00> : vector<256x128xf32>
    %48 = tpu.matmul %45, %47, %cst_62 {dimension_numbers = #tpu.dot_dimension_numbers<[1], [0], [0], [1], [0, 0, 1, 1], [], []>} : vector<256x8xf32>, vector<8x128xf32>, vector<256x128xf32> -> vector<256x128xf32>
    %49 = arith.addf %42, %48 : vector<256x128xf32>
    %c0_63 = arith.constant 0 : index
    %c0_64 = arith.constant 0 : index
    %c2_65 = arith.constant 2 : index
    %c1_66 = arith.constant 1 : index
    %c0_67 = arith.constant 0 : index
    %50 = vector.load %arg3[%c0_63, %c0_64, %c2_65, %c1_66, %c0_67] : memref<1x1x18x18x8xf32, #tpu.memory_space<vmem>>, vector<1x1x16x16x8xf32>
    %51 = vector.shape_cast %50 : vector<1x1x16x16x8xf32> to vector<16x16x8xf32>
    %52 = vector.shape_cast %51 : vector<16x16x8xf32> to vector<256x8xf32>
    %c0_68 = arith.constant 0 : index
    %c7 = arith.constant 7 : index
    %c0_69 = arith.constant 0 : index
    %c0_70 = arith.constant 0 : index
    %53 = vector.load %arg4[%c0_68, %c7, %c0_69, %c0_70] : memref<1x9x8x128xf32, #tpu.memory_space<vmem>>, vector<1x1x8x128xf32>
    %54 = vector.shape_cast %53 : vector<1x1x8x128xf32> to vector<8x128xf32>
    %cst_71 = arith.constant dense<0.000000e+00> : vector<256x128xf32>
    %55 = tpu.matmul %52, %54, %cst_71 {dimension_numbers = #tpu.dot_dimension_numbers<[1], [0], [0], [1], [0, 0, 1, 1], [], []>} : vector<256x8xf32>, vector<8x128xf32>, vector<256x128xf32> -> vector<256x128xf32>
    %56 = arith.addf %49, %55 : vector<256x128xf32>
    %c0_72 = arith.constant 0 : index
    %c0_73 = arith.constant 0 : index
    %c2_74 = arith.constant 2 : index
    %c2_75 = arith.constant 2 : index
    %c0_76 = arith.constant 0 : index
    %57 = vector.load %arg3[%c0_72, %c0_73, %c2_74, %c2_75, %c0_76] : memref<1x1x18x18x8xf32, #tpu.memory_space<vmem>>, vector<1x1x16x16x8xf32>
    %58 = vector.shape_cast %57 : vector<1x1x16x16x8xf32> to vector<16x16x8xf32>
    %59 = vector.shape_cast %58 : vector<16x16x8xf32> to vector<256x8xf32>
    %c0_77 = arith.constant 0 : index
    %c8 = arith.constant 8 : index
    %c0_78 = arith.constant 0 : index
    %c0_79 = arith.constant 0 : index
    %60 = vector.load %arg4[%c0_77, %c8, %c0_78, %c0_79] : memref<1x9x8x128xf32, #tpu.memory_space<vmem>>, vector<1x1x8x128xf32>
    %61 = vector.shape_cast %60 : vector<1x1x8x128xf32> to vector<8x128xf32>
    %cst_80 = arith.constant dense<0.000000e+00> : vector<256x128xf32>
    %62 = tpu.matmul %59, %61, %cst_80 {dimension_numbers = #tpu.dot_dimension_numbers<[1], [0], [0], [1], [0, 0, 1, 1], [], []>} : vector<256x8xf32>, vector<8x128xf32>, vector<256x128xf32> -> vector<256x128xf32>
    %63 = arith.addf %56, %62 : vector<256x128xf32>
    %c0_81 = arith.constant 0 : index
    %c0_82 = arith.constant 0 : index
    %c0_83 = arith.constant 0 : index
    %64 = vector.load %arg5[%c0_81, %c0_82, %c0_83] : memref<1x256x128xf32, #tpu.memory_space<vmem>>, vector<1x256x128xf32>
    %65 = vector.shape_cast %64 : vector<1x256x128xf32> to vector<256x128xf32>
    %66 = vector.shape_cast %63 : vector<256x128xf32> to vector<1x256x128xf32>
    tpu.vector_store %arg5[%c0_81, %c0_82, %c0_83], %66 {strides = array<i32>} : memref<1x256x128xf32, #tpu.memory_space<vmem>>, vector<1x256x128xf32>,
    %67 = vector.shape_cast %63 : vector<256x128xf32> to vector<32x8x128xf32>
    %cst_84 = arith.constant dense<0.000000e+00> : vector<8x128xf32>
    %68 = vector.multi_reduction <add>, %67, %cst_84 [0] : vector<32x8x128xf32> to vector<8x128xf32>
    %c0_85 = arith.constant 0 : index
    %c0_86 = arith.constant 0 : index
    %69 = vector.load %arg6[%c0_85, %c0_86] : memref<8x128xf32, #tpu.memory_space<vmem>>, vector<8x128xf32>
    tpu.vector_store %arg6[%c0_85, %c0_86], %68 {strides = array<i32>} : memref<8x128xf32, #tpu.memory_space<vmem>>, vector<8x128xf32>,
    %70 = arith.mulf %63, %63 : vector<256x128xf32>
    %71 = vector.shape_cast %70 : vector<256x128xf32> to vector<32x8x128xf32>
    %cst_87 = arith.constant dense<0.000000e+00> : vector<8x128xf32>
    %72 = vector.multi_reduction <add>, %71, %cst_87 [0] : vector<32x8x128xf32> to vector<8x128xf32>
    %c0_88 = arith.constant 0 : index
    %c0_89 = arith.constant 0 : index
    %73 = vector.load %arg7[%c0_88, %c0_89] : memref<8x128xf32, #tpu.memory_space<vmem>>, vector<8x128xf32>
    tpu.vector_store %arg7[%c0_88, %c0_89], %72 {strides = array<i32>} : memref<8x128xf32, #tpu.memory_space<vmem>>, vector<8x128xf32>,
    return
  }
  func.func @transform_0(%arg0: i32, %arg1: i32, %arg2: i32) -> (i32, i32, i32, i32, i32) {
    %c0_i32 = arith.constant 0 : i32
    %c0_i32_0 = arith.constant 0 : i32
    %c0_i32_1 = arith.constant 0 : i32
    %c0_i32_2 = arith.constant 0 : i32
    return %arg0, %arg1, %c0_i32, %c0_i32_0, %c0_i32_1 : i32, i32, i32, i32, i32
  }
  func.func @transform_1(%arg0: i32, %arg1: i32, %arg2: i32) -> (i32, i32, i32, i32) {
    %c0_i32 = arith.constant 0 : i32
    %c0_i32_0 = arith.constant 0 : i32
    %c0_i32_1 = arith.constant 0 : i32
    return %arg0, %c0_i32, %c0_i32_0, %arg2 : i32, i32, i32, i32
  }
  func.func @transform_2(%arg0: i32, %arg1: i32, %arg2: i32) -> (i32, i32, i32) {
    %c1_i32 = arith.constant 1 : i32
    %0 = arith.muli %arg0, %c1_i32 : i32
    %1 = arith.addi %0, %arg2 : i32
    %c0_i32 = arith.constant 0 : i32
    %c0_i32_0 = arith.constant 0 : i32
    return %arg1, %c0_i32, %1 : i32, i32, i32
  }
  func.func @transform_3(%arg0: i32, %arg1: i32, %arg2: i32) -> (i32, i32) {
    %c1_i32 = arith.constant 1 : i32
    %0 = arith.muli %arg0, %c1_i32 : i32
    %1 = arith.addi %0, %arg2 : i32
    %c0_i32 = arith.constant 0 : i32
    return %arg1, %1 : i32, i32
  }
  func.func @transform_4(%arg0: i32, %arg1: i32, %arg2: i32) -> (i32, i32) {
    %c1_i32 = arith.constant 1 : i32
    %0 = arith.muli %arg0, %c1_i32 : i32
    %1 = arith.addi %0, %arg2 : i32
    %c0_i32 = arith.constant 0 : i32
    return %arg1, %1 : i32, i32
  }
}

module attributes {stable_mosaic.version = 11 : i64} {
  func.func @_bn_apply_kernel(%arg0: i32, %arg1: memref<256x128xf32, #tpu.memory_space<vmem>>, %arg2: memref<1x128xf32, #tpu.memory_space<vmem>>, %arg3: memref<1x128xf32, #tpu.memory_space<vmem>>, %arg4: memref<256x128xf32, #tpu.memory_space<vmem>>) attributes {dimension_semantics = [#tpu.dimension_semantics<parallel>], iteration_bounds = array<i64: 2>, scalar_prefetch = 0 : i64, scratch_operands = 0 : i64, tpu.core_type = #tpu.core_type<tc>, window_params = [{transform_indices = @transform_0, window_bounds = array<i64: 256, 128>}, {pipeline_mode = #tpu.pipeline_mode<synchronous>, transform_indices = @transform_1, window_bounds = array<i64: 1, 128>}, {pipeline_mode = #tpu.pipeline_mode<synchronous>, transform_indices = @transform_2, window_bounds = array<i64: 1, 128>}, {transform_indices = @transform_3, window_bounds = array<i64: 256, 128>}]} {
    %c0 = arith.constant 0 : index
    %c0_0 = arith.constant 0 : index
    %0 = vector.load %arg1[%c0, %c0_0] : memref<256x128xf32, #tpu.memory_space<vmem>>, vector<256x128xf32>
    %c0_1 = arith.constant 0 : index
    %c0_2 = arith.constant 0 : index
    %1 = vector.load %arg2[%c0_1, %c0_2] : memref<1x128xf32, #tpu.memory_space<vmem>>, vector<1x128xf32>
    %2 = vector.broadcast %1 : vector<1x128xf32> to vector<256x128xf32>
    %3 = arith.mulf %0, %2 : vector<256x128xf32>
    %c0_3 = arith.constant 0 : index
    %c0_4 = arith.constant 0 : index
    %4 = vector.load %arg3[%c0_3, %c0_4] : memref<1x128xf32, #tpu.memory_space<vmem>>, vector<1x128xf32>
    %5 = vector.broadcast %4 : vector<1x128xf32> to vector<256x128xf32>
    %6 = arith.addf %3, %5 : vector<256x128xf32>
    %c0_5 = arith.constant 0 : index
    %c0_6 = arith.constant 0 : index
    %7 = vector.load %arg4[%c0_5, %c0_6] : memref<256x128xf32, #tpu.memory_space<vmem>>, vector<256x128xf32>
    tpu.vector_store %arg4[%c0_5, %c0_6], %6 {strides = array<i32>} : memref<256x128xf32, #tpu.memory_space<vmem>>, vector<256x128xf32>,
    return
  }
  func.func @transform_0(%arg0: i32) -> (i32, i32) {
    %c0_i32 = arith.constant 0 : i32
    %c0_i32_0 = arith.constant 0 : i32
    return %arg0, %c0_i32 : i32, i32
  }
  func.func @transform_1(%arg0: i32) -> (i32, i32) {
    %c0_i32 = arith.constant 0 : i32
    %c0_i32_0 = arith.constant 0 : i32
    %c0_i32_1 = arith.constant 0 : i32
    return %c0_i32, %c0_i32_0 : i32, i32
  }
  func.func @transform_2(%arg0: i32) -> (i32, i32) {
    %c0_i32 = arith.constant 0 : i32
    %c0_i32_0 = arith.constant 0 : i32
    %c0_i32_1 = arith.constant 0 : i32
    return %c0_i32, %c0_i32_0 : i32, i32
  }
  func.func @transform_3(%arg0: i32) -> (i32, i32) {
    %c0_i32 = arith.constant 0 : i32
    %c0_i32_0 = arith.constant 0 : i32
    return %arg0, %c0_i32 : i32, i32
  }
}

</mosaic_0001>

<llo_original>
// kernel: conv_bn_forward.3
$region0: #{conv_bn_forward.3}
  #allocation0 [shape = 'u32[]', space=smem, size = 0x4, offset = 0x4, fixed_abs, tag = 'smem constant byte address 0x4 - core index']
  #allocation1 [shape = 'u32[144,128]{1,0:T(1,128)}', space=vmem, size = 0x12000, scoped, tag = 'internal scratch']
  %s0 = inlined_call_operand.vmem [shape: f32[512,128], index: 0, kind: input, shape index: {}, may-alias: {0,3}]
  %s1 = inlined_call_operand.vmem [shape: f32[1,128], index: 1, kind: input, shape index: {}]
  %s2 = inlined_call_operand.vmem [shape: f32[1,128], index: 2, kind: input, shape index: {}]
  %s3 = inlined_call_operand.vmem [shape: f32[512,128], index: 3, kind: output, shape index: {}, may-alias: {0,3}]
  %s4 = sld [smem:[#allocation0]]
  $region45: #{conv_bn_forward.3} parent=0
    _
  %s6 = ssub.s32 1, %s4
  %s7 = scalar_select 0, %s6, %s4
  loop: start=0, step=1, limit=4
  $region2: #{conv_bn_forward.3} parent=0 // loop_pre_header
    _
  $region3: #{conv_bn_forward.3} parent=0 // loop_header
    %s9 = sphi 0, %s13
    %p10 = scmp.ge.s32.totalorder %s9, 4
    %s19 = sphi 0, %s21
    %s22 = sphi 0, %s19
    %s23 = sphi 0, %s22
    %s39 = sphi 0, %s23
    %s43 = sphi 0, %s43
    %s45 = sphi 0, %s43
    %s46 = sphi 0, %s45
    %s60 = sphi 0, %s46
    %s64 = sphi 0, %s64
    %s66 = sphi 0, %s64
    %s67 = sphi 0, %s66
    %s81 = sphi 0, %s67
    %s87 = sphi 0, %s89
    %s90 = sphi 0, %s87
    %s91 = sphi 0, %s90
    %s107 = sphi 0, %s91
  $region4: #{conv_bn_forward.3} parent=0 // loop_header_branch
    %12 = sbr.rel (%p10) target = $region8
  $region5: #{conv_bn_forward.3} parent=0 // loop_body
    %s14 = ssub.s32 %s9, 1
    %s15 = ssub.s32 %s9, 2
    %s16 = sadd.s32 %s9, 1
    %s17 = ssub.s32 %s9, %s16
    %p18 = scmp.eq.s32.totalorder %s17, 0
    %s20 = sadd.s32 %s19, 1
    %s21 = scalar_select %p18, %s19, %s20
    %p24 = pneg %p18
    %p25 = scmp.eq.s32.totalorder %s9, 1
    %p26 = por %p24, %p25
    %p27 = scmp.ne.s32.totalorder %s19, %s22
    %p28 = scmp.eq.s32.totalorder %s9, 0
    %p29 = por %p27, %p28
    %p30 = scmp.ne.s32.totalorder %s19, %s22
    %p31 = scmp.eq.s32.totalorder %s14, 1
    %p32 = por %p30, %p31
    %p33 = scmp.ne.s32.totalorder %s22, %s23
    %p34 = scmp.eq.s32.totalorder %s14, 0
    %p35 = por %p33, %p34
    %p36 = scmp.ne.s32.totalorder %s22, %s23
    %p37 = scmp.eq.s32.totalorder %s15, 1
    %p38 = por %p36, %p37
    %p40 = scmp.ne.s32.totalorder %s23, %s39
    %p41 = scmp.eq.s32.totalorder %s15, 0
    %p42 = por %p40, %p41
    %s44 = sadd.s32 %s43, 1
    %p47 = scmp.eq.s32.totalorder %s9, 1
    %p48 = scmp.ne.s32.totalorder %s43, %s45
    %p49 = scmp.eq.s32.totalorder %s9, 0
    %p50 = por %p48, %p49
    %p51 = scmp.ne.s32.totalorder %s43, %s45
    %p52 = scmp.eq.s32.totalorder %s14, 1
    %p53 = por %p51, %p52
    %p54 = scmp.ne.s32.totalorder %s45, %s46
    %p55 = scmp.eq.s32.totalorder %s14, 0
    %p56 = por %p54, %p55
    %p57 = scmp.ne.s32.totalorder %s45, %s46
    %p58 = scmp.eq.s32.totalorder %s15, 1
    %p59 = por %p57, %p58
    %p61 = scmp.ne.s32.totalorder %s46, %s60
    %p62 = scmp.eq.s32.totalorder %s15, 0
    %p63 = por %p61, %p62
    %s65 = sadd.s32 %s64, 1
    %p68 = scmp.eq.s32.totalorder %s9, 1
    %p69 = scmp.ne.s32.totalorder %s64, %s66
    %p70 = scmp.eq.s32.totalorder %s9, 0
    %p71 = por %p69, %p70
    %p72 = scmp.ne.s32.totalorder %s64, %s66
    %p73 = scmp.eq.s32.totalorder %s14, 1
    %p74 = por %p72, %p73
    %p75 = scmp.ne.s32.totalorder %s66, %s67
    %p76 = scmp.eq.s32.totalorder %s14, 0
    %p77 = por %p75, %p76
    %p78 = scmp.ne.s32.totalorder %s66, %s67
    %p79 = scmp.eq.s32.totalorder %s15, 1
    %p80 = por %p78, %p79
    %p82 = scmp.ne.s32.totalorder %s67, %s81
    %p83 = scmp.eq.s32.totalorder %s15, 0
    %p84 = por %p82, %p83
    %s85 = ssub.s32 %s9, %s16
    %p86 = scmp.eq.s32.totalorder %s85, 0
    %s88 = sadd.s32 %s87, 1
    %s89 = scalar_select %p86, %s87, %s88
    %p92 = pneg %p86
    %p93 = scmp.eq.s32.totalorder %s9, 1
    %p94 = por %p92, %p93
    %p95 = scmp.ne.s32.totalorder %s87, %s90
    %p96 = scmp.eq.s32.totalorder %s9, 0
    %p97 = por %p95, %p96
    %p98 = scmp.ne.s32.totalorder %s87, %s90
    %p99 = scmp.eq.s32.totalorder %s14, 1
    %p100 = por %p98, %p99
    %p101 = scmp.ne.s32.totalorder %s90, %s91
    %p102 = scmp.eq.s32.totalorder %s14, 0
    %p103 = por %p101, %p102
    %p104 = scmp.ne.s32.totalorder %s90, %s91
    %p105 = scmp.eq.s32.totalorder %s15, 1
    %p106 = por %p104, %p105
    %p108 = scmp.ne.s32.totalorder %s91, %s107
    %p109 = scmp.eq.s32.totalorder %s15, 0
    %p110 = por %p108, %p109
    %p111 = scmp.le.s32.totalorder 1, %s9
    %p112 = scmp.lt.s32.totalorder %s9, 3
    %p113 = pnand %p111, %p112
    %p114 = pneg %p113
    // Predicated region
    $region9: #{conv_bn_forward.3} parent=5 // pred_check
      _
    $region10: #{conv_bn_forward.3} parent=5 // pred_check_branch
      %116 = sbr.rel (%p113) target = $region12
    $region11: #{conv_bn_forward.3} parent=5 // pred_region
      %s117 = ssub.s32 %s9, 1
      // Predicated region
      $region13: #{conv_bn_forward.3} parent=11 // pred_check
        %p118 = pneg %p56
      $region14: #{conv_bn_forward.3} parent=11 // pred_check_branch
        %120 = sbr.rel (%p118) target = $region16
      $region15: #{conv_bn_forward.3} parent=11 // pred_region
        _
      $region16: #{conv_bn_forward.3} parent=11 // pred_fallthru
        _
      // Predicated region
      $region17: #{conv_bn_forward.3} parent=11 // pred_check
        %p121 = pneg %p77
      $region18: #{conv_bn_forward.3} parent=11 // pred_check_branch
        %123 = sbr.rel (%p121) target = $region20
      $region19: #{conv_bn_forward.3} parent=11 // pred_region
        _
      $region20: #{conv_bn_forward.3} parent=11 // pred_fallthru
        _
    $region12: #{conv_bn_forward.3} parent=5 // pred_fallthru
      _
    %p124 = scmp.lt.s32.totalorder %s9, 2
    // Predicated region
    $region21: #{conv_bn_forward.3} parent=5 // pred_check
      %p125 = pneg %p124
    $region22: #{conv_bn_forward.3} parent=5 // pred_check_branch
      %127 = sbr.rel (%p125) target = $region24
    $region23: #{conv_bn_forward.3} parent=5 // pred_region
      // Predicated region
      $region25: #{conv_bn_forward.3} parent=23 // pred_check
        %p128 = pneg %p29
      $region26: #{conv_bn_forward.3} parent=23 // pred_check_branch
        %130 = sbr.rel (%p128) target = $region28
      $region27: #{conv_bn_forward.3} parent=23 // pred_region
        %s131 = smul.u32 32, %s9
        %p132 = scmp.lt.s32.totalorder %s131, 63
        %s133 = scalar_select %p132, %s131, 63
        %s134 = smul.addr %s133, 8
        %s135 = scalar_lea.vmem %s0, %s134
        %s136 = smul.u32 32, %s9
      $region28: #{conv_bn_forward.3} parent=23 // pred_fallthru
        _
    $region24: #{conv_bn_forward.3} parent=5 // pred_fallthru
      _
    %p137 = scmp.le.s32.totalorder 1, %s9
    %p138 = scmp.lt.s32.totalorder %s9, 3
    %p139 = pnand %p137, %p138
    %p140 = pneg %p139
    // Predicated region
    $region29: #{conv_bn_forward.3} parent=5 // pred_check
      _
    $region30: #{conv_bn_forward.3} parent=5 // pred_check_branch
      %142 = sbr.rel (%p139) target = $region32
    $region31: #{conv_bn_forward.3} parent=5 // pred_region
      %s143 = ssub.s32 %s9, 1
      %s144 = smul.u32 32, %s14
      %p145 = scmp.lt.s32.totalorder %s144, 63
      %s146 = scalar_select %p145, %s144, 63
      %s147 = smul.addr %s146, 8
      %s148 = scalar_lea.vmem %s0, %s147
      %p149 = pneg %p35
      %p150 = pneg %p32
      %p151 = pneg %p56
      %p152 = pneg %p53
      %p153 = pneg %p77
      %p154 = pneg %p74
      %p155 = pneg %p103
      %p156 = pneg %p100
      %s157 = smul.u32 32, %s14
      %p158 = scmp.lt.s32.totalorder %s157, 63
      %s159 = scalar_select %p158, %s157, 63
      %s160 = smul.addr %s159, 8
      %s161 = scalar_lea.vmem %s3, %s160
      %s162 = smul.u32 32, %s14
      %p163 = scmp.lt.s32.totalorder %s162, 63
      %s164 = scalar_select %p163, %s162, 63
      %s165 = smul.addr %s164, 8
      %s166 = scalar_lea.vmem %s0, %s165
      %s167 = smul.u32 32, %s14
      %s168 = smul.u32 32, %s14
      %p169 = scmp.lt.s32.totalorder %s168, 63
      %s170 = scalar_select %p169, %s168, 63
      %s171 = smul.addr %s170, 8
      %s172 = scalar_lea.vmem %s3, %s171
      %s173 = smul.u32 32, %s14
      %v174 = vld [vmem:[%s166] sm:$0xff]
      %v175 = vld [vmem:[%s166 + $0x8] sm:$0xff]
      %v176 = vld [vmem:[%s166 + $0x10] sm:$0xff]
      %v177 = vld [vmem:[%s166 + $0x18] sm:$0xff]
      %v178 = vld [vmem:[%s166 + $0x20] sm:$0xff]
      %v179 = vld [vmem:[%s166 + $0x28] sm:$0xff]
      %v180 = vld [vmem:[%s166 + $0x30] sm:$0xff]
      %v181 = vld [vmem:[%s166 + $0x38] sm:$0xff]
      %v182 = vld [vmem:[%s166 + $0x40] sm:$0xff]
      %v183 = vld [vmem:[%s166 + $0x48] sm:$0xff]
      %v184 = vld [vmem:[%s166 + $0x50] sm:$0xff]
      %v185 = vld [vmem:[%s166 + $0x58] sm:$0xff]
      %v186 = vld [vmem:[%s166 + $0x60] sm:$0xff]
      %v187 = vld [vmem:[%s166 + $0x68] sm:$0xff]
      %v188 = vld [vmem:[%s166 + $0x70] sm:$0xff]
      %v189 = vld [vmem:[%s166 + $0x78] sm:$0xff]
      %v190 = vld [vmem:[%s166 + $0x80] sm:$0xff]
      %v191 = vld [vmem:[%s166 + $0x88] sm:$0xff]
      %v192 = vld [vmem:[%s166 + $0x90] sm:$0xff]
      %v193 = vld [vmem:[%s166 + $0x98] sm:$0xff]
      %v194 = vld [vmem:[%s166 + $0xa0] sm:$0xff]
      %v195 = vld [vmem:[%s166 + $0xa8] sm:$0xff]
      %v196 = vld [vmem:[%s166 + $0xb0] sm:$0xff]
      %v197 = vld [vmem:[%s166 + $0xb8] sm:$0xff]
      %v198 = vld [vmem:[%s166 + $0xc0] sm:$0xff]
      %v199 = vld [vmem:[%s166 + $0xc8] sm:$0xff]
      %v200 = vld [vmem:[%s166 + $0xd0] sm:$0xff]
      %v201 = vld [vmem:[%s166 + $0xd8] sm:$0xff]
      %v202 = vld [vmem:[%s166 + $0xe0] sm:$0xff]
      %v203 = vld [vmem:[%s166 + $0xe8] sm:$0xff]
      %v204 = vld [vmem:[%s166 + $0xf0] sm:$0xff]
      %v205 = vld [vmem:[%s166 + $0xf8] sm:$0xff]
      %v206 = vld [vmem:[%s1] sm:$0x1]
      %v208 = vlaneseq
      %v209 = vshrl.u32 %v208, 7
      %v210 = vsub.s32 0, %v209
      %v211 = vrot.slane %v206, %v210
      %v213 = vmul.f32 %v174, %v211
      %v214 = vmul.f32 %v175, %v211
      %v215 = vmul.f32 %v176, %v211
      %v216 = vmul.f32 %v177, %v211
      %v217 = vmul.f32 %v178, %v211
      %v218 = vmul.f32 %v179, %v211
      %v219 = vmul.f32 %v180, %v211
      %v220 = vmul.f32 %v181, %v211
      %v221 = vmul.f32 %v182, %v211
      %v222 = vmul.f32 %v183, %v211
      %v223 = vmul.f32 %v184, %v211
      %v224 = vmul.f32 %v185, %v211
      %v225 = vmul.f32 %v186, %v211
      %v226 = vmul.f32 %v187, %v211
      %v227 = vmul.f32 %v188, %v211
      %v228 = vmul.f32 %v189, %v211
      %v229 = vmul.f32 %v190, %v211
      %v230 = vmul.f32 %v191, %v211
      %v231 = vmul.f32 %v192, %v211
      %v232 = vmul.f32 %v193, %v211
      %v233 = vmul.f32 %v194, %v211
      %v234 = vmul.f32 %v195, %v211
      %v235 = vmul.f32 %v196, %v211
      %v236 = vmul.f32 %v197, %v211
      %v237 = vmul.f32 %v198, %v211
      %v238 = vmul.f32 %v199, %v211
      %v239 = vmul.f32 %v200, %v211
      %v240 = vmul.f32 %v201, %v211
      %v241 = vmul.f32 %v202, %v211
      %v242 = vmul.f32 %v203, %v211
      %v243 = vmul.f32 %v204, %v211
      %v244 = vmul.f32 %v205, %v211
      %v245 = vld [vmem:[%s2] sm:$0x1]
      %v247 = vlaneseq
      %v248 = vshrl.u32 %v247, 7
      %v249 = vsub.s32 0, %v248
      %v250 = vrot.slane %v245, %v249
      %v252 = vadd.f32 %v213, %v250
      %v253 = vadd.f32 %v214, %v250
      %v254 = vadd.f32 %v215, %v250
      %v255 = vadd.f32 %v216, %v250
      %v256 = vadd.f32 %v217, %v250
      %v257 = vadd.f32 %v218, %v250
      %v258 = vadd.f32 %v219, %v250
      %v259 = vadd.f32 %v220, %v250
      %v260 = vadd.f32 %v221, %v250
      %v261 = vadd.f32 %v222, %v250
      %v262 = vadd.f32 %v223, %v250
      %v263 = vadd.f32 %v224, %v250
      %v264 = vadd.f32 %v225, %v250
      %v265 = vadd.f32 %v226, %v250
      %v266 = vadd.f32 %v227, %v250
      %v267 = vadd.f32 %v228, %v250
      %v268 = vadd.f32 %v229, %v250
      %v269 = vadd.f32 %v230, %v250
      %v270 = vadd.f32 %v231, %v250
      %v271 = vadd.f32 %v232, %v250
      %v272 = vadd.f32 %v233, %v250
      %v273 = vadd.f32 %v234, %v250
      %v274 = vadd.f32 %v235, %v250
      %v275 = vadd.f32 %v236, %v250
      %v276 = vadd.f32 %v237, %v250
      %v277 = vadd.f32 %v238, %v250
      %v278 = vadd.f32 %v239, %v250
      %v279 = vadd.f32 %v240, %v250
      %v280 = vadd.f32 %v241, %v250
      %v281 = vadd.f32 %v242, %v250
      %v282 = vadd.f32 %v243, %v250
      %v283 = vadd.f32 %v244, %v250
      %284 = vst [vmem:[%s172] sm:$0xff] %v252
      %285 = vst [vmem:[%s172 + $0x8] sm:$0xff] %v253
      %286 = vst [vmem:[%s172 + $0x10] sm:$0xff] %v254
      %287 = vst [vmem:[%s172 + $0x18] sm:$0xff] %v255
      %288 = vst [vmem:[%s172 + $0x20] sm:$0xff] %v256
      %289 = vst [vmem:[%s172 + $0x28] sm:$0xff] %v257
      %290 = vst [vmem:[%s172 + $0x30] sm:$0xff] %v258
      %291 = vst [vmem:[%s172 + $0x38] sm:$0xff] %v259
      %292 = vst [vmem:[%s172 + $0x40] sm:$0xff] %v260
      %293 = vst [vmem:[%s172 + $0x48] sm:$0xff] %v261
      %294 = vst [vmem:[%s172 + $0x50] sm:$0xff] %v262
      %295 = vst [vmem:[%s172 + $0x58] sm:$0xff] %v263
      %296 = vst [vmem:[%s172 + $0x60] sm:$0xff] %v264
      %297 = vst [vmem:[%s172 + $0x68] sm:$0xff] %v265
      %298 = vst [vmem:[%s172 + $0x70] sm:$0xff] %v266
      %299 = vst [vmem:[%s172 + $0x78] sm:$0xff] %v267
      %300 = vst [vmem:[%s172 + $0x80] sm:$0xff] %v268
      %301 = vst [vmem:[%s172 + $0x88] sm:$0xff] %v269
      %302 = vst [vmem:[%s172 + $0x90] sm:$0xff] %v270
      %303 = vst [vmem:[%s172 + $0x98] sm:$0xff] %v271
      %304 = vst [vmem:[%s172 + $0xa0] sm:$0xff] %v272
      %305 = vst [vmem:[%s172 + $0xa8] sm:$0xff] %v273
      %306 = vst [vmem:[%s172 + $0xb0] sm:$0xff] %v274
      %307 = vst [vmem:[%s172 + $0xb8] sm:$0xff] %v275
      %308 = vst [vmem:[%s172 + $0xc0] sm:$0xff] %v276
      %309 = vst [vmem:[%s172 + $0xc8] sm:$0xff] %v277
      %310 = vst [vmem:[%s172 + $0xd0] sm:$0xff] %v278
      %311 = vst [vmem:[%s172 + $0xd8] sm:$0xff] %v279
      %312 = vst [vmem:[%s172 + $0xe0] sm:$0xff] %v280
      %313 = vst [vmem:[%s172 + $0xe8] sm:$0xff] %v281
      %314 = vst [vmem:[%s172 + $0xf0] sm:$0xff] %v282
      %315 = vst [vmem:[%s172 + $0xf8] sm:$0xff] %v283
      %s316 = smul.u32 32, %s14
      %p317 = scmp.lt.s32.totalorder %s316, 63
      %s318 = scalar_select %p317, %s316, 63
      %s319 = smul.addr %s318, 8
      %s320 = scalar_lea.vmem %s3, %s319
      // Predicated region
      $region33: #{conv_bn_forward.3} parent=31 // pred_check
        %p321 = pneg %p100
      $region34: #{conv_bn_forward.3} parent=31 // pred_check_branch
        %323 = sbr.rel (%p321) target = $region36
      $region35: #{conv_bn_forward.3} parent=31 // pred_region
        %s324 = smul.u32 32, %s14
      $region36: #{conv_bn_forward.3} parent=31 // pred_fallthru
        _
    $region32: #{conv_bn_forward.3} parent=5 // pred_fallthru
      _
    %p325 = scmp.le.s32.totalorder 2, %s9
    // Predicated region
    $region37: #{conv_bn_forward.3} parent=5 // pred_check
      %p326 = pneg %p325
    $region38: #{conv_bn_forward.3} parent=5 // pred_check_branch
      %328 = sbr.rel (%p326) target = $region40
    $region39: #{conv_bn_forward.3} parent=5 // pred_region
      %s329 = ssub.s32 %s9, 2
      // Predicated region
      $region41: #{conv_bn_forward.3} parent=39 // pred_check
        %p330 = pneg %p106
      $region42: #{conv_bn_forward.3} parent=39 // pred_check_branch
        %332 = sbr.rel (%p330) target = $region44
      $region43: #{conv_bn_forward.3} parent=39 // pred_region
        %s333 = smul.u32 32, %s15
        %p334 = scmp.lt.s32.totalorder %s333, 63
        %s335 = scalar_select %p334, %s333, 63
        %s336 = smul.addr %s335, 8
        %s337 = scalar_lea.vmem %s3, %s336
      $region44: #{conv_bn_forward.3} parent=39 // pred_fallthru
        _
    $region40: #{conv_bn_forward.3} parent=5 // pred_fallthru
      _
  $region6: #{conv_bn_forward.3} parent=0 // loop_footer
    %s13 = sadd.s32 1, %s9
  $region7: #{conv_bn_forward.3} parent=0 // loop_footer_branch
    %8 = sbr.rel target = $region3
  $region8: #{conv_bn_forward.3} parent=0 // loop_exit
    _

// kernel: conv_bn_forward.2
$region0: #{conv_bn_forward.2}
  #allocation0 [shape = 'u32[]', space=smem, size = 0x4, offset = 0x4, fixed_abs, tag = 'smem constant byte address 0x4 - core index']
  #allocation1 [shape = 'u32[144,128]{1,0:T(1,128)}', space=vmem, size = 0x12000, scoped, tag = 'internal scratch']
  %s0 = inlined_call_operand.vmem [shape: f32[1,2,18,18,8], index: 0, kind: input, shape index: {}]
  %s1 = inlined_call_operand.vmem [shape: f32[1,9,8,128], index: 1, kind: input, shape index: {}]
  %s2 = inlined_call_operand.vmem [shape: f32[2,256,128], index: 2, kind: output, shape index: {0}]
  %s3 = inlined_call_operand.vmem [shape: f32[16,128], index: 3, kind: output, shape index: {1}]
  %s4 = inlined_call_operand.vmem [shape: f32[16,128], index: 4, kind: output, shape index: {2}]
  %5 = xla_tuple %s2, %s3, %s4
  %s6 = sld [smem:[#allocation0]]
  $region57: #{conv_bn_forward.2} parent=0
    _
  %s8 = ssub.s32 1, %s6
  %s9 = scalar_select 0, %s8, %s6
  loop: start=0, step=1, limit=4
  $region2: #{conv_bn_forward.2} parent=0 // loop_pre_header
    _
  $region3: #{conv_bn_forward.2} parent=0 // loop_header
    %s11 = sphi 0, %s15
    %p12 = scmp.ge.s32.totalorder %s11, 4
    %s18 = sphi 0, %s37
    %s19 = sphi 0, %s33
    %s20 = sphi 0, %s29
    %s21 = sphi 0, %s18
    %s22 = sphi 0, %s19
    %s23 = sphi 0, %s20
    %s24 = sphi 0, %s21
    %s25 = sphi 0, %s22
    %s26 = sphi 0, %s23
    %s42 = sphi 0, %s44
    %s45 = sphi 0, %s42
    %s46 = sphi 0, %s45
    %s62 = sphi 0, %s46
    %s70 = sphi 0, %s72
    %s73 = sphi 0, %s70
    %s74 = sphi 0, %s73
    %s90 = sphi 0, %s74
    %s100 = sphi 0, %s102
    %s103 = sphi 0, %s100
    %s104 = sphi 0, %s103
    %s120 = sphi 0, %s104
    %s130 = sphi 0, %s132
    %s133 = sphi 0, %s130
    %s134 = sphi 0, %s133
    %s150 = sphi 0, %s134
    %s160 = sphi 0, %s162
    %s163 = sphi 0, %s160
    %s164 = sphi 0, %s163
    %s180 = sphi 0, %s164
  $region4: #{conv_bn_forward.2} parent=0 // loop_header_branch
    %14 = sbr.rel (%p12) target = $region8
  $region5: #{conv_bn_forward.2} parent=0 // loop_body
    %s16 = ssub.s32 %s11, 1
    %s17 = ssub.s32 %s11, 2
    %s27 = sadd.s32 1, %s20
    %p28 = scmp.ge.s32.totalorder %s27, 1
    %s29 = scalar_select %p28, 0, %s27
    %s30 = sadd.s32 1, %s19
    %s31 = scalar_select %p28, %s30, %s19
    %p32 = scmp.ge.s32.totalorder %s31, 2
    %s33 = scalar_select %p32, 0, %s31
    %s34 = sadd.s32 1, %s18
    %s35 = scalar_select %p32, %s34, %s18
    %p36 = scmp.ge.s32.totalorder %s35, 1
    %s37 = scalar_select %p36, 0, %s35
    %s38 = ssub.s32 %s18, %s37
    %s39 = ssub.s32 %s19, %s33
    %s40 = sor.u32 %s38, %s39
    %p41 = scmp.eq.s32.totalorder %s40, 0
    %s43 = sadd.s32 %s42, 1
    %s44 = scalar_select %p41, %s42, %s43
    %p47 = pneg %p41
    %p48 = scmp.eq.s32.totalorder %s11, 1
    %p49 = por %p47, %p48
    %p50 = scmp.ne.s32.totalorder %s42, %s45
    %p51 = scmp.eq.s32.totalorder %s11, 0
    %p52 = por %p50, %p51
    %p53 = scmp.ne.s32.totalorder %s42, %s45
    %p54 = scmp.eq.s32.totalorder %s16, 1
    %p55 = por %p53, %p54
    %p56 = scmp.ne.s32.totalorder %s45, %s46
    %p57 = scmp.eq.s32.totalorder %s16, 0
    %p58 = por %p56, %p57
    %p59 = scmp.ne.s32.totalorder %s45, %s46
    %p60 = scmp.eq.s32.totalorder %s17, 1
    %p61 = por %p59, %p60
    %p63 = scmp.ne.s32.totalorder %s46, %s62
    %p64 = scmp.eq.s32.totalorder %s17, 0
    %p65 = por %p63, %p64
    %s66 = ssub.s32 %s18, %s37
    %s67 = ssub.s32 %s20, %s29
    %s68 = sor.u32 %s66, %s67
    %p69 = scmp.eq.s32.totalorder %s68, 0
    %s71 = sadd.s32 %s70, 1
    %s72 = scalar_select %p69, %s70, %s71
    %p75 = pneg %p69
    %p76 = scmp.eq.s32.totalorder %s11, 1
    %p77 = por %p75, %p76
    %p78 = scmp.ne.s32.totalorder %s70, %s73
    %p79 = scmp.eq.s32.totalorder %s11, 0
    %p80 = por %p78, %p79
    %p81 = scmp.ne.s32.totalorder %s70, %s73
    %p82 = scmp.eq.s32.totalorder %s16, 1
    %p83 = por %p81, %p82
    %p84 = scmp.ne.s32.totalorder %s73, %s74
    %p85 = scmp.eq.s32.totalorder %s16, 0
    %p86 = por %p84, %p85
    %p87 = scmp.ne.s32.totalorder %s73, %s74
    %p88 = scmp.eq.s32.totalorder %s17, 1
    %p89 = por %p87, %p88
    %p91 = scmp.ne.s32.totalorder %s74, %s90
    %p92 = scmp.eq.s32.totalorder %s17, 0
    %p93 = por %p91, %p92
    %s94 = sadd.s32 %s18, %s20
    %s95 = sadd.s32 %s37, %s29
    %s96 = ssub.s32 %s19, %s33
    %s97 = ssub.s32 %s94, %s95
    %s98 = sor.u32 %s96, %s97
    %p99 = scmp.eq.s32.totalorder %s98, 0
    %s101 = sadd.s32 %s100, 1
    %s102 = scalar_select %p99, %s100, %s101
    %p105 = pneg %p99
    %p106 = scmp.eq.s32.totalorder %s11, 1
    %p107 = por %p105, %p106
    %p108 = scmp.ne.s32.totalorder %s100, %s103
    %p109 = scmp.eq.s32.totalorder %s11, 0
    %p110 = por %p108, %p109
    %p111 = scmp.ne.s32.totalorder %s100, %s103
    %p112 = scmp.eq.s32.totalorder %s16, 1
    %p113 = por %p111, %p112
    %p114 = scmp.ne.s32.totalorder %s103, %s104
    %p115 = scmp.eq.s32.totalorder %s16, 0
    %p116 = por %p114, %p115
    %p117 = scmp.ne.s32.totalorder %s103, %s104
    %p118 = scmp.eq.s32.totalorder %s17, 1
    %p119 = por %p117, %p118
    %p121 = scmp.ne.s32.totalorder %s104, %s120
    %p122 = scmp.eq.s32.totalorder %s17, 0
    %p123 = por %p121, %p122
    %s124 = sadd.s32 %s18, %s20
    %s125 = sadd.s32 %s37, %s29
    %s126 = ssub.s32 %s19, %s33
    %s127 = ssub.s32 %s124, %s125
    %s128 = sor.u32 %s126, %s127
    %p129 = scmp.eq.s32.totalorder %s128, 0
    %s131 = sadd.s32 %s130, 1
    %s132 = scalar_select %p129, %s130, %s131
    %p135 = pneg %p129
    %p136 = scmp.eq.s32.totalorder %s11, 1
    %p137 = por %p135, %p136
    %p138 = scmp.ne.s32.totalorder %s130, %s133
    %p139 = scmp.eq.s32.totalorder %s11, 0
    %p140 = por %p138, %p139
    %p141 = scmp.ne.s32.totalorder %s130, %s133
    %p142 = scmp.eq.s32.totalorder %s16, 1
    %p143 = por %p141, %p142
    %p144 = scmp.ne.s32.totalorder %s133, %s134
    %p145 = scmp.eq.s32.totalorder %s16, 0
    %p146 = por %p144, %p145
    %p147 = scmp.ne.s32.totalorder %s133, %s134
    %p148 = scmp.eq.s32.totalorder %s17, 1
    %p149 = por %p147, %p148
    %p151 = scmp.ne.s32.totalorder %s134, %s150
    %p152 = scmp.eq.s32.totalorder %s17, 0
    %p153 = por %p151, %p152
    %s154 = sadd.s32 %s18, %s20
    %s155 = sadd.s32 %s37, %s29
    %s156 = ssub.s32 %s19, %s33
    %s157 = ssub.s32 %s154, %s155
    %s158 = sor.u32 %s156, %s157
    %p159 = scmp.eq.s32.totalorder %s158, 0
    %s161 = sadd.s32 %s160, 1
    %s162 = scalar_select %p159, %s160, %s161
    %p165 = pneg %p159
    %p166 = scmp.eq.s32.totalorder %s11, 1
    %p167 = por %p165, %p166
    %p168 = scmp.ne.s32.totalorder %s160, %s163
    %p169 = scmp.eq.s32.totalorder %s11, 0
    %p170 = por %p168, %p169
    %p171 = scmp.ne.s32.totalorder %s160, %s163
    %p172 = scmp.eq.s32.totalorder %s16, 1
    %p173 = por %p171, %p172
    %p174 = scmp.ne.s32.totalorder %s163, %s164
    %p175 = scmp.eq.s32.totalorder %s16, 0
    %p176 = por %p174, %p175
    %p177 = scmp.ne.s32.totalorder %s163, %s164
    %p178 = scmp.eq.s32.totalorder %s17, 1
    %p179 = por %p177, %p178
    %p181 = scmp.ne.s32.totalorder %s164, %s180
    %p182 = scmp.eq.s32.totalorder %s17, 0
    %p183 = por %p181, %p182
    %p184 = scmp.le.s32.totalorder 1, %s11
    %p185 = scmp.lt.s32.totalorder %s11, 3
    %p186 = pnand %p184, %p185
    %p187 = pneg %p186
    // Predicated region
    $region9: #{conv_bn_forward.2} parent=5 // pred_check
      _
    $region10: #{conv_bn_forward.2} parent=5 // pred_check_branch
      %189 = sbr.rel (%p186) target = $region12
    $region11: #{conv_bn_forward.2} parent=5 // pred_region
      %s190 = ssub.s32 %s11, 1
      // Predicated region
      $region13: #{conv_bn_forward.2} parent=11 // pred_check
        %p191 = pneg %p86
      $region14: #{conv_bn_forward.2} parent=11 // pred_check_branch
        %193 = sbr.rel (%p191) target = $region16
      $region15: #{conv_bn_forward.2} parent=11 // pred_region
        %p194 = scmp.lt.s32.totalorder %s21, 0
        %s195 = scalar_select %p194, %s21, 0
        %p196 = scmp.lt.s32.totalorder %s23, 0
        %s197 = scalar_select %p196, %s23, 0
        %s198 = smul.addr %s195, 9
        %s199 = sadd.s32 %s197, %s198
        %s200 = smul.addr %s199, 8
        %s201 = scalar_lea.vmem %s1, %s200
      $region16: #{conv_bn_forward.2} parent=11 // pred_fallthru
        _
    $region12: #{conv_bn_forward.2} parent=5 // pred_fallthru
      _
    %p202 = scmp.lt.s32.totalorder %s11, 2
    // Predicated region
    $region17: #{conv_bn_forward.2} parent=5 // pred_check
      %p203 = pneg %p202
    $region18: #{conv_bn_forward.2} parent=5 // pred_check_branch
      %205 = sbr.rel (%p203) target = $region20
    $region19: #{conv_bn_forward.2} parent=5 // pred_region
      // Predicated region
      $region21: #{conv_bn_forward.2} parent=19 // pred_check
        %p206 = pneg %p52
      $region22: #{conv_bn_forward.2} parent=19 // pred_check_branch
        %208 = sbr.rel (%p206) target = $region24
      $region23: #{conv_bn_forward.2} parent=19 // pred_region
        %p209 = scmp.lt.s32.totalorder %s18, 0
        %s210 = scalar_select %p209, %s18, 0
        %p211 = scmp.lt.s32.totalorder %s19, 1
        %s212 = scalar_select %p211, %s19, 1
        %s213 = smul.addr %s212, 54
        %s214 = smul.addr %s210, 108
        %s215 = sadd.s32 %s213, %s214
        %s216 = smul.addr %s215, 8
        %s217 = scalar_lea.vmem %s0, %s216
      $region24: #{conv_bn_forward.2} parent=19 // pred_fallthru
        _
    $region20: #{conv_bn_forward.2} parent=5 // pred_fallthru
      _
    %p218 = scmp.le.s32.totalorder 1, %s11
    %p219 = scmp.lt.s32.totalorder %s11, 3
    %p220 = pnand %p218, %p219
    %p221 = pneg %p220
    // Predicated region
    $region25: #{conv_bn_forward.2} parent=5 // pred_check
      _
    $region26: #{conv_bn_forward.2} parent=5 // pred_check_branch
      %223 = sbr.rel (%p220) target = $region28
    $region27: #{conv_bn_forward.2} parent=5 // pred_region
      %s224 = ssub.s32 %s11, 1
      %p225 = scmp.lt.s32.totalorder %s21, 0
      %s226 = scalar_select %p225, %s21, 0
      %p227 = scmp.lt.s32.totalorder %s22, 1
      %s228 = scalar_select %p227, %s22, 1
      %s229 = smul.addr %s228, 54
      %s230 = smul.addr %s226, 108
      %s231 = sadd.s32 %s229, %s230
      %s232 = smul.addr %s231, 8
      %s233 = scalar_lea.vmem %s0, %s232
      %p234 = pneg %p58
      %p235 = pneg %p55
      %p236 = scmp.lt.s32.totalorder %s21, 0
      %s237 = scalar_select %p236, %s21, 0
      %p238 = scmp.lt.s32.totalorder %s23, 0
      %s239 = scalar_select %p238, %s23, 0
      %s240 = smul.addr %s237, 9
      %s241 = sadd.s32 %s239, %s240
      %s242 = smul.addr %s241, 8
      %s243 = scalar_lea.vmem %s1, %s242
      %p244 = pneg %p86
      %p245 = pneg %p83
      %p246 = pneg %p116
      %p247 = pneg %p113
      %s248 = sadd.s32 %s21, %s23
      %p249 = scmp.lt.s32.totalorder %s22, 1
      %s250 = scalar_select %p249, %s22, 1
      %p251 = scmp.lt.s32.totalorder %s248, 0
      %s252 = scalar_select %p251, %s248, 0
      %s253 = smul.addr %s250, 32
      %s254 = sadd.s32 %s252, %s253
      %s255 = smul.addr %s254, 8
      %s256 = scalar_lea.vmem %s2, %s255
      %p257 = pneg %p146
      %p258 = pneg %p143
      %s259 = sadd.s32 %s21, %s23
      %p260 = scmp.lt.s32.totalorder %s22, 1
      %s261 = scalar_select %p260, %s22, 1
      %p262 = scmp.lt.s32.totalorder %s259, 0
      %s263 = scalar_select %p262, %s259, 0
      %s264 = sadd.s32 %s263, %s261
      %s265 = smul.addr %s264, 8
      %s266 = scalar_lea.vmem %s3, %s265
      %p267 = pneg %p176
      %p268 = pneg %p173
      %s269 = sadd.s32 %s21, %s23
      %p270 = scmp.lt.s32.totalorder %s22, 1
      %s271 = scalar_select %p270, %s22, 1
      %p272 = scmp.lt.s32.totalorder %s269, 0
      %s273 = scalar_select %p272, %s269, 0
      %s274 = sadd.s32 %s273, %s271
      %s275 = smul.addr %s274, 8
      %s276 = scalar_lea.vmem %s4, %s275
      %p277 = scmp.lt.s32.totalorder %s21, 0
      %s278 = scalar_select %p277, %s21, 0
      %p279 = scmp.lt.s32.totalorder %s22, 1
      %s280 = scalar_select %p279, %s22, 1
      %s281 = smul.addr %s280, 54
      %s282 = smul.addr %s278, 108
      %s283 = sadd.s32 %s281, %s282
      %s284 = smul.addr %s283, 8
      %s285 = scalar_lea.vmem %s0, %s284
      %p286 = scmp.lt.s32.totalorder %s21, 0
      %s287 = scalar_select %p286, %s21, 0
      %p288 = scmp.lt.s32.totalorder %s23, 0
      %s289 = scalar_select %p288, %s23, 0
      %s290 = smul.addr %s287, 9
      %s291 = sadd.s32 %s289, %s290
      %s292 = smul.addr %s291, 8
      %s293 = scalar_lea.vmem %s1, %s292
      %s294 = sadd.s32 %s21, %s23
      %p295 = scmp.lt.s32.totalorder %s22, 1
      %s296 = scalar_select %p295, %s22, 1
      %p297 = scmp.lt.s32.totalorder %s294, 0
      %s298 = scalar_select %p297, %s294, 0
      %s299 = smul.addr %s296, 32
      %s300 = sadd.s32 %s298, %s299
      %s301 = smul.addr %s300, 8
      %s302 = scalar_lea.vmem %s2, %s301
      %s303 = sadd.s32 %s21, %s23
      %s304 = sadd.s32 %s21, %s23
      %p305 = scmp.lt.s32.totalorder %s22, 1
      %s306 = scalar_select %p305, %s22, 1
      %p307 = scmp.lt.s32.totalorder %s304, 0
      %s308 = scalar_select %p307, %s304, 0
      %s309 = sadd.s32 %s308, %s306
      %s310 = smul.addr %s309, 8
      %s311 = scalar_lea.vmem %s3, %s310
      %s312 = sadd.s32 %s21, %s23
      %s313 = sadd.s32 %s21, %s23
      %p314 = scmp.lt.s32.totalorder %s22, 1
      %s315 = scalar_select %p314, %s22, 1
      %p316 = scmp.lt.s32.totalorder %s313, 0
      %s317 = scalar_select %p316, %s313, 0
      %s318 = sadd.s32 %s317, %s315
      %s319 = smul.addr %s318, 8
      %s320 = scalar_lea.vmem %s4, %s319
      %s321 = sadd.s32 %s21, %s23
      %v322 = vld [vmem:[%s285] sm:$0xff]
      %v323 = vld [vmem:[%s285 + $0x8] sm:$0xff]
      %v324 = vld [vmem:[%s285 + $0x18] sm:$0xff]
      %v325 = vld [vmem:[%s285 + $0x20] sm:$0xff]
      %v326 = vld [vmem:[%s285 + $0x30] sm:$0xff]
      %v327 = vld [vmem:[%s285 + $0x38] sm:$0xff]
      %v328 = vld [vmem:[%s285 + $0x48] sm:$0xff]
      %v329 = vld [vmem:[%s285 + $0x50] sm:$0xff]
      %v330 = vld [vmem:[%s285 + $0x60] sm:$0xff]
      %v331 = vld [vmem:[%s285 + $0x68] sm:$0xff]
      %v332 = vld [vmem:[%s285 + $0x78] sm:$0xff]
      %v333 = vld [vmem:[%s285 + $0x80] sm:$0xff]
      %v334 = vld [vmem:[%s285 + $0x90] sm:$0xff]
      %v335 = vld [vmem:[%s285 + $0x98] sm:$0xff]
      %v336 = vld [vmem:[%s285 + $0xa8] sm:$0xff]
      %v337 = vld [vmem:[%s285 + $0xb0] sm:$0xff]
      %v338 = vld [vmem:[%s285 + $0xc0] sm:$0xff]
      %v339 = vld [vmem:[%s285 + $0xc8] sm:$0xff]
      %v340 = vld [vmem:[%s285 + $0xd8] sm:$0xff]
      %v341 = vld [vmem:[%s285 + $0xe0] sm:$0xff]
      %v342 = vld [vmem:[%s285 + $0xf0] sm:$0xff]
      %v343 = vld [vmem:[%s285 + $0xf8] sm:$0xff]
      %v344 = vld [vmem:[%s285 + $0x108] sm:$0xff]
      %v345 = vld [vmem:[%s285 + $0x110] sm:$0xff]
      %v346 = vld [vmem:[%s285 + $0x120] sm:$0xff]
      %v347 = vld [vmem:[%s285 + $0x128] sm:$0xff]
      %v348 = vld [vmem:[%s285 + $0x138] sm:$0xff]
      %v349 = vld [vmem:[%s285 + $0x140] sm:$0xff]
      %v350 = vld [vmem:[%s285 + $0x150] sm:$0xff]
      %v351 = vld [vmem:[%s285 + $0x158] sm:$0xff]
      %v352 = vld [vmem:[%s285 + $0x168] sm:$0xff]
      %v353 = vld [vmem:[%s285 + $0x170] sm:$0xff]
      %v354 = vld [vmem:[%s293] sm:$0xff]
      %v355 = vld [vmem:[%s285 + $0x1] sm:$0xff]
      %v356 = vld [vmem:[%s285 + $0x9] sm:$0xff]
      %v357 = vld [vmem:[%s285 + $0x19] sm:$0xff]
      %v358 = vld [vmem:[%s285 + $0x21] sm:$0xff]
      %v359 = vld [vmem:[%s285 + $0x31] sm:$0xff]
      %v360 = vld [vmem:[%s285 + $0x39] sm:$0xff]
      %v361 = vld [vmem:[%s285 + $0x49] sm:$0xff]
      %v362 = vld [vmem:[%s285 + $0x51] sm:$0xff]
      %v363 = vld [vmem:[%s285 + $0x61] sm:$0xff]
      %v364 = vld [vmem:[%s285 + $0x69] sm:$0xff]
      %v365 = vld [vmem:[%s285 + $0x79] sm:$0xff]
      %v366 = vld [vmem:[%s285 + $0x81] sm:$0xff]
      %v367 = vld [vmem:[%s285 + $0x91] sm:$0xff]
      %v368 = vld [vmem:[%s285 + $0x99] sm:$0xff]
      %v369 = vld [vmem:[%s285 + $0xa9] sm:$0xff]
      %v370 = vld [vmem:[%s285 + $0xb1] sm:$0xff]
      %v371 = vld [vmem:[%s285 + $0xc1] sm:$0xff]
      %v372 = vld [vmem:[%s285 + $0xc9] sm:$0xff]
      %v373 = vld [vmem:[%s285 + $0xd9] sm:$0xff]
      %v374 = vld [vmem:[%s285 + $0xe1] sm:$0xff]
      %v375 = vld [vmem:[%s285 + $0xf1] sm:$0xff]
      %v376 = vld [vmem:[%s285 + $0xf9] sm:$0xff]
      %v377 = vld [vmem:[%s285 + $0x109] sm:$0xff]
      %v378 = vld [vmem:[%s285 + $0x111] sm:$0xff]
      %v379 = vld [vmem:[%s285 + $0x121] sm:$0xff]
      %v380 = vld [vmem:[%s285 + $0x129] sm:$0xff]
      %v381 = vld [vmem:[%s285 + $0x139] sm:$0xff]
      %v382 = vld [vmem:[%s285 + $0x141] sm:$0xff]
      %v383 = vld [vmem:[%s285 + $0x151] sm:$0xff]
      %v384 = vld [vmem:[%s285 + $0x159] sm:$0xff]
      %v385 = vld [vmem:[%s285 + $0x169] sm:$0xff]
      %v386 = vld [vmem:[%s285 + $0x171] sm:$0xff]
      %s387 = scalar_lea.vmem %s293, 8
      %v388 = vld [vmem:[%s387] sm:$0xff]
      %vm389 = vcmask 64512
      %v391 = vsel %vm389, %v355, 0
      %v394 = vsel %vm389, %v356, 0
      %v397 = vsel %vm389, %v357, 0
      %v400 = vsel %vm389, %v358, 0
      %v403 = vsel %vm389, %v359, 0
      %v406 = vsel %vm389, %v360, 0
      %v409 = vsel %vm389, %v361, 0
      %v412 = vsel %vm389, %v362, 0
      %v415 = vsel %vm389, %v363, 0
      %v418 = vsel %vm389, %v364, 0
      %v421 = vsel %vm389, %v365, 0
      %v424 = vsel %vm389, %v366, 0
      %v427 = vsel %vm389, %v367, 0
      %v430 = vsel %vm389, %v368, 0
      %v433 = vsel %vm389, %v369, 0
      %v436 = vsel %vm389, %v370, 0
      %v439 = vsel %vm389, %v371, 0
      %v442 = vsel %vm389, %v372, 0
      %v445 = vsel %vm389, %v373, 0
      %v448 = vsel %vm389, %v374, 0
      %v451 = vsel %vm389, %v375, 0
      %v454 = vsel %vm389, %v376, 0
      %v457 = vsel %vm389, %v377, 0
      %v460 = vsel %vm389, %v378, 0
      %v463 = vsel %vm389, %v379, 0
      %v466 = vsel %vm389, %v380, 0
      %v469 = vsel %vm389, %v381, 0
      %v472 = vsel %vm389, %v382, 0
      %v475 = vsel %vm389, %v383, 0
      %v478 = vsel %vm389, %v384, 0
      %v481 = vsel %vm389, %v385, 0
      %v484 = vsel %vm389, %v386, 0
      %486 = vmatprep.subr.mxu0 0.0
      %487 = vmatpush1.msra.mxu0 %v388
      %488 = vmatprep.subr.mxu0 0.0
      %489 = vmatpush1.msra.mxu0 0.0
      %490 = vmatprep.subr.mxu0 0.0
      %491 = vmatpush1.msra.mxu0 0.0
      %492 = vmatprep.subr.mxu0 0.0
      %493 = vmatpush1.msra.mxu0 0.0
      %494 = vmatprep.subr.mxu0 0.0
      %495 = vmatpush1.msra.mxu0 0.0
      %496 = vmatprep.subr.mxu0 0.0
      %497 = vmatpush1.msra.mxu0 0.0
      %498 = vmatprep.subr.mxu0 0.0
      %499 = vmatpush1.msra.mxu0 0.0
      %500 = vmatprep.subr.mxu0 0.0
      %501 = vmatpush1.msra.mxu0 0.0
      %502 = vmatprep.subr.mxu0 0.0
      %503 = vmatpush1.msra.mxu0 0.0
      %504 = vmatprep.subr.mxu0 0.0
      %505 = vmatpush1.msra.mxu0 0.0
      %506 = vmatprep.subr.mxu0 0.0
      %507 = vmatpush1.msra.mxu0 0.0
      %508 = vmatprep.subr.mxu0 0.0
      %509 = vmatpush1.msra.mxu0 0.0
      %510 = vmatprep.subr.mxu0 0.0
      %511 = vmatpush1.msra.mxu0 0.0
      %512 = vmatprep.subr.mxu0 0.0
      %513 = vmatpush1.msra.mxu0 0.0
      %514 = vmatprep.subr.mxu0 0.0
      %515 = vmatpush1.msra.mxu0 0.0
      %516 = vmatprep.subr.mxu0 0.0
      %517 = vmatpush1.msra.mxu0 0.0
      %518 = vmatprep.subr.mxu0 0.0
      %519 = vmatpush1.msra.mxu0 0.0
      %520 = vmatprep.subr.mxu0 0.0
      %521 = vmatpush1.msra.mxu0 0.0
      %522 = vmatprep.subr.mxu0 0.0
      %523 = vmatpush1.msra.mxu0 0.0
      %524 = vmatprep.subr.mxu0 0.0
      %525 = vmatpush1.msra.mxu0 0.0
      %526 = vmatprep.subr.mxu0 0.0
      %527 = vmatpush1.msra.mxu0 0.0
      %528 = vmatprep.subr.mxu0 0.0
      %529 = vmatpush1.msra.mxu0 0.0
      %530 = vmatprep.subr.mxu0 0.0
      %531 = vmatpush1.msra.mxu0 0.0
      %532 = vmatprep.subr.mxu0 0.0
      %533 = vmatpush1.msra.mxu0 0.0
      %534 = vmatprep.subr.mxu0 0.0
      %535 = vmatpush1.msra.mxu0 0.0
      %536 = vmatprep.subr.mxu0 0.0
      %537 = vmatpush1.msra.mxu0 0.0
      %538 = vmatprep.subr.mxu0 0.0
      %539 = vmatpush1.msra.mxu0 0.0
      %540 = vmatprep.subr.mxu0 0.0
      %541 = vmatpush1.msra.mxu0 0.0
      %542 = vmatprep.subr.mxu0 0.0
      %543 = vmatpush1.msra.mxu0 0.0
      %544 = vmatprep.subr.mxu0 0.0
      %545 = vmatpush1.msra.mxu0 0.0
      %546 = vmatprep.subr.mxu0 0.0
      %547 = vmatpush1.msra.mxu0 0.0
      %548 = vmatprep.subr.mxu0 0.0
      %549 = vmatpush1.msra.mxu0 0.0
      %550 = vmatprep.mubr.f32.mxu0 0.0
      %551 = vmatmul.mubr.f32.gmra.mrb[0].mxu0 %v391
      %v552 = vpop.f32.mrb[0].mxu0
      %v553 = vadd.f32 0.0, %v552
      %v554 = vpop.f32.mrb[0].mxu0
      %555 = vmatprep.mubr.f32.mxu0 0.0
      %556 = vmatmul.mubr.f32.gmra.mrb[0].mxu0 %v394
      %v557 = vpop.f32.mrb[0].mxu0
      %v558 = vadd.f32 0.0, %v557
      %v559 = vpop.f32.mrb[0].mxu0
      %560 = vmatprep.mubr.f32.mxu0 0.0
      %561 = vmatmul.mubr.f32.gmra.mrb[0].mxu0 %v397
      %v562 = vpop.f32.mrb[0].mxu0
      %v563 = vadd.f32 0.0, %v562
      %v564 = vpop.f32.mrb[0].mxu0
      %565 = vmatprep.mubr.f32.mxu0 0.0
      %566 = vmatmul.mubr.f32.gmra.mrb[0].mxu0 %v400
      %v567 = vpop.f32.mrb[0].mxu0
      %v568 = vadd.f32 0.0, %v567
      %v569 = vpop.f32.mrb[0].mxu0
      %570 = vmatprep.mubr.f32.mxu0 0.0
      %571 = vmatmul.mubr.f32.gmra.mrb[0].mxu0 %v403
      %v572 = vpop.f32.mrb[0].mxu0
      %v573 = vadd.f32 0.0, %v572
      %v574 = vpop.f32.mrb[0].mxu0
      %575 = vmatprep.mubr.f32.mxu0 0.0
      %576 = vmatmul.mubr.f32.gmra.mrb[0].mxu0 %v406
      %v577 = vpop.f32.mrb[0].mxu0
      %v578 = vadd.f32 0.0, %v577
      %v579 = vpop.f32.mrb[0].mxu0
      %580 = vmatprep.mubr.f32.mxu0 0.0
      %581 = vmatmul.mubr.f32.gmra.mrb[0].mxu0 %v409
      %v582 = vpop.f32.mrb[0].mxu0
      %v583 = vadd.f32 0.0, %v582
      %v584 = vpop.f32.mrb[0].mxu0
      %585 = vmatprep.mubr.f32.mxu0 0.0
      %586 = vmatmul.mubr.f32.gmra.mrb[0].mxu0 %v412
      %v587 = vpop.f32.mrb[0].mxu0
      %v588 = vadd.f32 0.0, %v587
      %v589 = vpop.f32.mrb[0].mxu0
      %590 = vmatprep.mubr.f32.mxu0 0.0
      %591 = vmatmul.mubr.f32.gmra.mrb[0].mxu0 %v415
      %v592 = vpop.f32.mrb[0].mxu0
      %v593 = vadd.f32 0.0, %v592
      %v594 = vpop.f32.mrb[0].mxu0
      %595 = vmatprep.mubr.f32.mxu0 0.0
      %596 = vmatmul.mubr.f32.gmra.mrb[0].mxu0 %v418
      %v597 = vpop.f32.mrb[0].mxu0
      %v598 = vadd.f32 0.0, %v597
      %v599 = vpop.f32.mrb[0].mxu0
      %600 = vmatprep.mubr.f32.mxu0 0.0
      %601 = vmatmul.mubr.f32.gmra.mrb[0].mxu0 %v421
      %v602 = vpop.f32.mrb[0].mxu0
      %v603 = vadd.f32 0.0, %v602
      %v604 = vpop.f32.mrb[0].mxu0
      %605 = vmatprep.mubr.f32.mxu0 0.0
      %606 = vmatmul.mubr.f32.gmra.mrb[0].mxu0 %v424
      %v607 = vpop.f32.mrb[0].mxu0
      %v608 = vadd.f32 0.0, %v607
      %v609 = vpop.f32.mrb[0].mxu0
      %610 = vmatprep.mubr.f32.mxu0 0.0
      %611 = vmatmul.mubr.f32.gmra.mrb[0].mxu0 %v427
      %v612 = vpop.f32.mrb[0].mxu0
      %v613 = vadd.f32 0.0, %v612
      %v614 = vpop.f32.mrb[0].mxu0
      %615 = vmatprep.mubr.f32.mxu0 0.0
      %616 = vmatmul.mubr.f32.gmra.mrb[0].mxu0 %v430
      %v617 = vpop.f32.mrb[0].mxu0
      %v618 = vadd.f32 0.0, %v617
      %v619 = vpop.f32.mrb[0].mxu0
      %620 = vmatprep.mubr.f32.mxu0 0.0
      %621 = vmatmul.mubr.f32.gmra.mrb[0].mxu0 %v433
      %v622 = vpop.f32.mrb[0].mxu0
      %v623 = vadd.f32 0.0, %v622
      %v624 = vpop.f32.mrb[0].mxu0
      %625 = vmatprep.mubr.f32.mxu0 0.0
      %626 = vmatmul.mubr.f32.gmra.mrb[0].mxu0 %v436
      %v627 = vpop.f32.mrb[0].mxu0
      %v628 = vadd.f32 0.0, %v627
      %v629 = vpop.f32.mrb[0].mxu0
      %630 = vmatprep.mubr.f32.mxu0 0.0
      %631 = vmatmul.mubr.f32.gmra.mrb[0].mxu0 %v439
      %v632 = vpop.f32.mrb[0].mxu0
      %v633 = vadd.f32 0.0, %v632
      %v634 = vpop.f32.mrb[0].mxu0
      %635 = vmatprep.mubr.f32.mxu0 0.0
      %636 = vmatmul.mubr.f32.gmra.mrb[0].mxu0 %v442
      %v637 = vpop.f32.mrb[0].mxu0
      %v638 = vadd.f32 0.0, %v637
      %v639 = vpop.f32.mrb[0].mxu0
      %640 = vmatprep.mubr.f32.mxu0 0.0
      %641 = vmatmul.mubr.f32.gmra.mrb[0].mxu0 %v445
      %v642 = vpop.f32.mrb[0].mxu0
      %v643 = vadd.f32 0.0, %v642
      %v644 = vpop.f32.mrb[0].mxu0
      %645 = vmatprep.mubr.f32.mxu0 0.0
      %646 = vmatmul.mubr.f32.gmra.mrb[0].mxu0 %v448
      %v647 = vpop.f32.mrb[0].mxu0
      %v648 = vadd.f32 0.0, %v647
      %v649 = vpop.f32.mrb[0].mxu0
      %650 = vmatprep.mubr.f32.mxu0 0.0
      %651 = vmatmul.mubr.f32.gmra.mrb[0].mxu0 %v451
      %v652 = vpop.f32.mrb[0].mxu0
      %v653 = vadd.f32 0.0, %v652
      %v654 = vpop.f32.mrb[0].mxu0
      %655 = vmatprep.mubr.f32.mxu0 0.0
      %656 = vmatmul.mubr.f32.gmra.mrb[0].mxu0 %v454
      %v657 = vpop.f32.mrb[0].mxu0
      %v658 = vadd.f32 0.0, %v657
      %v659 = vpop.f32.mrb[0].mxu0
      %660 = vmatprep.mubr.f32.mxu0 0.0
      %661 = vmatmul.mubr.f32.gmra.mrb[0].mxu0 %v457
      %v662 = vpop.f32.mrb[0].mxu0
      %v663 = vadd.f32 0.0, %v662
      %v664 = vpop.f32.mrb[0].mxu0
      %665 = vmatprep.mubr.f32.mxu0 0.0
      %666 = vmatmul.mubr.f32.gmra.mrb[0].mxu0 %v460
      %v667 = vpop.f32.mrb[0].mxu0
      %v668 = vadd.f32 0.0, %v667
      %v669 = vpop.f32.mrb[0].mxu0
      %670 = vmatprep.mubr.f32.mxu0 0.0
      %671 = vmatmul.mubr.f32.gmra.mrb[0].mxu0 %v463
      %v672 = vpop.f32.mrb[0].mxu0
      %v673 = vadd.f32 0.0, %v672
      %v674 = vpop.f32.mrb[0].mxu0
      %675 = vmatprep.mubr.f32.mxu0 0.0
      %676 = vmatmul.mubr.f32.gmra.mrb[0].mxu0 %v466
      %v677 = vpop.f32.mrb[0].mxu0
      %v678 = vadd.f32 0.0, %v677
      %v679 = vpop.f32.mrb[0].mxu0
      %680 = vmatprep.mubr.f32.mxu0 0.0
      %681 = vmatmul.mubr.f32.gmra.mrb[0].mxu0 %v469
      %v682 = vpop.f32.mrb[0].mxu0
      %v683 = vadd.f32 0.0, %v682
      %v684 = vpop.f32.mrb[0].mxu0
      %685 = vmatprep.mubr.f32.mxu0 0.0
      %686 = vmatmul.mubr.f32.gmra.mrb[0].mxu0 %v472
      %v687 = vpop.f32.mrb[0].mxu0
      %v688 = vadd.f32 0.0, %v687
      %v689 = vpop.f32.mrb[0].mxu0
      %690 = vmatprep.mubr.f32.mxu0 0.0
      %691 = vmatmul.mubr.f32.gmra.mrb[0].mxu0 %v475
      %v692 = vpop.f32.mrb[0].mxu0
      %v693 = vadd.f32 0.0, %v692
      %v694 = vpop.f32.mrb[0].mxu0
      %695 = vmatprep.mubr.f32.mxu0 0.0
      %696 = vmatmul.mubr.f32.gmra.mrb[0].mxu0 %v478
      %v697 = vpop.f32.mrb[0].mxu0
      %v698 = vadd.f32 0.0, %v697
      %v699 = vpop.f32.mrb[0].mxu0
      %700 = vmatprep.mubr.f32.mxu0 0.0
      %701 = vmatmul.mubr.f32.gmra.mrb[0].mxu0 %v481
      %v702 = vpop.f32.mrb[0].mxu0
      %v703 = vadd.f32 0.0, %v702
      %v704 = vpop.f32.mrb[0].mxu0
      %705 = vmatprep.mubr.f32.mxu0 0.0
      %706 = vmatmul.mubr.f32.gmra.mrb[0].mxu0 %v484
      %v707 = vpop.f32.mrb[0].mxu0
      %v708 = vadd.f32 0.0, %v707
      %v709 = vpop.f32.mrb[0].mxu0
      %710 = vdwg.mxu0
      %v712 = vsel %vm389, %v322, 0
      %v715 = vsel %vm389, %v323, 0
      %v718 = vsel %vm389, %v324, 0
      %v721 = vsel %vm389, %v325, 0
      %v724 = vsel %vm389, %v326, 0
      %v727 = vsel %vm389, %v327, 0
      %v730 = vsel %vm389, %v328, 0
      %v733 = vsel %vm389, %v329, 0
      %v736 = vsel %vm389, %v330, 0
      %v739 = vsel %vm389, %v331, 0
      %v742 = vsel %vm389, %v332, 0
      %v745 = vsel %vm389, %v333, 0
      %v748 = vsel %vm389, %v334, 0
      %v751 = vsel %vm389, %v335, 0
      %v754 = vsel %vm389, %v336, 0
      %v757 = vsel %vm389, %v337, 0
      %v760 = vsel %vm389, %v338, 0
      %v763 = vsel %vm389, %v339, 0
      %v766 = vsel %vm389, %v340, 0
      %v769 = vsel %vm389, %v341, 0
      %v772 = vsel %vm389, %v342, 0
      %v775 = vsel %vm389, %v343, 0
      %v778 = vsel %vm389, %v344, 0
      %v781 = vsel %vm389, %v345, 0
      %v784 = vsel %vm389, %v346, 0
      %v787 = vsel %vm389, %v347, 0
      %v790 = vsel %vm389, %v348, 0
      %v793 = vsel %vm389, %v349, 0
      %v796 = vsel %vm389, %v350, 0
      %v799 = vsel %vm389, %v351, 0
      %v802 = vsel %vm389, %v352, 0
      %v805 = vsel %vm389, %v353, 0
      %807 = vmatprep.subr.mxu0 0.0
      %808 = vmatpush1.msra.mxu0 %v354
      %809 = vmatprep.subr.mxu0 0.0
      %810 = vmatpush1.msra.mxu0 0.0
      %811 = vmatprep.subr.mxu0 0.0
      %812 = vmatpush1.msra.mxu0 0.0
      %813 = vmatprep.subr.mxu0 0.0
      %814 = vmatpush1.msra.mxu0 0.0
      %815 = vmatprep.subr.mxu0 0.0
      %816 = vmatpush1.msra.mxu0 0.0
      %817 = vmatprep.subr.mxu0 0.0
      %818 = vmatpush1.msra.mxu0 0.0
      %819 = vmatprep.subr.mxu0 0.0
      %820 = vmatpush1.msra.mxu0 0.0
      %821 = vmatprep.subr.mxu0 0.0
      %822 = vmatpush1.msra.mxu0 0.0
      %823 = vmatprep.subr.mxu0 0.0
      %824 = vmatpush1.msra.mxu0 0.0
      %825 = vmatprep.subr.mxu0 0.0
      %826 = vmatpush1.msra.mxu0 0.0
      %827 = vmatprep.subr.mxu0 0.0
      %828 = vmatpush1.msra.mxu0 0.0
      %829 = vmatprep.subr.mxu0 0.0
      %830 = vmatpush1.msra.mxu0 0.0
      %831 = vmatprep.subr.mxu0 0.0
      %832 = vmatpush1.msra.mxu0 0.0
      %833 = vmatprep.subr.mxu0 0.0
      %834 = vmatpush1.msra.mxu0 0.0
      %835 = vmatprep.subr.mxu0 0.0
      %836 = vmatpush1.msra.mxu0 0.0
      %837 = vmatprep.subr.mxu0 0.0
      %838 = vmatpush1.msra.mxu0 0.0
      %839 = vmatprep.subr.mxu0 0.0
      %840 = vmatpush1.msra.mxu0 0.0
      %841 = vmatprep.subr.mxu0 0.0
      %842 = vmatpush1.msra.mxu0 0.0
      %843 = vmatprep.subr.mxu0 0.0
      %844 = vmatpush1.msra.mxu0 0.0
      %845 = vmatprep.subr.mxu0 0.0
      %846 = vmatpush1.msra.mxu0 0.0
      %847 = vmatprep.subr.mxu0 0.0
      %848 = vmatpush1.msra.mxu0 0.0
      %849 = vmatprep.subr.mxu0 0.0
      %850 = vmatpush1.msra.mxu0 0.0
      %851 = vmatprep.subr.mxu0 0.0
      %852 = vmatpush1.msra.mxu0 0.0
      %853 = vmatprep.subr.mxu0 0.0
      %854 = vmatpush1.msra.mxu0 0.0
      %855 = vmatprep.subr.mxu0 0.0
      %856 = vmatpush1.msra.mxu0 0.0
      %857 = vmatprep.subr.mxu0 0.0
      %858 = vmatpush1.msra.mxu0 0.0
      %859 = vmatprep.subr.mxu0 0.0
      %860 = vmatpush1.msra.mxu0 0.0
      %861 = vmatprep.subr.mxu0 0.0
      %862 = vmatpush1.msra.mxu0 0.0
      %863 = vmatprep.subr.mxu0 0.0
      %864 = vmatpush1.msra.mxu0 0.0
      %865 = vmatprep.subr.mxu0 0.0
      %866 = vmatpush1.msra.mxu0 0.0
      %867 = vmatprep.subr.mxu0 0.0
      %868 = vmatpush1.msra.mxu0 0.0
      %869 = vmatprep.subr.mxu0 0.0
      %870 = vmatpush1.msra.mxu0 0.0
      %871 = vmatprep.mubr.f32.mxu0 0.0
      %872 = vmatmul.mubr.f32.gmra.mrb[0].mxu0 %v712
      %v873 = vpop.f32.mrb[0].mxu0
      %v874 = vadd.f32 %v553, %v873
      %v875 = vpop.f32.mrb[0].mxu0
      %876 = vmatprep.mubr.f32.mxu0 0.0
      %877 = vmatmul.mubr.f32.gmra.mrb[0].mxu0 %v715
      %v878 = vpop.f32.mrb[0].mxu0
      %v879 = vadd.f32 %v558, %v878
      %v880 = vpop.f32.mrb[0].mxu0
      %881 = vmatprep.mubr.f32.mxu0 0.0
      %882 = vmatmul.mubr.f32.gmra.mrb[0].mxu0 %v718
      %v883 = vpop.f32.mrb[0].mxu0
      %v884 = vadd.f32 %v563, %v883
      %v885 = vpop.f32.mrb[0].mxu0
      %886 = vmatprep.mubr.f32.mxu0 0.0
      %887 = vmatmul.mubr.f32.gmra.mrb[0].mxu0 %v721
      %v888 = vpop.f32.mrb[0].mxu0
      %v889 = vadd.f32 %v568, %v888
      %v890 = vpop.f32.mrb[0].mxu0
      %891 = vmatprep.mubr.f32.mxu0 0.0
      %892 = vmatmul.mubr.f32.gmra.mrb[0].mxu0 %v724
      %v893 = vpop.f32.mrb[0].mxu0
      %v894 = vadd.f32 %v573, %v893
      %v895 = vpop.f32.mrb[0].mxu0
      %896 = vmatprep.mubr.f32.mxu0 0.0
      %897 = vmatmul.mubr.f32.gmra.mrb[0].mxu0 %v727
      %v898 = vpop.f32.mrb[0].mxu0
      %v899 = vadd.f32 %v578, %v898
      %v900 = vpop.f32.mrb[0].mxu0
      %901 = vmatprep.mubr.f32.mxu0 0.0
      %902 = vmatmul.mubr.f32.gmra.mrb[0].mxu0 %v730
      %v903 = vpop.f32.mrb[0].mxu0
      %v904 = vadd.f32 %v583, %v903
      %v905 = vpop.f32.mrb[0].mxu0
      %906 = vmatprep.mubr.f32.mxu0 0.0
      %907 = vmatmul.mubr.f32.gmra.mrb[0].mxu0 %v733
      %v908 = vpop.f32.mrb[0].mxu0
      %v909 = vadd.f32 %v588, %v908
      %v910 = vpop.f32.mrb[0].mxu0
      %911 = vmatprep.mubr.f32.mxu0 0.0
      %912 = vmatmul.mubr.f32.gmra.mrb[0].mxu0 %v736
      %v913 = vpop.f32.mrb[0].mxu0
      %v914 = vadd.f32 %v593, %v913
      %v915 = vpop.f32.mrb[0].mxu0
      %916 = vmatprep.mubr.f32.mxu0 0.0
      %917 = vmatmul.mubr.f32.gmra.mrb[0].mxu0 %v739
      %v918 = vpop.f32.mrb[0].mxu0
      %v919 = vadd.f32 %v598, %v918
      %v920 = vpop.f32.mrb[0].mxu0
      %921 = vmatprep.mubr.f32.mxu0 0.0
      %922 = vmatmul.mubr.f32.gmra.mrb[0].mxu0 %v742
      %v923 = vpop.f32.mrb[0].mxu0
      %v924 = vadd.f32 %v603, %v923
      %v925 = vpop.f32.mrb[0].mxu0
      %926 = vmatprep.mubr.f32.mxu0 0.0
      %927 = vmatmul.mubr.f32.gmra.mrb[0].mxu0 %v745
      %v928 = vpop.f32.mrb[0].mxu0
      %v929 = vadd.f32 %v608, %v928
      %v930 = vpop.f32.mrb[0].mxu0
      %931 = vmatprep.mubr.f32.mxu0 0.0
      %932 = vmatmul.mubr.f32.gmra.mrb[0].mxu0 %v748
      %v933 = vpop.f32.mrb[0].mxu0
      %v934 = vadd.f32 %v613, %v933
      %v935 = vpop.f32.mrb[0].mxu0
      %936 = vmatprep.mubr.f32.mxu0 0.0
      %937 = vmatmul.mubr.f32.gmra.mrb[0].mxu0 %v751
      %v938 = vpop.f32.mrb[0].mxu0
      %v939 = vadd.f32 %v618, %v938
      %v940 = vpop.f32.mrb[0].mxu0
      %941 = vmatprep.mubr.f32.mxu0 0.0
      %942 = vmatmul.mubr.f32.gmra.mrb[0].mxu0 %v754
      %v943 = vpop.f32.mrb[0].mxu0
      %v944 = vadd.f32 %v623, %v943
      %v945 = vpop.f32.mrb[0].mxu0
      %946 = vmatprep.mubr.f32.mxu0 0.0
      %947 = vmatmul.mubr.f32.gmra.mrb[0].mxu0 %v757
      %v948 = vpop.f32.mrb[0].mxu0
      %v949 = vadd.f32 %v628, %v948
      %v950 = vpop.f32.mrb[0].mxu0
      %951 = vmatprep.mubr.f32.mxu0 0.0
      %952 = vmatmul.mubr.f32.gmra.mrb[0].mxu0 %v760
      %v953 = vpop.f32.mrb[0].mxu0
      %v954 = vadd.f32 %v633, %v953
      %v955 = vpop.f32.mrb[0].mxu0
      %956 = vmatprep.mubr.f32.mxu0 0.0
      %957 = vmatmul.mubr.f32.gmra.mrb[0].mxu0 %v763
      %v958 = vpop.f32.mrb[0].mxu0
      %v959 = vadd.f32 %v638, %v958
      %v960 = vpop.f32.mrb[0].mxu0
      %961 = vmatprep.mubr.f32.mxu0 0.0
      %962 = vmatmul.mubr.f32.gmra.mrb[0].mxu0 %v766
      %v963 = vpop.f32.mrb[0].mxu0
      %v964 = vadd.f32 %v643, %v963
      %v965 = vpop.f32.mrb[0].mxu0
      %966 = vmatprep.mubr.f32.mxu0 0.0
      %967 = vmatmul.mubr.f32.gmra.mrb[0].mxu0 %v769
      %v968 = vpop.f32.mrb[0].mxu0
      %v969 = vadd.f32 %v648, %v968
      %v970 = vpop.f32.mrb[0].mxu0
      %971 = vmatprep.mubr.f32.mxu0 0.0
      %972 = vmatmul.mubr.f32.gmra.mrb[0].mxu0 %v772
      %v973 = vpop.f32.mrb[0].mxu0
      %v974 = vadd.f32 %v653, %v973
      %v975 = vpop.f32.mrb[0].mxu0
      %976 = vmatprep.mubr.f32.mxu0 0.0
      %977 = vmatmul.mubr.f32.gmra.mrb[0].mxu0 %v775
      %v978 = vpop.f32.mrb[0].mxu0
      %v979 = vadd.f32 %v658, %v978
      %v980 = vpop.f32.mrb[0].mxu0
      %981 = vmatprep.mubr.f32.mxu0 0.0
      %982 = vmatmul.mubr.f32.gmra.mrb[0].mxu0 %v778
      %v983 = vpop.f32.mrb[0].mxu0
      %v984 = vadd.f32 %v663, %v983
      %v985 = vpop.f32.mrb[0].mxu0
      %986 = vmatprep.mubr.f32.mxu0 0.0
      %987 = vmatmul.mubr.f32.gmra.mrb[0].mxu0 %v781
      %v988 = vpop.f32.mrb[0].mxu0
      %v989 = vadd.f32 %v668, %v988
      %v990 = vpop.f32.mrb[0].mxu0
      %991 = vmatprep.mubr.f32.mxu0 0.0
      %992 = vmatmul.mubr.f32.gmra.mrb[0].mxu0 %v784
      %v993 = vpop.f32.mrb[0].mxu0
      %v994 = vadd.f32 %v673, %v993
      %v995 = vpop.f32.mrb[0].mxu0
      %996 = vmatprep.mubr.f32.mxu0 0.0
      %997 = vmatmul.mubr.f32.gmra.mrb[0].mxu0 %v787
      %v998 = vpop.f32.mrb[0].mxu0
      %v999 = vadd.f32 %v678, %v998
      %v1000 = vpop.f32.mrb[0].mxu0
      %1001 = vmatprep.mubr.f32.mxu0 0.0
      %1002 = vmatmul.mubr.f32.gmra.mrb[0].mxu0 %v790
      %v1003 = vpop.f32.mrb[0].mxu0
      %v1004 = vadd.f32 %v683, %v1003
      %v1005 = vpop.f32.mrb[0].mxu0
      %1006 = vmatprep.mubr.f32.mxu0 0.0
      %1007 = vmatmul.mubr.f32.gmra.mrb[0].mxu0 %v793
      %v1008 = vpop.f32.mrb[0].mxu0
      %v1009 = vadd.f32 %v688, %v1008
      %v1010 = vpop.f32.mrb[0].mxu0
      %1011 = vmatprep.mubr.f32.mxu0 0.0
      %1012 = vmatmul.mubr.f32.gmra.mrb[0].mxu0 %v796
      %v1013 = vpop.f32.mrb[0].mxu0
      %v1014 = vadd.f32 %v693, %v1013
      %v1015 = vpop.f32.mrb[0].mxu0
      %1016 = vmatprep.mubr.f32.mxu0 0.0
      %1017 = vmatmul.mubr.f32.gmra.mrb[0].mxu0 %v799
      %v1018 = vpop.f32.mrb[0].mxu0
      %v1019 = vadd.f32 %v698, %v1018
      %v1020 = vpop.f32.mrb[0].mxu0
      %1021 = vmatprep.mubr.f32.mxu0 0.0
      %1022 = vmatmul.mubr.f32.gmra.mrb[0].mxu0 %v802
      %v1023 = vpop.f32.mrb[0].mxu0
      %v1024 = vadd.f32 %v703, %v1023
      %v1025 = vpop.f32.mrb[0].mxu0
      %1026 = vmatprep.mubr.f32.mxu0 0.0
      %1027 = vmatmul.mubr.f32.gmra.mrb[0].mxu0 %v805
      %v1028 = vpop.f32.mrb[0].mxu0
      %v1029 = vadd.f32 %v708, %v1028
      %v1030 = vpop.f32.mrb[0].mxu0
      %1031 = vdwg.mxu0
      %v1032 = vld [vmem:[%s285 + $0x2] sm:$0xff]
      %v1033 = vld [vmem:[%s285 + $0xa] sm:$0xff]
      %v1034 = vld [vmem:[%s285 + $0x1a] sm:$0xff]
      %v1035 = vld [vmem:[%s285 + $0x22] sm:$0xff]
      %v1036 = vld [vmem:[%s285 + $0x32] sm:$0xff]
      %v1037 = vld [vmem:[%s285 + $0x3a] sm:$0xff]
      %v1038 = vld [vmem:[%s285 + $0x4a] sm:$0xff]
      %v1039 = vld [vmem:[%s285 + $0x52] sm:$0xff]
      %v1040 = vld [vmem:[%s285 + $0x62] sm:$0xff]
      %v1041 = vld [vmem:[%s285 + $0x6a] sm:$0xff]
      %v1042 = vld [vmem:[%s285 + $0x7a] sm:$0xff]
      %v1043 = vld [vmem:[%s285 + $0x82] sm:$0xff]
      %v1044 = vld [vmem:[%s285 + $0x92] sm:$0xff]
      %v1045 = vld [vmem:[%s285 + $0x9a] sm:$0xff]
      %v1046 = vld [vmem:[%s285 + $0xaa] sm:$0xff]
      %v1047 = vld [vmem:[%s285 + $0xb2] sm:$0xff]
      %v1048 = vld [vmem:[%s285 + $0xc2] sm:$0xff]
      %v1049 = vld [vmem:[%s285 + $0xca] sm:$0xff]
      %v1050 = vld [vmem:[%s285 + $0xda] sm:$0xff]
      %v1051 = vld [vmem:[%s285 + $0xe2] sm:$0xff]
      %v1052 = vld [vmem:[%s285 + $0xf2] sm:$0xff]
      %v1053 = vld [vmem:[%s285 + $0xfa] sm:$0xff]
      %v1054 = vld [vmem:[%s285 + $0x10a] sm:$0xff]
      %v1055 = vld [vmem:[%s285 + $0x112] sm:$0xff]
      %v1056 = vld [vmem:[%s285 + $0x122] sm:$0xff]
      %v1057 = vld [vmem:[%s285 + $0x12a] sm:$0xff]
      %v1058 = vld [vmem:[%s285 + $0x13a] sm:$0xff]
      %v1059 = vld [vmem:[%s285 + $0x142] sm:$0xff]
      %v1060 = vld [vmem:[%s285 + $0x152] sm:$0xff]
      %v1061 = vld [vmem:[%s285 + $0x15a] sm:$0xff]
      %v1062 = vld [vmem:[%s285 + $0x16a] sm:$0xff]
      %v1063 = vld [vmem:[%s285 + $0x172] sm:$0xff]
      %s1064 = scalar_lea.vmem %s293, 16
      %v1065 = vld [vmem:[%s1064] sm:$0xff]
      %v1067 = vsel %vm389, %v1032, 0
      %v1070 = vsel %vm389, %v1033, 0
      %v1073 = vsel %vm389, %v1034, 0
      %v1076 = vsel %vm389, %v1035, 0
      %v1079 = vsel %vm389, %v1036, 0
      %v1082 = vsel %vm389, %v1037, 0
      %v1085 = vsel %vm389, %v1038, 0
      %v1088 = vsel %vm389, %v1039, 0
      %v1091 = vsel %vm389, %v1040, 0
      %v1094 = vsel %vm389, %v1041, 0
      %v1097 = vsel %vm389, %v1042, 0
      %v1100 = vsel %vm389, %v1043, 0
      %v1103 = vsel %vm389, %v1044, 0
      %v1106 = vsel %vm389, %v1045, 0
      %v1109 = vsel %vm389, %v1046, 0
      %v1112 = vsel %vm389, %v1047, 0
      %v1115 = vsel %vm389, %v1048, 0
      %v1118 = vsel %vm389, %v1049, 0
      %v1121 = vsel %vm389, %v1050, 0
      %v1124 = vsel %vm389, %v1051, 0
      %v1127 = vsel %vm389, %v1052, 0
      %v1130 = vsel %vm389, %v1053, 0
      %v1133 = vsel %vm389, %v1054, 0
      %v1136 = vsel %vm389, %v1055, 0
      %v1139 = vsel %vm389, %v1056, 0
      %v1142 = vsel %vm389, %v1057, 0
      %v1145 = vsel %vm389, %v1058, 0
      %v1148 = vsel %vm389, %v1059, 0
      %v1151 = vsel %vm389, %v1060, 0
      %v1154 = vsel %vm389, %v1061, 0
      %v1157 = vsel %vm389, %v1062, 0
      %v1160 = vsel %vm389, %v1063, 0
      %1162 = vmatprep.subr.mxu0 0.0
      %1163 = vmatpush1.msra.mxu0 %v1065
      %1164 = vmatprep.subr.mxu0 0.0
      %1165 = vmatpush1.msra.mxu0 0.0
      %1166 = vmatprep.subr.mxu0 0.0
      %1167 = vmatpush1.msra.mxu0 0.0
      %1168 = vmatprep.subr.mxu0 0.0
      %1169 = vmatpush1.msra.mxu0 0.0
      %1170 = vmatprep.subr.mxu0 0.0
      %1171 = vmatpush1.msra.mxu0 0.0
      %1172 = vmatprep.subr.mxu0 0.0
      %1173 = vmatpush1.msra.mxu0 0.0
      %1174 = vmatprep.subr.mxu0 0.0
      %1175 = vmatpush1.msra.mxu0 0.0
      %1176 = vmatprep.subr.mxu0 0.0
      %1177 = vmatpush1.msra.mxu0 0.0
      %1178 = vmatprep.subr.mxu0 0.0
      %1179 = vmatpush1.msra.mxu0 0.0
      %1180 = vmatprep.subr.mxu0 0.0
      %1181 = vmatpush1.msra.mxu0 0.0
      %1182 = vmatprep.subr.mxu0 0.0
      %1183 = vmatpush1.msra.mxu0 0.0
      %1184 = vmatprep.subr.mxu0 0.0
      %1185 = vmatpush1.msra.mxu0 0.0
      %1186 = vmatprep.subr.mxu0 0.0
      %1187 = vmatpush1.msra.mxu0 0.0
      %1188 = vmatprep.subr.mxu0 0.0
      %1189 = vmatpush1.msra.mxu0 0.0
      %1190 = vmatprep.subr.mxu0 0.0
      %1191 = vmatpush1.msra.mxu0 0.0
      %1192 = vmatprep.subr.mxu0 0.0
      %1193 = vmatpush1.msra.mxu0 0.0
      %1194 = vmatprep.subr.mxu0 0.0
      %1195 = vmatpush1.msra.mxu0 0.0
      %1196 = vmatprep.subr.mxu0 0.0
      %1197 = vmatpush1.msra.mxu0 0.0
      %1198 = vmatprep.subr.mxu0 0.0
      %1199 = vmatpush1.msra.mxu0 0.0
      %1200 = vmatprep.subr.mxu0 0.0
      %1201 = vmatpush1.msra.mxu0 0.0
      %1202 = vmatprep.subr.mxu0 0.0
      %1203 = vmatpush1.msra.mxu0 0.0
      %1204 = vmatprep.subr.mxu0 0.0
      %1205 = vmatpush1.msra.mxu0 0.0
      %1206 = vmatprep.subr.mxu0 0.0
      %1207 = vmatpush1.msra.mxu0 0.0
      %1208 = vmatprep.subr.mxu0 0.0
      %1209 = vmatpush1.msra.mxu0 0.0
      %1210 = vmatprep.subr.mxu0 0.0
      %1211 = vmatpush1.msra.mxu0 0.0
      %1212 = vmatprep.subr.mxu0 0.0
      %1213 = vmatpush1.msra.mxu0 0.0
      %1214 = vmatprep.subr.mxu0 0.0
      %1215 = vmatpush1.msra.mxu0 0.0
      %1216 = vmatprep.subr.mxu0 0.0
      %1217 = vmatpush1.msra.mxu0 0.0
      %1218 = vmatprep.subr.mxu0 0.0
      %1219 = vmatpush1.msra.mxu0 0.0
      %1220 = vmatprep.subr.mxu0 0.0
      %1221 = vmatpush1.msra.mxu0 0.0
      %1222 = vmatprep.subr.mxu0 0.0
      %1223 = vmatpush1.msra.mxu0 0.0
      %1224 = vmatprep.subr.mxu0 0.0
      %1225 = vmatpush1.msra.mxu0 0.0
      %1226 = vmatprep.mubr.f32.mxu0 0.0
      %1227 = vmatmul.mubr.f32.gmra.mrb[0].mxu0 %v1067
      %v1228 = vpop.f32.mrb[0].mxu0
      %v1229 = vadd.f32 0.0, %v1228
      %v1230 = vpop.f32.mrb[0].mxu0
      %1231 = vmatprep.mubr.f32.mxu0 0.0
      %1232 = vmatmul.mubr.f32.gmra.mrb[0].mxu0 %v1070
      %v1233 = vpop.f32.mrb[0].mxu0
      %v1234 = vadd.f32 0.0, %v1233
      %v1235 = vpop.f32.mrb[0].mxu0
      %1236 = vmatprep.mubr.f32.mxu0 0.0
      %1237 = vmatmul.mubr.f32.gmra.mrb[0].mxu0 %v1073
      %v1238 = vpop.f32.mrb[0].mxu0
      %v1239 = vadd.f32 0.0, %v1238
      %v1240 = vpop.f32.mrb[0].mxu0
      %1241 = vmatprep.mubr.f32.mxu0 0.0
      %1242 = vmatmul.mubr.f32.gmra.mrb[0].mxu0 %v1076
      %v1243 = vpop.f32.mrb[0].mxu0
      %v1244 = vadd.f32 0.0, %v1243
      %v1245 = vpop.f32.mrb[0].mxu0
      %1246 = vmatprep.mubr.f32.mxu0 0.0
      %1247 = vmatmul.mubr.f32.gmra.mrb[0].mxu0 %v1079
      %v1248 = vpop.f32.mrb[0].mxu0
      %v1249 = vadd.f32 0.0, %v1248
      %v1250 = vpop.f32.mrb[0].mxu0
      %1251 = vmatprep.mubr.f32.mxu0 0.0
      %1252 = vmatmul.mubr.f32.gmra.mrb[0].mxu0 %v1082
      %v1253 = vpop.f32.mrb[0].mxu0
      %v1254 = vadd.f32 0.0, %v1253
      %v1255 = vpop.f32.mrb[0].mxu0
      %1256 = vmatprep.mubr.f32.mxu0 0.0
      %1257 = vmatmul.mubr.f32.gmra.mrb[0].mxu0 %v1085
      %v1258 = vpop.f32.mrb[0].mxu0
      %v1259 = vadd.f32 0.0, %v1258
      %v1260 = vpop.f32.mrb[0].mxu0
      %1261 = vmatprep.mubr.f32.mxu0 0.0
      %1262 = vmatmul.mubr.f32.gmra.mrb[0].mxu0 %v1088
      %v1263 = vpop.f32.mrb[0].mxu0
      %v1264 = vadd.f32 0.0, %v1263
      %v1265 = vpop.f32.mrb[0].mxu0
      %1266 = vmatprep.mubr.f32.mxu0 0.0
      %1267 = vmatmul.mubr.f32.gmra.mrb[0].mxu0 %v1091
      %v1268 = vpop.f32.mrb[0].mxu0
      %v1269 = vadd.f32 0.0, %v1268
      %v1270 = vpop.f32.mrb[0].mxu0
      %1271 = vmatprep.mubr.f32.mxu0 0.0
      %1272 = vmatmul.mubr.f32.gmra.mrb[0].mxu0 %v1094
      %v1273 = vpop.f32.mrb[0].mxu0
      %v1274 = vadd.f32 0.0, %v1273
      %v1275 = vpop.f32.mrb[0].mxu0
      %1276 = vmatprep.mubr.f32.mxu0 0.0
      %1277 = vmatmul.mubr.f32.gmra.mrb[0].mxu0 %v1097
      %v1278 = vpop.f32.mrb[0].mxu0
      %v1279 = vadd.f32 0.0, %v1278
      %v1280 = vpop.f32.mrb[0].mxu0
      %1281 = vmatprep.mubr.f32.mxu0 0.0
      %1282 = vmatmul.mubr.f32.gmra.mrb[0].mxu0 %v1100
      %v1283 = vpop.f32.mrb[0].mxu0
      %v1284 = vadd.f32 0.0, %v1283
      %v1285 = vpop.f32.mrb[0].mxu0
      %1286 = vmatprep.mubr.f32.mxu0 0.0
      %1287 = vmatmul.mubr.f32.gmra.mrb[0].mxu0 %v1103
      %v1288 = vpop.f32.mrb[0].mxu0
      %v1289 = vadd.f32 0.0, %v1288
      %v1290 = vpop.f32.mrb[0].mxu0
      %1291 = vmatprep.mubr.f32.mxu0 0.0
      %1292 = vmatmul.mubr.f32.gmra.mrb[0].mxu0 %v1106
      %v1293 = vpop.f32.mrb[0].mxu0
      %v1294 = vadd.f32 0.0, %v1293
      %v1295 = vpop.f32.mrb[0].mxu0
      %1296 = vmatprep.mubr.f32.mxu0 0.0
      %1297 = vmatmul.mubr.f32.gmra.mrb[0].mxu0 %v1109
      %v1298 = vpop.f32.mrb[0].mxu0
      %v1299 = vadd.f32 0.0, %v1298
      %v1300 = vpop.f32.mrb[0].mxu0
      %1301 = vmatprep.mubr.f32.mxu0 0.0
      %1302 = vmatmul.mubr.f32.gmra.mrb[0].mxu0 %v1112
      %v1303 = vpop.f32.mrb[0].mxu0
      %v1304 = vadd.f32 0.0, %v1303
      %v1305 = vpop.f32.mrb[0].mxu0
      %1306 = vmatprep.mubr.f32.mxu0 0.0
      %1307 = vmatmul.mubr.f32.gmra.mrb[0].mxu0 %v1115
      %v1308 = vpop.f32.mrb[0].mxu0
      %v1309 = vadd.f32 0.0, %v1308
      %v1310 = vpop.f32.mrb[0].mxu0
      %1311 = vmatprep.mubr.f32.mxu0 0.0
      %1312 = vmatmul.mubr.f32.gmra.mrb[0].mxu0 %v1118
      %v1313 = vpop.f32.mrb[0].mxu0
      %v1314 = vadd.f32 0.0, %v1313
      %v1315 = vpop.f32.mrb[0].mxu0
      %1316 = vmatprep.mubr.f32.mxu0 0.0
      %1317 = vmatmul.mubr.f32.gmra.mrb[0].mxu0 %v1121
      %v1318 = vpop.f32.mrb[0].mxu0
      %v1319 = vadd.f32 0.0, %v1318
      %v1320 = vpop.f32.mrb[0].mxu0
      %1321 = vmatprep.mubr.f32.mxu0 0.0
      %1322 = vmatmul.mubr.f32.gmra.mrb[0].mxu0 %v1124
      %v1323 = vpop.f32.mrb[0].mxu0
      %v1324 = vadd.f32 0.0, %v1323
      %v1325 = vpop.f32.mrb[0].mxu0
      %1326 = vmatprep.mubr.f32.mxu0 0.0
      %1327 = vmatmul.mubr.f32.gmra.mrb[0].mxu0 %v1127
      %v1328 = vpop.f32.mrb[0].mxu0
      %v1329 = vadd.f32 0.0, %v1328
      %v1330 = vpop.f32.mrb[0].mxu0
      %1331 = vmatprep.mubr.f32.mxu0 0.0
      %1332 = vmatmul.mubr.f32.gmra.mrb[0].mxu0 %v1130
      %v1333 = vpop.f32.mrb[0].mxu0
      %v1334 = vadd.f32 0.0, %v1333
      %v1335 = vpop.f32.mrb[0].mxu0
      %1336 = vmatprep.mubr.f32.mxu0 0.0
      %1337 = vmatmul.mubr.f32.gmra.mrb[0].mxu0 %v1133
      %v1338 = vpop.f32.mrb[0].mxu0
      %v1339 = vadd.f32 0.0, %v1338
      %v1340 = vpop.f32.mrb[0].mxu0
      %1341 = vmatprep.mubr.f32.mxu0 0.0
      %1342 = vmatmul.mubr.f32.gmra.mrb[0].mxu0 %v1136
      %v1343 = vpop.f32.mrb[0].mxu0
      %v1344 = vadd.f32 0.0, %v1343
      %v1345 = vpop.f32.mrb[0].mxu0
      %1346 = vmatprep.mubr.f32.mxu0 0.0
      %1347 = vmatmul.mubr.f32.gmra.mrb[0].mxu0 %v1139
      %v1348 = vpop.f32.mrb[0].mxu0
      %v1349 = vadd.f32 0.0, %v1348
      %v1350 = vpop.f32.mrb[0].mxu0
      %1351 = vmatprep.mubr.f32.mxu0 0.0
      %1352 = vmatmul.mubr.f32.gmra.mrb[0].mxu0 %v1142
      %v1353 = vpop.f32.mrb[0].mxu0
      %v1354 = vadd.f32 0.0, %v1353
      %v1355 = vpop.f32.mrb[0].mxu0
      %1356 = vmatprep.mubr.f32.mxu0 0.0
      %1357 = vmatmul.mubr.f32.gmra.mrb[0].mxu0 %v1145
      %v1358 = vpop.f32.mrb[0].mxu0
      %v1359 = vadd.f32 0.0, %v1358
      %v1360 = vpop.f32.mrb[0].mxu0
      %1361 = vmatprep.mubr.f32.mxu0 0.0
      %1362 = vmatmul.mubr.f32.gmra.mrb[0].mxu0 %v1148
      %v1363 = vpop.f32.mrb[0].mxu0
      %v1364 = vadd.f32 0.0, %v1363
      %v1365 = vpop.f32.mrb[0].mxu0
      %1366 = vmatprep.mubr.f32.mxu0 0.0
      %1367 = vmatmul.mubr.f32.gmra.mrb[0].mxu0 %v1151
      %v1368 = vpop.f32.mrb[0].mxu0
      %v1369 = vadd.f32 0.0, %v1368
      %v1370 = vpop.f32.mrb[0].mxu0
      %1371 = vmatprep.mubr.f32.mxu0 0.0
      %1372 = vmatmul.mubr.f32.gmra.mrb[0].mxu0 %v1154
      %v1373 = vpop.f32.mrb[0].mxu0
      %v1374 = vadd.f32 0.0, %v1373
      %v1375 = vpop.f32.mrb[0].mxu0
      %1376 = vmatprep.mubr.f32.mxu0 0.0
      %1377 = vmatmul.mubr.f32.gmra.mrb[0].mxu0 %v1157
      %v1378 = vpop.f32.mrb[0].mxu0
      %v1379 = vadd.f32 0.0, %v1378
      %v1380 = vpop.f32.mrb[0].mxu0
      %1381 = vmatprep.mubr.f32.mxu0 0.0
      %1382 = vmatmul.mubr.f32.gmra.mrb[0].mxu0 %v1160
      %v1383 = vpop.f32.mrb[0].mxu0
      %v1384 = vadd.f32 0.0, %v1383
      %v1385 = vpop.f32.mrb[0].mxu0
      %1386 = vdwg.mxu0
      %v1387 = vadd.f32 %v874, %v1229
      %v1388 = vadd.f32 %v879, %v1234
      %v1389 = vadd.f32 %v884, %v1239
      %v1390 = vadd.f32 %v889, %v1244
      %v1391 = vadd.f32 %v894, %v1249
      %v1392 = vadd.f32 %v899, %v1254
      %v1393 = vadd.f32 %v904, %v1259
      %v1394 = vadd.f32 %v909, %v1264
      %v1395 = vadd.f32 %v914, %v1269
      %v1396 = vadd.f32 %v919, %v1274
      %v1397 = vadd.f32 %v924, %v1279
      %v1398 = vadd.f32 %v929, %v1284
      %v1399 = vadd.f32 %v934, %v1289
      %v1400 = vadd.f32 %v939, %v1294
      %v1401 = vadd.f32 %v944, %v1299
      %v1402 = vadd.f32 %v949, %v1304
      %v1403 = vadd.f32 %v954, %v1309
      %v1404 = vadd.f32 %v959, %v1314
      %v1405 = vadd.f32 %v964, %v1319
      %v1406 = vadd.f32 %v969, %v1324
      %v1407 = vadd.f32 %v974, %v1329
      %v1408 = vadd.f32 %v979, %v1334
      %v1409 = vadd.f32 %v984, %v1339
      %v1410 = vadd.f32 %v989, %v1344
      %v1411 = vadd.f32 %v994, %v1349
      %v1412 = vadd.f32 %v999, %v1354
      %v1413 = vadd.f32 %v1004, %v1359
      %v1414 = vadd.f32 %v1009, %v1364
      %v1415 = vadd.f32 %v1014, %v1369
      %v1416 = vadd.f32 %v1019, %v1374
      %v1417 = vadd.f32 %v1024, %v1379
      %v1418 = vadd.f32 %v1029, %v1384
      %s1419 = scalar_lea.vmem %s285, 24
      %v1420 = vld [vmem:[%s1419] sm:$0xff]
      %v1421 = vld [vmem:[%s1419 + $0x8] sm:$0xff]
      %v1422 = vld [vmem:[%s1419 + $0x18] sm:$0xff]
      %v1423 = vld [vmem:[%s1419 + $0x20] sm:$0xff]
      %v1424 = vld [vmem:[%s1419 + $0x30] sm:$0xff]
      %v1425 = vld [vmem:[%s1419 + $0x38] sm:$0xff]
      %v1426 = vld [vmem:[%s1419 + $0x48] sm:$0xff]
      %v1427 = vld [vmem:[%s1419 + $0x50] sm:$0xff]
      %v1428 = vld [vmem:[%s1419 + $0x60] sm:$0xff]
      %v1429 = vld [vmem:[%s1419 + $0x68] sm:$0xff]
      %v1430 = vld [vmem:[%s1419 + $0x78] sm:$0xff]
      %v1431 = vld [vmem:[%s1419 + $0x80] sm:$0xff]
      %v1432 = vld [vmem:[%s1419 + $0x90] sm:$0xff]
      %v1433 = vld [vmem:[%s1419 + $0x98] sm:$0xff]
      %v1434 = vld [vmem:[%s1419 + $0xa8] sm:$0xff]
      %v1435 = vld [vmem:[%s1419 + $0xb0] sm:$0xff]
      %v1436 = vld [vmem:[%s1419 + $0xc0] sm:$0xff]
      %v1437 = vld [vmem:[%s1419 + $0xc8] sm:$0xff]
      %v1438 = vld [vmem:[%s1419 + $0xd8] sm:$0xff]
      %v1439 = vld [vmem:[%s1419 + $0xe0] sm:$0xff]
      %v1440 = vld [vmem:[%s1419 + $0xf0] sm:$0xff]
      %v1441 = vld [vmem:[%s1419 + $0xf8] sm:$0xff]
      %v1442 = vld [vmem:[%s1419 + $0x108] sm:$0xff]
      %v1443 = vld [vmem:[%s1419 + $0x110] sm:$0xff]
      %v1444 = vld [vmem:[%s1419 + $0x120] sm:$0xff]
      %v1445 = vld [vmem:[%s1419 + $0x128] sm:$0xff]
      %v1446 = vld [vmem:[%s1419 + $0x138] sm:$0xff]
      %v1447 = vld [vmem:[%s1419 + $0x140] sm:$0xff]
      %v1448 = vld [vmem:[%s1419 + $0x150] sm:$0xff]
      %v1449 = vld [vmem:[%s1419 + $0x158] sm:$0xff]
      %v1450 = vld [vmem:[%s1419 + $0x168] sm:$0xff]
      %v1451 = vld [vmem:[%s1419 + $0x170] sm:$0xff]
      %s1452 = scalar_lea.vmem %s293, 24
      %v1453 = vld [vmem:[%s1452] sm:$0xff]
      %v1455 = vsel %vm389, %v1420, 0
      %v1458 = vsel %vm389, %v1421, 0
      %v1461 = vsel %vm389, %v1422, 0
      %v1464 = vsel %vm389, %v1423, 0
      %v1467 = vsel %vm389, %v1424, 0
      %v1470 = vsel %vm389, %v1425, 0
      %v1473 = vsel %vm389, %v1426, 0
      %v1476 = vsel %vm389, %v1427, 0
      %v1479 = vsel %vm389, %v1428, 0
      %v1482 = vsel %vm389, %v1429, 0
      %v1485 = vsel %vm389, %v1430, 0
      %v1488 = vsel %vm389, %v1431, 0
      %v1491 = vsel %vm389, %v1432, 0
      %v1494 = vsel %vm389, %v1433, 0
      %v1497 = vsel %vm389, %v1434, 0
      %v1500 = vsel %vm389, %v1435, 0
      %v1503 = vsel %vm389, %v1436, 0
      %v1506 = vsel %vm389, %v1437, 0
      %v1509 = vsel %vm389, %v1438, 0
      %v1512 = vsel %vm389, %v1439, 0
      %v1515 = vsel %vm389, %v1440, 0
      %v1518 = vsel %vm389, %v1441, 0
      %v1521 = vsel %vm389, %v1442, 0
      %v1524 = vsel %vm389, %v1443, 0
      %v1527 = vsel %vm389, %v1444, 0
      %v1530 = vsel %vm389, %v1445, 0
      %v1533 = vsel %vm389, %v1446, 0
      %v1536 = vsel %vm389, %v1447, 0
      %v1539 = vsel %vm389, %v1448, 0
      %v1542 = vsel %vm389, %v1449, 0
      %v1545 = vsel %vm389, %v1450, 0
      %v1548 = vsel %vm389, %v1451, 0
      %1550 = vmatprep.subr.mxu0 0.0
      %1551 = vmatpush1.msra.mxu0 %v1453
      %1552 = vmatprep.subr.mxu0 0.0
      %1553 = vmatpush1.msra.mxu0 0.0
      %1554 = vmatprep.subr.mxu0 0.0
      %1555 = vmatpush1.msra.mxu0 0.0
      %1556 = vmatprep.subr.mxu0 0.0
      %1557 = vmatpush1.msra.mxu0 0.0
      %1558 = vmatprep.subr.mxu0 0.0
      %1559 = vmatpush1.msra.mxu0 0.0
      %1560 = vmatprep.subr.mxu0 0.0
      %1561 = vmatpush1.msra.mxu0 0.0
      %1562 = vmatprep.subr.mxu0 0.0
      %1563 = vmatpush1.msra.mxu0 0.0
      %1564 = vmatprep.subr.mxu0 0.0
      %1565 = vmatpush1.msra.mxu0 0.0
      %1566 = vmatprep.subr.mxu0 0.0
      %1567 = vmatpush1.msra.mxu0 0.0
      %1568 = vmatprep.subr.mxu0 0.0
      %1569 = vmatpush1.msra.mxu0 0.0
      %1570 = vmatprep.subr.mxu0 0.0
      %1571 = vmatpush1.msra.mxu0 0.0
      %1572 = vmatprep.subr.mxu0 0.0
      %1573 = vmatpush1.msra.mxu0 0.0
      %1574 = vmatprep.subr.mxu0 0.0
      %1575 = vmatpush1.msra.mxu0 0.0
      %1576 = vmatprep.subr.mxu0 0.0
      %1577 = vmatpush1.msra.mxu0 0.0
      %1578 = vmatprep.subr.mxu0 0.0
      %1579 = vmatpush1.msra.mxu0 0.0
      %1580 = vmatprep.subr.mxu0 0.0
      %1581 = vmatpush1.msra.mxu0 0.0
      %1582 = vmatprep.subr.mxu0 0.0
      %1583 = vmatpush1.msra.mxu0 0.0
      %1584 = vmatprep.subr.mxu0 0.0
      %1585 = vmatpush1.msra.mxu0 0.0
      %1586 = vmatprep.subr.mxu0 0.0
      %1587 = vmatpush1.msra.mxu0 0.0
      %1588 = vmatprep.subr.mxu0 0.0
      %1589 = vmatpush1.msra.mxu0 0.0
      %1590 = vmatprep.subr.mxu0 0.0
      %1591 = vmatpush1.msra.mxu0 0.0
      %1592 = vmatprep.subr.mxu0 0.0
      %1593 = vmatpush1.msra.mxu0 0.0
      %1594 = vmatprep.subr.mxu0 0.0
      %1595 = vmatpush1.msra.mxu0 0.0
      %1596 = vmatprep.subr.mxu0 0.0
      %1597 = vmatpush1.msra.mxu0 0.0
      %1598 = vmatprep.subr.mxu0 0.0
      %1599 = vmatpush1.msra.mxu0 0.0
      %1600 = vmatprep.subr.mxu0 0.0
      %1601 = vmatpush1.msra.mxu0 0.0
      %1602 = vmatprep.subr.mxu0 0.0
      %1603 = vmatpush1.msra.mxu0 0.0
      %1604 = vmatprep.subr.mxu0 0.0
      %1605 = vmatpush1.msra.mxu0 0.0
      %1606 = vmatprep.subr.mxu0 0.0
      %1607 = vmatpush1.msra.mxu0 0.0
      %1608 = vmatprep.subr.mxu0 0.0
      %1609 = vmatpush1.msra.mxu0 0.0
      %1610 = vmatprep.subr.mxu0 0.0
      %1611 = vmatpush1.msra.mxu0 0.0
      %1612 = vmatprep.subr.mxu0 0.0
      %1613 = vmatpush1.msra.mxu0 0.0
      %1614 = vmatprep.mubr.f32.mxu0 0.0
      %1615 = vmatmul.mubr.f32.gmra.mrb[0].mxu0 %v1455
      %v1616 = vpop.f32.mrb[0].mxu0
      %v1617 = vadd.f32 0.0, %v1616
      %v1618 = vpop.f32.mrb[0].mxu0
      %1619 = vmatprep.mubr.f32.mxu0 0.0
      %1620 = vmatmul.mubr.f32.gmra.mrb[0].mxu0 %v1458
      %v1621 = vpop.f32.mrb[0].mxu0
      %v1622 = vadd.f32 0.0, %v1621
      %v1623 = vpop.f32.mrb[0].mxu0
      %1624 = vmatprep.mubr.f32.mxu0 0.0
      %1625 = vmatmul.mubr.f32.gmra.mrb[0].mxu0 %v1461
      %v1626 = vpop.f32.mrb[0].mxu0
      %v1627 = vadd.f32 0.0, %v1626
      %v1628 = vpop.f32.mrb[0].mxu0
      %1629 = vmatprep.mubr.f32.mxu0 0.0
      %1630 = vmatmul.mubr.f32.gmra.mrb[0].mxu0 %v1464
      %v1631 = vpop.f32.mrb[0].mxu0
      %v1632 = vadd.f32 0.0, %v1631
      %v1633 = vpop.f32.mrb[0].mxu0
      %1634 = vmatprep.mubr.f32.mxu0 0.0
      %1635 = vmatmul.mubr.f32.gmra.mrb[0].mxu0 %v1467
      %v1636 = vpop.f32.mrb[0].mxu0
      %v1637 = vadd.f32 0.0, %v1636
      %v1638 = vpop.f32.mrb[0].mxu0
      %1639 = vmatprep.mubr.f32.mxu0 0.0
      %1640 = vmatmul.mubr.f32.gmra.mrb[0].mxu0 %v1470
      %v1641 = vpop.f32.mrb[0].mxu0
      %v1642 = vadd.f32 0.0, %v1641
      %v1643 = vpop.f32.mrb[0].mxu0
      %1644 = vmatprep.mubr.f32.mxu0 0.0
      %1645 = vmatmul.mubr.f32.gmra.mrb[0].mxu0 %v1473
      %v1646 = vpop.f32.mrb[0].mxu0
      %v1647 = vadd.f32 0.0, %v1646
      %v1648 = vpop.f32.mrb[0].mxu0
      %1649 = vmatprep.mubr.f32.mxu0 0.0
      %1650 = vmatmul.mubr.f32.gmra.mrb[0].mxu0 %v1476
      %v1651 = vpop.f32.mrb[0].mxu0
      %v1652 = vadd.f32 0.0, %v1651
      %v1653 = vpop.f32.mrb[0].mxu0
      %1654 = vmatprep.mubr.f32.mxu0 0.0
      %1655 = vmatmul.mubr.f32.gmra.mrb[0].mxu0 %v1479
      %v1656 = vpop.f32.mrb[0].mxu0
      %v1657 = vadd.f32 0.0, %v1656
      %v1658 = vpop.f32.mrb[0].mxu0
      %1659 = vmatprep.mubr.f32.mxu0 0.0
      %1660 = vmatmul.mubr.f32.gmra.mrb[0].mxu0 %v1482
      %v1661 = vpop.f32.mrb[0].mxu0
      %v1662 = vadd.f32 0.0, %v1661
      %v1663 = vpop.f32.mrb[0].mxu0
      %1664 = vmatprep.mubr.f32.mxu0 0.0
      %1665 = vmatmul.mubr.f32.gmra.mrb[0].mxu0 %v1485
      %v1666 = vpop.f32.mrb[0].mxu0
      %v1667 = vadd.f32 0.0, %v1666
      %v1668 = vpop.f32.mrb[0].mxu0
      %1669 = vmatprep.mubr.f32.mxu0 0.0
      %1670 = vmatmul.mubr.f32.gmra.mrb[0].mxu0 %v1488
      %v1671 = vpop.f32.mrb[0].mxu0
      %v1672 = vadd.f32 0.0, %v1671
      %v1673 = vpop.f32.mrb[0].mxu0
      %1674 = vmatprep.mubr.f32.mxu0 0.0
      %1675 = vmatmul.mubr.f32.gmra.mrb[0].mxu0 %v1491
      %v1676 = vpop.f32.mrb[0].mxu0
      %v1677 = vadd.f32 0.0, %v1676
      %v1678 = vpop.f32.mrb[0].mxu0
      %1679 = vmatprep.mubr.f32.mxu0 0.0
      %1680 = vmatmul.mubr.f32.gmra.mrb[0].mxu0 %v1494
      %v1681 = vpop.f32.mrb[0].mxu0
      %v1682 = vadd.f32 0.0, %v1681
      %v1683 = vpop.f32.mrb[0].mxu0
      %1684 = vmatprep.mubr.f32.mxu0 0.0
      %1685 = vmatmul.mubr.f32.gmra.mrb[0].mxu0 %v1497
      %v1686 = vpop.f32.mrb[0].mxu0
      %v1687 = vadd.f32 0.0, %v1686
      %v1688 = vpop.f32.mrb[0].mxu0
      %1689 = vmatprep.mubr.f32.mxu0 0.0
      %1690 = vmatmul.mubr.f32.gmra.mrb[0].mxu0 %v1500
      %v1691 = vpop.f32.mrb[0].mxu0
      %v1692 = vadd.f32 0.0, %v1691
      %v1693 = vpop.f32.mrb[0].mxu0
      %1694 = vmatprep.mubr.f32.mxu0 0.0
      %1695 = vmatmul.mubr.f32.gmra.mrb[0].mxu0 %v1503
      %v1696 = vpop.f32.mrb[0].mxu0
      %v1697 = vadd.f32 0.0, %v1696
      %v1698 = vpop.f32.mrb[0].mxu0
      %1699 = vmatprep.mubr.f32.mxu0 0.0
      %1700 = vmatmul.mubr.f32.gmra.mrb[0].mxu0 %v1506
      %v1701 = vpop.f32.mrb[0].mxu0
      %v1702 = vadd.f32 0.0, %v1701
      %v1703 = vpop.f32.mrb[0].mxu0
      %1704 = vmatprep.mubr.f32.mxu0 0.0
      %1705 = vmatmul.mubr.f32.gmra.mrb[0].mxu0 %v1509
      %v1706 = vpop.f32.mrb[0].mxu0
      %v1707 = vadd.f32 0.0, %v1706
      %v1708 = vpop.f32.mrb[0].mxu0
      %1709 = vmatprep.mubr.f32.mxu0 0.0
      %1710 = vmatmul.mubr.f32.gmra.mrb[0].mxu0 %v1512
      %v1711 = vpop.f32.mrb[0].mxu0
      %v1712 = vadd.f32 0.0, %v1711
      %v1713 = vpop.f32.mrb[0].mxu0
      %1714 = vmatprep.mubr.f32.mxu0 0.0
      %1715 = vmatmul.mubr.f32.gmra.mrb[0].mxu0 %v1515
      %v1716 = vpop.f32.mrb[0].mxu0
      %v1717 = vadd.f32 0.0, %v1716
      %v1718 = vpop.f32.mrb[0].mxu0
      %1719 = vmatprep.mubr.f32.mxu0 0.0
      %1720 = vmatmul.mubr.f32.gmra.mrb[0].mxu0 %v1518
      %v1721 = vpop.f32.mrb[0].mxu0
      %v1722 = vadd.f32 0.0, %v1721
      %v1723 = vpop.f32.mrb[0].mxu0
      %1724 = vmatprep.mubr.f32.mxu0 0.0
      %1725 = vmatmul.mubr.f32.gmra.mrb[0].mxu0 %v1521
      %v1726 = vpop.f32.mrb[0].mxu0
      %v1727 = vadd.f32 0.0, %v1726
      %v1728 = vpop.f32.mrb[0].mxu0
      %1729 = vmatprep.mubr.f32.mxu0 0.0
      %1730 = vmatmul.mubr.f32.gmra.mrb[0].mxu0 %v1524
      %v1731 = vpop.f32.mrb[0].mxu0
      %v1732 = vadd.f32 0.0, %v1731
      %v1733 = vpop.f32.mrb[0].mxu0
      %1734 = vmatprep.mubr.f32.mxu0 0.0
      %1735 = vmatmul.mubr.f32.gmra.mrb[0].mxu0 %v1527
      %v1736 = vpop.f32.mrb[0].mxu0
      %v1737 = vadd.f32 0.0, %v1736
      %v1738 = vpop.f32.mrb[0].mxu0
      %1739 = vmatprep.mubr.f32.mxu0 0.0
      %1740 = vmatmul.mubr.f32.gmra.mrb[0].mxu0 %v1530
      %v1741 = vpop.f32.mrb[0].mxu0
      %v1742 = vadd.f32 0.0, %v1741
      %v1743 = vpop.f32.mrb[0].mxu0
      %1744 = vmatprep.mubr.f32.mxu0 0.0
      %1745 = vmatmul.mubr.f32.gmra.mrb[0].mxu0 %v1533
      %v1746 = vpop.f32.mrb[0].mxu0
      %v1747 = vadd.f32 0.0, %v1746
      %v1748 = vpop.f32.mrb[0].mxu0
      %1749 = vmatprep.mubr.f32.mxu0 0.0
      %1750 = vmatmul.mubr.f32.gmra.mrb[0].mxu0 %v1536
      %v1751 = vpop.f32.mrb[0].mxu0
      %v1752 = vadd.f32 0.0, %v1751
      %v1753 = vpop.f32.mrb[0].mxu0
      %1754 = vmatprep.mubr.f32.mxu0 0.0
      %1755 = vmatmul.mubr.f32.gmra.mrb[0].mxu0 %v1539
      %v1756 = vpop.f32.mrb[0].mxu0
      %v1757 = vadd.f32 0.0, %v1756
      %v1758 = vpop.f32.mrb[0].mxu0
      %1759 = vmatprep.mubr.f32.mxu0 0.0
      %1760 = vmatmul.mubr.f32.gmra.mrb[0].mxu0 %v1542
      %v1761 = vpop.f32.mrb[0].mxu0
      %v1762 = vadd.f32 0.0, %v1761
      %v1763 = vpop.f32.mrb[0].mxu0
      %1764 = vmatprep.mubr.f32.mxu0 0.0
      %1765 = vmatmul.mubr.f32.gmra.mrb[0].mxu0 %v1545
      %v1766 = vpop.f32.mrb[0].mxu0
      %v1767 = vadd.f32 0.0, %v1766
      %v1768 = vpop.f32.mrb[0].mxu0
      %1769 = vmatprep.mubr.f32.mxu0 0.0
      %1770 = vmatmul.mubr.f32.gmra.mrb[0].mxu0 %v1548
      %v1771 = vpop.f32.mrb[0].mxu0
      %v1772 = vadd.f32 0.0, %v1771
      %v1773 = vpop.f32.mrb[0].mxu0
      %1774 = vdwg.mxu0
      %v1775 = vadd.f32 %v1387, %v1617
      %v1776 = vadd.f32 %v1388, %v1622
      %v1777 = vadd.f32 %v1389, %v1627
      %v1778 = vadd.f32 %v1390, %v1632
      %v1779 = vadd.f32 %v1391, %v1637
      %v1780 = vadd.f32 %v1392, %v1642
      %v1781 = vadd.f32 %v1393, %v1647
      %v1782 = vadd.f32 %v1394, %v1652
      %v1783 = vadd.f32 %v1395, %v1657
      %v1784 = vadd.f32 %v1396, %v1662
      %v1785 = vadd.f32 %v1397, %v1667
      %v1786 = vadd.f32 %v1398, %v1672
      %v1787 = vadd.f32 %v1399, %v1677
      %v1788 = vadd.f32 %v1400, %v1682
      %v1789 = vadd.f32 %v1401, %v1687
      %v1790 = vadd.f32 %v1402, %v1692
      %v1791 = vadd.f32 %v1403, %v1697
      %v1792 = vadd.f32 %v1404, %v1702
      %v1793 = vadd.f32 %v1405, %v1707
      %v1794 = vadd.f32 %v1406, %v1712
      %v1795 = vadd.f32 %v1407, %v1717
      %v1796 = vadd.f32 %v1408, %v1722
      %v1797 = vadd.f32 %v1409, %v1727
      %v1798 = vadd.f32 %v1410, %v1732
      %v1799 = vadd.f32 %v1411, %v1737
      %v1800 = vadd.f32 %v1412, %v1742
      %v1801 = vadd.f32 %v1413, %v1747
      %v1802 = vadd.f32 %v1414, %v1752
      %v1803 = vadd.f32 %v1415, %v1757
      %v1804 = vadd.f32 %v1416, %v1762
      %v1805 = vadd.f32 %v1417, %v1767
      %v1806 = vadd.f32 %v1418, %v1772
      %v1807 = vld [vmem:[%s1419 + $0x1] sm:$0xff]
      %v1808 = vld [vmem:[%s1419 + $0x9] sm:$0xff]
      %v1809 = vld [vmem:[%s1419 + $0x19] sm:$0xff]
      %v1810 = vld [vmem:[%s1419 + $0x21] sm:$0xff]
      %v1811 = vld [vmem:[%s1419 + $0x31] sm:$0xff]
      %v1812 = vld [vmem:[%s1419 + $0x39] sm:$0xff]
      %v1813 = vld [vmem:[%s1419 + $0x49] sm:$0xff]
      %v1814 = vld [vmem:[%s1419 + $0x51] sm:$0xff]
      %v1815 = vld [vmem:[%s1419 + $0x61] sm:$0xff]
      %v1816 = vld [vmem:[%s1419 + $0x69] sm:$0xff]
      %v1817 = vld [vmem:[%s1419 + $0x79] sm:$0xff]
      %v1818 = vld [vmem:[%s1419 + $0x81] sm:$0xff]
      %v1819 = vld [vmem:[%s1419 + $0x91] sm:$0xff]
      %v1820 = vld [vmem:[%s1419 + $0x99] sm:$0xff]
      %v1821 = vld [vmem:[%s1419 + $0xa9] sm:$0xff]
      %v1822 = vld [vmem:[%s1419 + $0xb1] sm:$0xff]
      %v1823 = vld [vmem:[%s1419 + $0xc1] sm:$0xff]
      %v1824 = vld [vmem:[%s1419 + $0xc9] sm:$0xff]
      %v1825 = vld [vmem:[%s1419 + $0xd9] sm:$0xff]
      %v1826 = vld [vmem:[%s1419 + $0xe1] sm:$0xff]
      %v1827 = vld [vmem:[%s1419 + $0xf1] sm:$0xff]
      %v1828 = vld [vmem:[%s1419 + $0xf9] sm:$0xff]
      %v1829 = vld [vmem:[%s1419 + $0x109] sm:$0xff]
      %v1830 = vld [vmem:[%s1419 + $0x111] sm:$0xff]
      %v1831 = vld [vmem:[%s1419 + $0x121] sm:$0xff]
      %v1832 = vld [vmem:[%s1419 + $0x129] sm:$0xff]
      %v1833 = vld [vmem:[%s1419 + $0x139] sm:$0xff]
      %v1834 = vld [vmem:[%s1419 + $0x141] sm:$0xff]
      %v1835 = vld [vmem:[%s1419 + $0x151] sm:$0xff]
      %v1836 = vld [vmem:[%s1419 + $0x159] sm:$0xff]
      %v1837 = vld [vmem:[%s1419 + $0x169] sm:$0xff]
      %v1838 = vld [vmem:[%s1419 + $0x171] sm:$0xff]
      %s1839 = scalar_lea.vmem %s293, 32
      %v1840 = vld [vmem:[%s1839] sm:$0xff]
      %v1842 = vsel %vm389, %v1807, 0
      %v1845 = vsel %vm389, %v1808, 0
      %v1848 = vsel %vm389, %v1809, 0
      %v1851 = vsel %vm389, %v1810, 0
      %v1854 = vsel %vm389, %v1811, 0
      %v1857 = vsel %vm389, %v1812, 0
      %v1860 = vsel %vm389, %v1813, 0
      %v1863 = vsel %vm389, %v1814, 0
      %v1866 = vsel %vm389, %v1815, 0
      %v1869 = vsel %vm389, %v1816, 0
      %v1872 = vsel %vm389, %v1817, 0
      %v1875 = vsel %vm389, %v1818, 0
      %v1878 = vsel %vm389, %v1819, 0
      %v1881 = vsel %vm389, %v1820, 0
      %v1884 = vsel %vm389, %v1821, 0
      %v1887 = vsel %vm389, %v1822, 0
      %v1890 = vsel %vm389, %v1823, 0
      %v1893 = vsel %vm389, %v1824, 0
      %v1896 = vsel %vm389, %v1825, 0
      %v1899 = vsel %vm389, %v1826, 0
      %v1902 = vsel %vm389, %v1827, 0
      %v1905 = vsel %vm389, %v1828, 0
      %v1908 = vsel %vm389, %v1829, 0
      %v1911 = vsel %vm389, %v1830, 0
      %v1914 = vsel %vm389, %v1831, 0
      %v1917 = vsel %vm389, %v1832, 0
      %v1920 = vsel %vm389, %v1833, 0
      %v1923 = vsel %vm389, %v1834, 0
      %v1926 = vsel %vm389, %v1835, 0
      %v1929 = vsel %vm389, %v1836, 0
      %v1932 = vsel %vm389, %v1837, 0
      %v1935 = vsel %vm389, %v1838, 0
      %1937 = vmatprep.subr.mxu0 0.0
      %1938 = vmatpush1.msra.mxu0 %v1840
      %1939 = vmatprep.subr.mxu0 0.0
      %1940 = vmatpush1.msra.mxu0 0.0
      %1941 = vmatprep.subr.mxu0 0.0
      %1942 = vmatpush1.msra.mxu0 0.0
      %1943 = vmatprep.subr.mxu0 0.0
      %1944 = vmatpush1.msra.mxu0 0.0
      %1945 = vmatprep.subr.mxu0 0.0
      %1946 = vmatpush1.msra.mxu0 0.0
      %1947 = vmatprep.subr.mxu0 0.0
      %1948 = vmatpush1.msra.mxu0 0.0
      %1949 = vmatprep.subr.mxu0 0.0
      %1950 = vmatpush1.msra.mxu0 0.0
      %1951 = vmatprep.subr.mxu0 0.0
      %1952 = vmatpush1.msra.mxu0 0.0
      %1953 = vmatprep.subr.mxu0 0.0
      %1954 = vmatpush1.msra.mxu0 0.0
      %1955 = vmatprep.subr.mxu0 0.0
      %1956 = vmatpush1.msra.mxu0 0.0
      %1957 = vmatprep.subr.mxu0 0.0
      %1958 = vmatpush1.msra.mxu0 0.0
      %1959 = vmatprep.subr.mxu0 0.0
      %1960 = vmatpush1.msra.mxu0 0.0
      %1961 = vmatprep.subr.mxu0 0.0
      %1962 = vmatpush1.msra.mxu0 0.0
      %1963 = vmatprep.subr.mxu0 0.0
      %1964 = vmatpush1.msra.mxu0 0.0
      %1965 = vmatprep.subr.mxu0 0.0
      %1966 = vmatpush1.msra.mxu0 0.0
      %1967 = vmatprep.subr.mxu0 0.0
      %1968 = vmatpush1.msra.mxu0 0.0
      %1969 = vmatprep.subr.mxu0 0.0
      %1970 = vmatpush1.msra.mxu0 0.0
      %1971 = vmatprep.subr.mxu0 0.0
      %1972 = vmatpush1.msra.mxu0 0.0
      %1973 = vmatprep.subr.mxu0 0.0
      %1974 = vmatpush1.msra.mxu0 0.0
      %1975 = vmatprep.subr.mxu0 0.0
      %1976 = vmatpush1.msra.mxu0 0.0
      %1977 = vmatprep.subr.mxu0 0.0
      %1978 = vmatpush1.msra.mxu0 0.0
      %1979 = vmatprep.subr.mxu0 0.0
      %1980 = vmatpush1.msra.mxu0 0.0
      %1981 = vmatprep.subr.mxu0 0.0
      %1982 = vmatpush1.msra.mxu0 0.0
      %1983 = vmatprep.subr.mxu0 0.0
      %1984 = vmatpush1.msra.mxu0 0.0
      %1985 = vmatprep.subr.mxu0 0.0
      %1986 = vmatpush1.msra.mxu0 0.0
      %1987 = vmatprep.subr.mxu0 0.0
      %1988 = vmatpush1.msra.mxu0 0.0
      %1989 = vmatprep.subr.mxu0 0.0
      %1990 = vmatpush1.msra.mxu0 0.0
      %1991 = vmatprep.subr.mxu0 0.0
      %1992 = vmatpush1.msra.mxu0 0.0
      %1993 = vmatprep.subr.mxu0 0.0
      %1994 = vmatpush1.msra.mxu0 0.0
      %1995 = vmatprep.subr.mxu0 0.0
      %1996 = vmatpush1.msra.mxu0 0.0
      %1997 = vmatprep.subr.mxu0 0.0
      %1998 = vmatpush1.msra.mxu0 0.0
      %1999 = vmatprep.subr.mxu0 0.0
      %2000 = vmatpush1.msra.mxu0 0.0
      %2001 = vmatprep.mubr.f32.mxu0 0.0
      %2002 = vmatmul.mubr.f32.gmra.mrb[0].mxu0 %v1842
      %v2003 = vpop.f32.mrb[0].mxu0
      %v2004 = vadd.f32 0.0, %v2003
      %v2005 = vpop.f32.mrb[0].mxu0
      %2006 = vmatprep.mubr.f32.mxu0 0.0
      %2007 = vmatmul.mubr.f32.gmra.mrb[0].mxu0 %v1845
      %v2008 = vpop.f32.mrb[0].mxu0
      %v2009 = vadd.f32 0.0, %v2008
      %v2010 = vpop.f32.mrb[0].mxu0
      %2011 = vmatprep.mubr.f32.mxu0 0.0
      %2012 = vmatmul.mubr.f32.gmra.mrb[0].mxu0 %v1848
      %v2013 = vpop.f32.mrb[0].mxu0
      %v2014 = vadd.f32 0.0, %v2013
      %v2015 = vpop.f32.mrb[0].mxu0
      %2016 = vmatprep.mubr.f32.mxu0 0.0
      %2017 = vmatmul.mubr.f32.gmra.mrb[0].mxu0 %v1851
      %v2018 = vpop.f32.mrb[0].mxu0
      %v2019 = vadd.f32 0.0, %v2018
      %v2020 = vpop.f32.mrb[0].mxu0
      %2021 = vmatprep.mubr.f32.mxu0 0.0
      %2022 = vmatmul.mubr.f32.gmra.mrb[0].mxu0 %v1854
      %v2023 = vpop.f32.mrb[0].mxu0
      %v2024 = vadd.f32 0.0, %v2023
      %v2025 = vpop.f32.mrb[0].mxu0
      %2026 = vmatprep.mubr.f32.mxu0 0.0
      %2027 = vmatmul.mubr.f32.gmra.mrb[0].mxu0 %v1857
      %v2028 = vpop.f32.mrb[0].mxu0
      %v2029 = vadd.f32 0.0, %v2028
      %v2030 = vpop.f32.mrb[0].mxu0
      %2031 = vmatprep.mubr.f32.mxu0 0.0
      %2032 = vmatmul.mubr.f32.gmra.mrb[0].mxu0 %v1860
      %v2033 = vpop.f32.mrb[0].mxu0
      %v2034 = vadd.f32 0.0, %v2033
      %v2035 = vpop.f32.mrb[0].mxu0
      %2036 = vmatprep.mubr.f32.mxu0 0.0
      %2037 = vmatmul.mubr.f32.gmra.mrb[0].mxu0 %v1863
      %v2038 = vpop.f32.mrb[0].mxu0
      %v2039 = vadd.f32 0.0, %v2038
      %v2040 = vpop.f32.mrb[0].mxu0
      %2041 = vmatprep.mubr.f32.mxu0 0.0
      %2042 = vmatmul.mubr.f32.gmra.mrb[0].mxu0 %v1866
      %v2043 = vpop.f32.mrb[0].mxu0
      %v2044 = vadd.f32 0.0, %v2043
      %v2045 = vpop.f32.mrb[0].mxu0
      %2046 = vmatprep.mubr.f32.mxu0 0.0
      %2047 = vmatmul.mubr.f32.gmra.mrb[0].mxu0 %v1869
      %v2048 = vpop.f32.mrb[0].mxu0
      %v2049 = vadd.f32 0.0, %v2048
      %v2050 = vpop.f32.mrb[0].mxu0
      %2051 = vmatprep.mubr.f32.mxu0 0.0
      %2052 = vmatmul.mubr.f32.gmra.mrb[0].mxu0 %v1872
      %v2053 = vpop.f32.mrb[0].mxu0
      %v2054 = vadd.f32 0.0, %v2053
      %v2055 = vpop.f32.mrb[0].mxu0
      %2056 = vmatprep.mubr.f32.mxu0 0.0
      %2057 = vmatmul.mubr.f32.gmra.mrb[0].mxu0 %v1875
      %v2058 = vpop.f32.mrb[0].mxu0
      %v2059 = vadd.f32 0.0, %v2058
      %v2060 = vpop.f32.mrb[0].mxu0
      %2061 = vmatprep.mubr.f32.mxu0 0.0
      %2062 = vmatmul.mubr.f32.gmra.mrb[0].mxu0 %v1878
      %v2063 = vpop.f32.mrb[0].mxu0
      %v2064 = vadd.f32 0.0, %v2063
      %v2065 = vpop.f32.mrb[0].mxu0
      %2066 = vmatprep.mubr.f32.mxu0 0.0
      %2067 = vmatmul.mubr.f32.gmra.mrb[0].mxu0 %v1881
      %v2068 = vpop.f32.mrb[0].mxu0
      %v2069 = vadd.f32 0.0, %v2068
      %v2070 = vpop.f32.mrb[0].mxu0
      %2071 = vmatprep.mubr.f32.mxu0 0.0
      %2072 = vmatmul.mubr.f32.gmra.mrb[0].mxu0 %v1884
      %v2073 = vpop.f32.mrb[0].mxu0
      %v2074 = vadd.f32 0.0, %v2073
      %v2075 = vpop.f32.mrb[0].mxu0
      %2076 = vmatprep.mubr.f32.mxu0 0.0
      %2077 = vmatmul.mubr.f32.gmra.mrb[0].mxu0 %v1887
      %v2078 = vpop.f32.mrb[0].mxu0
      %v2079 = vadd.f32 0.0, %v2078
      %v2080 = vpop.f32.mrb[0].mxu0
      %2081 = vmatprep.mubr.f32.mxu0 0.0
      %2082 = vmatmul.mubr.f32.gmra.mrb[0].mxu0 %v1890
      %v2083 = vpop.f32.mrb[0].mxu0
      %v2084 = vadd.f32 0.0, %v2083
      %v2085 = vpop.f32.mrb[0].mxu0
      %2086 = vmatprep.mubr.f32.mxu0 0.0
      %2087 = vmatmul.mubr.f32.gmra.mrb[0].mxu0 %v1893
      %v2088 = vpop.f32.mrb[0].mxu0
      %v2089 = vadd.f32 0.0, %v2088
      %v2090 = vpop.f32.mrb[0].mxu0
      %2091 = vmatprep.mubr.f32.mxu0 0.0
      %2092 = vmatmul.mubr.f32.gmra.mrb[0].mxu0 %v1896
      %v2093 = vpop.f32.mrb[0].mxu0
      %v2094 = vadd.f32 0.0, %v2093
      %v2095 = vpop.f32.mrb[0].mxu0
      %2096 = vmatprep.mubr.f32.mxu0 0.0
      %2097 = vmatmul.mubr.f32.gmra.mrb[0].mxu0 %v1899
      %v2098 = vpop.f32.mrb[0].mxu0
      %v2099 = vadd.f32 0.0, %v2098
      %v2100 = vpop.f32.mrb[0].mxu0
      %2101 = vmatprep.mubr.f32.mxu0 0.0
      %2102 = vmatmul.mubr.f32.gmra.mrb[0].mxu0 %v1902
      %v2103 = vpop.f32.mrb[0].mxu0
      %v2104 = vadd.f32 0.0, %v2103
      %v2105 = vpop.f32.mrb[0].mxu0
      %2106 = vmatprep.mubr.f32.mxu0 0.0
      %2107 = vmatmul.mubr.f32.gmra.mrb[0].mxu0 %v1905
      %v2108 = vpop.f32.mrb[0].mxu0
      %v2109 = vadd.f32 0.0, %v2108
      %v2110 = vpop.f32.mrb[0].mxu0
      %2111 = vmatprep.mubr.f32.mxu0 0.0
      %2112 = vmatmul.mubr.f32.gmra.mrb[0].mxu0 %v1908
      %v2113 = vpop.f32.mrb[0].mxu0
      %v2114 = vadd.f32 0.0, %v2113
      %v2115 = vpop.f32.mrb[0].mxu0
      %2116 = vmatprep.mubr.f32.mxu0 0.0
      %2117 = vmatmul.mubr.f32.gmra.mrb[0].mxu0 %v1911
      %v2118 = vpop.f32.mrb[0].mxu0
      %v2119 = vadd.f32 0.0, %v2118
      %v2120 = vpop.f32.mrb[0].mxu0
      %2121 = vmatprep.mubr.f32.mxu0 0.0
      %2122 = vmatmul.mubr.f32.gmra.mrb[0].mxu0 %v1914
      %v2123 = vpop.f32.mrb[0].mxu0
      %v2124 = vadd.f32 0.0, %v2123
      %v2125 = vpop.f32.mrb[0].mxu0
      %2126 = vmatprep.mubr.f32.mxu0 0.0
      %2127 = vmatmul.mubr.f32.gmra.mrb[0].mxu0 %v1917
      %v2128 = vpop.f32.mrb[0].mxu0
      %v2129 = vadd.f32 0.0, %v2128
      %v2130 = vpop.f32.mrb[0].mxu0
      %2131 = vmatprep.mubr.f32.mxu0 0.0
      %2132 = vmatmul.mubr.f32.gmra.mrb[0].mxu0 %v1920
      %v2133 = vpop.f32.mrb[0].mxu0
      %v2134 = vadd.f32 0.0, %v2133
      %v2135 = vpop.f32.mrb[0].mxu0
      %2136 = vmatprep.mubr.f32.mxu0 0.0
      %2137 = vmatmul.mubr.f32.gmra.mrb[0].mxu0 %v1923
      %v2138 = vpop.f32.mrb[0].mxu0
      %v2139 = vadd.f32 0.0, %v2138
      %v2140 = vpop.f32.mrb[0].mxu0
      %2141 = vmatprep.mubr.f32.mxu0 0.0
      %2142 = vmatmul.mubr.f32.gmra.mrb[0].mxu0 %v1926
      %v2143 = vpop.f32.mrb[0].mxu0
      %v2144 = vadd.f32 0.0, %v2143
      %v2145 = vpop.f32.mrb[0].mxu0
      %2146 = vmatprep.mubr.f32.mxu0 0.0
      %2147 = vmatmul.mubr.f32.gmra.mrb[0].mxu0 %v1929
      %v2148 = vpop.f32.mrb[0].mxu0
      %v2149 = vadd.f32 0.0, %v2148
      %v2150 = vpop.f32.mrb[0].mxu0
      %2151 = vmatprep.mubr.f32.mxu0 0.0
      %2152 = vmatmul.mubr.f32.gmra.mrb[0].mxu0 %v1932
      %v2153 = vpop.f32.mrb[0].mxu0
      %v2154 = vadd.f32 0.0, %v2153
      %v2155 = vpop.f32.mrb[0].mxu0
      %2156 = vmatprep.mubr.f32.mxu0 0.0
      %2157 = vmatmul.mubr.f32.gmra.mrb[0].mxu0 %v1935
      %v2158 = vpop.f32.mrb[0].mxu0
      %v2159 = vadd.f32 0.0, %v2158
      %v2160 = vpop.f32.mrb[0].mxu0
      %2161 = vdwg.mxu0
      %v2162 = vadd.f32 %v1775, %v2004
      %v2163 = vadd.f32 %v1776, %v2009
      %v2164 = vadd.f32 %v1777, %v2014
      %v2165 = vadd.f32 %v1778, %v2019
      %v2166 = vadd.f32 %v1779, %v2024
      %v2167 = vadd.f32 %v1780, %v2029
      %v2168 = vadd.f32 %v1781, %v2034
      %v2169 = vadd.f32 %v1782, %v2039
      %v2170 = vadd.f32 %v1783, %v2044
      %v2171 = vadd.f32 %v1784, %v2049
      %v2172 = vadd.f32 %v1785, %v2054
      %v2173 = vadd.f32 %v1786, %v2059
      %v2174 = vadd.f32 %v1787, %v2064
      %v2175 = vadd.f32 %v1788, %v2069
      %v2176 = vadd.f32 %v1789, %v2074
      %v2177 = vadd.f32 %v1790, %v2079
      %v2178 = vadd.f32 %v1791, %v2084
      %v2179 = vadd.f32 %v1792, %v2089
      %v2180 = vadd.f32 %v1793, %v2094
      %v2181 = vadd.f32 %v1794, %v2099
      %v2182 = vadd.f32 %v1795, %v2104
      %v2183 = vadd.f32 %v1796, %v2109
      %v2184 = vadd.f32 %v1797, %v2114
      %v2185 = vadd.f32 %v1798, %v2119
      %v2186 = vadd.f32 %v1799, %v2124
      %v2187 = vadd.f32 %v1800, %v2129
      %v2188 = vadd.f32 %v1801, %v2134
      %v2189 = vadd.f32 %v1802, %v2139
      %v2190 = vadd.f32 %v1803, %v2144
      %v2191 = vadd.f32 %v1804, %v2149
      %v2192 = vadd.f32 %v1805, %v2154
      %v2193 = vadd.f32 %v1806, %v2159
      %v2194 = vld [vmem:[%s1419 + $0x2] sm:$0xff]
      %v2195 = vld [vmem:[%s1419 + $0xa] sm:$0xff]
      %v2196 = vld [vmem:[%s1419 + $0x1a] sm:$0xff]
      %v2197 = vld [vmem:[%s1419 + $0x22] sm:$0xff]
      %v2198 = vld [vmem:[%s1419 + $0x32] sm:$0xff]
      %v2199 = vld [vmem:[%s1419 + $0x3a] sm:$0xff]
      %v2200 = vld [vmem:[%s1419 + $0x4a] sm:$0xff]
      %v2201 = vld [vmem:[%s1419 + $0x52] sm:$0xff]
      %v2202 = vld [vmem:[%s1419 + $0x62] sm:$0xff]
      %v2203 = vld [vmem:[%s1419 + $0x6a] sm:$0xff]
      %v2204 = vld [vmem:[%s1419 + $0x7a] sm:$0xff]
      %v2205 = vld [vmem:[%s1419 + $0x82] sm:$0xff]
      %v2206 = vld [vmem:[%s1419 + $0x92] sm:$0xff]
      %v2207 = vld [vmem:[%s1419 + $0x9a] sm:$0xff]
      %v2208 = vld [vmem:[%s1419 + $0xaa] sm:$0xff]
      %v2209 = vld [vmem:[%s1419 + $0xb2] sm:$0xff]
      %v2210 = vld [vmem:[%s1419 + $0xc2] sm:$0xff]
      %v2211 = vld [vmem:[%s1419 + $0xca] sm:$0xff]
      %v2212 = vld [vmem:[%s1419 + $0xda] sm:$0xff]
      %v2213 = vld [vmem:[%s1419 + $0xe2] sm:$0xff]
      %v2214 = vld [vmem:[%s1419 + $0xf2] sm:$0xff]
      %v2215 = vld [vmem:[%s1419 + $0xfa] sm:$0xff]
      %v2216 = vld [vmem:[%s1419 + $0x10a] sm:$0xff]
      %v2217 = vld [vmem:[%s1419 + $0x112] sm:$0xff]
      %v2218 = vld [vmem:[%s1419 + $0x122] sm:$0xff]
      %v2219 = vld [vmem:[%s1419 + $0x12a] sm:$0xff]
      %v2220 = vld [vmem:[%s1419 + $0x13a] sm:$0xff]
      %v2221 = vld [vmem:[%s1419 + $0x142] sm:$0xff]
      %v2222 = vld [vmem:[%s1419 + $0x152] sm:$0xff]
      %v2223 = vld [vmem:[%s1419 + $0x15a] sm:$0xff]
      %v2224 = vld [vmem:[%s1419 + $0x16a] sm:$0xff]
      %v2225 = vld [vmem:[%s1419 + $0x172] sm:$0xff]
      %s2226 = scalar_lea.vmem %s293, 40
      %v2227 = vld [vmem:[%s2226] sm:$0xff]
      %v2229 = vsel %vm389, %v2194, 0
      %v2232 = vsel %vm389, %v2195, 0
      %v2235 = vsel %vm389, %v2196, 0
      %v2238 = vsel %vm389, %v2197, 0
      %v2241 = vsel %vm389, %v2198, 0
      %v2244 = vsel %vm389, %v2199, 0
      %v2247 = vsel %vm389, %v2200, 0
      %v2250 = vsel %vm389, %v2201, 0
      %v2253 = vsel %vm389, %v2202, 0
      %v2256 = vsel %vm389, %v2203, 0
      %v2259 = vsel %vm389, %v2204, 0
      %v2262 = vsel %vm389, %v2205, 0
      %v2265 = vsel %vm389, %v2206, 0
      %v2268 = vsel %vm389, %v2207, 0
      %v2271 = vsel %vm389, %v2208, 0
      %v2274 = vsel %vm389, %v2209, 0
      %v2277 = vsel %vm389, %v2210, 0
      %v2280 = vsel %vm389, %v2211, 0
      %v2283 = vsel %vm389, %v2212, 0
      %v2286 = vsel %vm389, %v2213, 0
      %v2289 = vsel %vm389, %v2214, 0
      %v2292 = vsel %vm389, %v2215, 0
      %v2295 = vsel %vm389, %v2216, 0
      %v2298 = vsel %vm389, %v2217, 0
      %v2301 = vsel %vm389, %v2218, 0
      %v2304 = vsel %vm389, %v2219, 0
      %v2307 = vsel %vm389, %v2220, 0
      %v2310 = vsel %vm389, %v2221, 0
      %v2313 = vsel %vm389, %v2222, 0
      %v2316 = vsel %vm389, %v2223, 0
      %v2319 = vsel %vm389, %v2224, 0
      %v2322 = vsel %vm389, %v2225, 0
      %2324 = vmatprep.subr.mxu0 0.0
      %2325 = vmatpush1.msra.mxu0 %v2227
      %2326 = vmatprep.subr.mxu0 0.0
      %2327 = vmatpush1.msra.mxu0 0.0
      %2328 = vmatprep.subr.mxu0 0.0
      %2329 = vmatpush1.msra.mxu0 0.0
      %2330 = vmatprep.subr.mxu0 0.0
      %2331 = vmatpush1.msra.mxu0 0.0
      %2332 = vmatprep.subr.mxu0 0.0
      %2333 = vmatpush1.msra.mxu0 0.0
      %2334 = vmatprep.subr.mxu0 0.0
      %2335 = vmatpush1.msra.mxu0 0.0
      %2336 = vmatprep.subr.mxu0 0.0
      %2337 = vmatpush1.msra.mxu0 0.0
      %2338 = vmatprep.subr.mxu0 0.0
      %2339 = vmatpush1.msra.mxu0 0.0
      %2340 = vmatprep.subr.mxu0 0.0
      %2341 = vmatpush1.msra.mxu0 0.0
      %2342 = vmatprep.subr.mxu0 0.0
      %2343 = vmatpush1.msra.mxu0 0.0
      %2344 = vmatprep.subr.mxu0 0.0
      %2345 = vmatpush1.msra.mxu0 0.0
      %2346 = vmatprep.subr.mxu0 0.0
      %2347 = vmatpush1.msra.mxu0 0.0
      %2348 = vmatprep.subr.mxu0 0.0
      %2349 = vmatpush1.msra.mxu0 0.0
      %2350 = vmatprep.subr.mxu0 0.0
      %2351 = vmatpush1.msra.mxu0 0.0
      %2352 = vmatprep.subr.mxu0 0.0
      %2353 = vmatpush1.msra.mxu0 0.0
      %2354 = vmatprep.subr.mxu0 0.0
      %2355 = vmatpush1.msra.mxu0 0.0
      %2356 = vmatprep.subr.mxu0 0.0
      %2357 = vmatpush1.msra.mxu0 0.0
      %2358 = vmatprep.subr.mxu0 0.0
      %2359 = vmatpush1.msra.mxu0 0.0
      %2360 = vmatprep.subr.mxu0 0.0
      %2361 = vmatpush1.msra.mxu0 0.0
      %2362 = vmatprep.subr.mxu0 0.0
      %2363 = vmatpush1.msra.mxu0 0.0
      %2364 = vmatprep.subr.mxu0 0.0
      %2365 = vmatpush1.msra.mxu0 0.0
      %2366 = vmatprep.subr.mxu0 0.0
      %2367 = vmatpush1.msra.mxu0 0.0
      %2368 = vmatprep.subr.mxu0 0.0
      %2369 = vmatpush1.msra.mxu0 0.0
      %2370 = vmatprep.subr.mxu0 0.0
      %2371 = vmatpush1.msra.mxu0 0.0
      %2372 = vmatprep.subr.mxu0 0.0
      %2373 = vmatpush1.msra.mxu0 0.0
      %2374 = vmatprep.subr.mxu0 0.0
      %2375 = vmatpush1.msra.mxu0 0.0
      %2376 = vmatprep.subr.mxu0 0.0
      %2377 = vmatpush1.msra.mxu0 0.0
      %2378 = vmatprep.subr.mxu0 0.0
      %2379 = vmatpush1.msra.mxu0 0.0
      %2380 = vmatprep.subr.mxu0 0.0
      %2381 = vmatpush1.msra.mxu0 0.0
      %2382 = vmatprep.subr.mxu0 0.0
      %2383 = vmatpush1.msra.mxu0 0.0
      %2384 = vmatprep.subr.mxu0 0.0
      %2385 = vmatpush1.msra.mxu0 0.0
      %2386 = vmatprep.subr.mxu0 0.0
      %2387 = vmatpush1.msra.mxu0 0.0
      %2388 = vmatprep.mubr.f32.mxu0 0.0
      %2389 = vmatmul.mubr.f32.gmra.mrb[0].mxu0 %v2229
      %v2390 = vpop.f32.mrb[0].mxu0
      %v2391 = vadd.f32 0.0, %v2390
      %v2392 = vpop.f32.mrb[0].mxu0
      %2393 = vmatprep.mubr.f32.mxu0 0.0
      %2394 = vmatmul.mubr.f32.gmra.mrb[0].mxu0 %v2232
      %v2395 = vpop.f32.mrb[0].mxu0
      %v2396 = vadd.f32 0.0, %v2395
      %v2397 = vpop.f32.mrb[0].mxu0
      %2398 = vmatprep.mubr.f32.mxu0 0.0
      %2399 = vmatmul.mubr.f32.gmra.mrb[0].mxu0 %v2235
      %v2400 = vpop.f32.mrb[0].mxu0
      %v2401 = vadd.f32 0.0, %v2400
      %v2402 = vpop.f32.mrb[0].mxu0
      %2403 = vmatprep.mubr.f32.mxu0 0.0
      %2404 = vmatmul.mubr.f32.gmra.mrb[0].mxu0 %v2238
      %v2405 = vpop.f32.mrb[0].mxu0
      %v2406 = vadd.f32 0.0, %v2405
      %v2407 = vpop.f32.mrb[0].mxu0
      %2408 = vmatprep.mubr.f32.mxu0 0.0
      %2409 = vmatmul.mubr.f32.gmra.mrb[0].mxu0 %v2241
      %v2410 = vpop.f32.mrb[0].mxu0
      %v2411 = vadd.f32 0.0, %v2410
      %v2412 = vpop.f32.mrb[0].mxu0
      %2413 = vmatprep.mubr.f32.mxu0 0.0
      %2414 = vmatmul.mubr.f32.gmra.mrb[0].mxu0 %v2244
      %v2415 = vpop.f32.mrb[0].mxu0
      %v2416 = vadd.f32 0.0, %v2415
      %v2417 = vpop.f32.mrb[0].mxu0
      %2418 = vmatprep.mubr.f32.mxu0 0.0
      %2419 = vmatmul.mubr.f32.gmra.mrb[0].mxu0 %v2247
      %v2420 = vpop.f32.mrb[0].mxu0
      %v2421 = vadd.f32 0.0, %v2420
      %v2422 = vpop.f32.mrb[0].mxu0
      %2423 = vmatprep.mubr.f32.mxu0 0.0
      %2424 = vmatmul.mubr.f32.gmra.mrb[0].mxu0 %v2250
      %v2425 = vpop.f32.mrb[0].mxu0
      %v2426 = vadd.f32 0.0, %v2425
      %v2427 = vpop.f32.mrb[0].mxu0
      %2428 = vmatprep.mubr.f32.mxu0 0.0
      %2429 = vmatmul.mubr.f32.gmra.mrb[0].mxu0 %v2253
      %v2430 = vpop.f32.mrb[0].mxu0
      %v2431 = vadd.f32 0.0, %v2430
      %v2432 = vpop.f32.mrb[0].mxu0
      %2433 = vmatprep.mubr.f32.mxu0 0.0
      %2434 = vmatmul.mubr.f32.gmra.mrb[0].mxu0 %v2256
      %v2435 = vpop.f32.mrb[0].mxu0
      %v2436 = vadd.f32 0.0, %v2435
      %v2437 = vpop.f32.mrb[0].mxu0
      %2438 = vmatprep.mubr.f32.mxu0 0.0
      %2439 = vmatmul.mubr.f32.gmra.mrb[0].mxu0 %v2259
      %v2440 = vpop.f32.mrb[0].mxu0
      %v2441 = vadd.f32 0.0, %v2440
      %v2442 = vpop.f32.mrb[0].mxu0
      %2443 = vmatprep.mubr.f32.mxu0 0.0
      %2444 = vmatmul.mubr.f32.gmra.mrb[0].mxu0 %v2262
      %v2445 = vpop.f32.mrb[0].mxu0
      %v2446 = vadd.f32 0.0, %v2445
      %v2447 = vpop.f32.mrb[0].mxu0
      %2448 = vmatprep.mubr.f32.mxu0 0.0
      %2449 = vmatmul.mubr.f32.gmra.mrb[0].mxu0 %v2265
      %v2450 = vpop.f32.mrb[0].mxu0
      %v2451 = vadd.f32 0.0, %v2450
      %v2452 = vpop.f32.mrb[0].mxu0
      %2453 = vmatprep.mubr.f32.mxu0 0.0
      %2454 = vmatmul.mubr.f32.gmra.mrb[0].mxu0 %v2268
      %v2455 = vpop.f32.mrb[0].mxu0
      %v2456 = vadd.f32 0.0, %v2455
      %v2457 = vpop.f32.mrb[0].mxu0
      %2458 = vmatprep.mubr.f32.mxu0 0.0
      %2459 = vmatmul.mubr.f32.gmra.mrb[0].mxu0 %v2271
      %v2460 = vpop.f32.mrb[0].mxu0
      %v2461 = vadd.f32 0.0, %v2460
      %v2462 = vpop.f32.mrb[0].mxu0
      %2463 = vmatprep.mubr.f32.mxu0 0.0
      %2464 = vmatmul.mubr.f32.gmra.mrb[0].mxu0 %v2274
      %v2465 = vpop.f32.mrb[0].mxu0
      %v2466 = vadd.f32 0.0, %v2465
      %v2467 = vpop.f32.mrb[0].mxu0
      %2468 = vmatprep.mubr.f32.mxu0 0.0
      %2469 = vmatmul.mubr.f32.gmra.mrb[0].mxu0 %v2277
      %v2470 = vpop.f32.mrb[0].mxu0
      %v2471 = vadd.f32 0.0, %v2470
      %v2472 = vpop.f32.mrb[0].mxu0
      %2473 = vmatprep.mubr.f32.mxu0 0.0
      %2474 = vmatmul.mubr.f32.gmra.mrb[0].mxu0 %v2280
      %v2475 = vpop.f32.mrb[0].mxu0
      %v2476 = vadd.f32 0.0, %v2475
      %v2477 = vpop.f32.mrb[0].mxu0
      %2478 = vmatprep.mubr.f32.mxu0 0.0
      %2479 = vmatmul.mubr.f32.gmra.mrb[0].mxu0 %v2283
      %v2480 = vpop.f32.mrb[0].mxu0
      %v2481 = vadd.f32 0.0, %v2480
      %v2482 = vpop.f32.mrb[0].mxu0
      %2483 = vmatprep.mubr.f32.mxu0 0.0
      %2484 = vmatmul.mubr.f32.gmra.mrb[0].mxu0 %v2286
      %v2485 = vpop.f32.mrb[0].mxu0
      %v2486 = vadd.f32 0.0, %v2485
      %v2487 = vpop.f32.mrb[0].mxu0
      %2488 = vmatprep.mubr.f32.mxu0 0.0
      %2489 = vmatmul.mubr.f32.gmra.mrb[0].mxu0 %v2289
      %v2490 = vpop.f32.mrb[0].mxu0
      %v2491 = vadd.f32 0.0, %v2490
      %v2492 = vpop.f32.mrb[0].mxu0
      %2493 = vmatprep.mubr.f32.mxu0 0.0
      %2494 = vmatmul.mubr.f32.gmra.mrb[0].mxu0 %v2292
      %v2495 = vpop.f32.mrb[0].mxu0
      %v2496 = vadd.f32 0.0, %v2495
      %v2497 = vpop.f32.mrb[0].mxu0
      %2498 = vmatprep.mubr.f32.mxu0 0.0
      %2499 = vmatmul.mubr.f32.gmra.mrb[0].mxu0 %v2295
      %v2500 = vpop.f32.mrb[0].mxu0
      %v2501 = vadd.f32 0.0, %v2500
      %v2502 = vpop.f32.mrb[0].mxu0
      %2503 = vmatprep.mubr.f32.mxu0 0.0
      %2504 = vmatmul.mubr.f32.gmra.mrb[0].mxu0 %v2298
      %v2505 = vpop.f32.mrb[0].mxu0
      %v2506 = vadd.f32 0.0, %v2505
      %v2507 = vpop.f32.mrb[0].mxu0
      %2508 = vmatprep.mubr.f32.mxu0 0.0
      %2509 = vmatmul.mubr.f32.gmra.mrb[0].mxu0 %v2301
      %v2510 = vpop.f32.mrb[0].mxu0
      %v2511 = vadd.f32 0.0, %v2510
      %v2512 = vpop.f32.mrb[0].mxu0
      %2513 = vmatprep.mubr.f32.mxu0 0.0
      %2514 = vmatmul.mubr.f32.gmra.mrb[0].mxu0 %v2304
      %v2515 = vpop.f32.mrb[0].mxu0
      %v2516 = vadd.f32 0.0, %v2515
      %v2517 = vpop.f32.mrb[0].mxu0
      %2518 = vmatprep.mubr.f32.mxu0 0.0
      %2519 = vmatmul.mubr.f32.gmra.mrb[0].mxu0 %v2307
      %v2520 = vpop.f32.mrb[0].mxu0
      %v2521 = vadd.f32 0.0, %v2520
      %v2522 = vpop.f32.mrb[0].mxu0
      %2523 = vmatprep.mubr.f32.mxu0 0.0
      %2524 = vmatmul.mubr.f32.gmra.mrb[0].mxu0 %v2310
      %v2525 = vpop.f32.mrb[0].mxu0
      %v2526 = vadd.f32 0.0, %v2525
      %v2527 = vpop.f32.mrb[0].mxu0
      %2528 = vmatprep.mubr.f32.mxu0 0.0
      %2529 = vmatmul.mubr.f32.gmra.mrb[0].mxu0 %v2313
      %v2530 = vpop.f32.mrb[0].mxu0
      %v2531 = vadd.f32 0.0, %v2530
      %v2532 = vpop.f32.mrb[0].mxu0
      %2533 = vmatprep.mubr.f32.mxu0 0.0
      %2534 = vmatmul.mubr.f32.gmra.mrb[0].mxu0 %v2316
      %v2535 = vpop.f32.mrb[0].mxu0
      %v2536 = vadd.f32 0.0, %v2535
      %v2537 = vpop.f32.mrb[0].mxu0
      %2538 = vmatprep.mubr.f32.mxu0 0.0
      %2539 = vmatmul.mubr.f32.gmra.mrb[0].mxu0 %v2319
      %v2540 = vpop.f32.mrb[0].mxu0
      %v2541 = vadd.f32 0.0, %v2540
      %v2542 = vpop.f32.mrb[0].mxu0
      %2543 = vmatprep.mubr.f32.mxu0 0.0
      %2544 = vmatmul.mubr.f32.gmra.mrb[0].mxu0 %v2322
      %v2545 = vpop.f32.mrb[0].mxu0
      %v2546 = vadd.f32 0.0, %v2545
      %v2547 = vpop.f32.mrb[0].mxu0
      %2548 = vdwg.mxu0
      %v2549 = vadd.f32 %v2162, %v2391
      %v2550 = vadd.f32 %v2163, %v2396
      %v2551 = vadd.f32 %v2164, %v2401
      %v2552 = vadd.f32 %v2165, %v2406
      %v2553 = vadd.f32 %v2166, %v2411
      %v2554 = vadd.f32 %v2167, %v2416
      %v2555 = vadd.f32 %v2168, %v2421
      %v2556 = vadd.f32 %v2169, %v2426
      %v2557 = vadd.f32 %v2170, %v2431
      %v2558 = vadd.f32 %v2171, %v2436
      %v2559 = vadd.f32 %v2172, %v2441
      %v2560 = vadd.f32 %v2173, %v2446
      %v2561 = vadd.f32 %v2174, %v2451
      %v2562 = vadd.f32 %v2175, %v2456
      %v2563 = vadd.f32 %v2176, %v2461
      %v2564 = vadd.f32 %v2177, %v2466
      %v2565 = vadd.f32 %v2178, %v2471
      %v2566 = vadd.f32 %v2179, %v2476
      %v2567 = vadd.f32 %v2180, %v2481
      %v2568 = vadd.f32 %v2181, %v2486
      %v2569 = vadd.f32 %v2182, %v2491
      %v2570 = vadd.f32 %v2183, %v2496
      %v2571 = vadd.f32 %v2184, %v2501
      %v2572 = vadd.f32 %v2185, %v2506
      %v2573 = vadd.f32 %v2186, %v2511
      %v2574 = vadd.f32 %v2187, %v2516
      %v2575 = vadd.f32 %v2188, %v2521
      %v2576 = vadd.f32 %v2189, %v2526
      %v2577 = vadd.f32 %v2190, %v2531
      %v2578 = vadd.f32 %v2191, %v2536
      %v2579 = vadd.f32 %v2192, %v2541
      %v2580 = vadd.f32 %v2193, %v2546
      %s2581 = scalar_lea.vmem %s285, 48
      %v2582 = vld [vmem:[%s2581] sm:$0xff]
      %v2583 = vld [vmem:[%s2581 + $0x8] sm:$0xff]
      %v2584 = vld [vmem:[%s2581 + $0x18] sm:$0xff]
      %v2585 = vld [vmem:[%s2581 + $0x20] sm:$0xff]
      %v2586 = vld [vmem:[%s2581 + $0x30] sm:$0xff]
      %v2587 = vld [vmem:[%s2581 + $0x38] sm:$0xff]
      %v2588 = vld [vmem:[%s2581 + $0x48] sm:$0xff]
      %v2589 = vld [vmem:[%s2581 + $0x50] sm:$0xff]
      %v2590 = vld [vmem:[%s2581 + $0x60] sm:$0xff]
      %v2591 = vld [vmem:[%s2581 + $0x68] sm:$0xff]
      %v2592 = vld [vmem:[%s2581 + $0x78] sm:$0xff]
      %v2593 = vld [vmem:[%s2581 + $0x80] sm:$0xff]
      %v2594 = vld [vmem:[%s2581 + $0x90] sm:$0xff]
      %v2595 = vld [vmem:[%s2581 + $0x98] sm:$0xff]
      %v2596 = vld [vmem:[%s2581 + $0xa8] sm:$0xff]
      %v2597 = vld [vmem:[%s2581 + $0xb0] sm:$0xff]
      %v2598 = vld [vmem:[%s2581 + $0xc0] sm:$0xff]
      %v2599 = vld [vmem:[%s2581 + $0xc8] sm:$0xff]
      %v2600 = vld [vmem:[%s2581 + $0xd8] sm:$0xff]
      %v2601 = vld [vmem:[%s2581 + $0xe0] sm:$0xff]
      %v2602 = vld [vmem:[%s2581 + $0xf0] sm:$0xff]
      %v2603 = vld [vmem:[%s2581 + $0xf8] sm:$0xff]
      %v2604 = vld [vmem:[%s2581 + $0x108] sm:$0xff]
      %v2605 = vld [vmem:[%s2581 + $0x110] sm:$0xff]
      %v2606 = vld [vmem:[%s2581 + $0x120] sm:$0xff]
      %v2607 = vld [vmem:[%s2581 + $0x128] sm:$0xff]
      %v2608 = vld [vmem:[%s2581 + $0x138] sm:$0xff]
      %v2609 = vld [vmem:[%s2581 + $0x140] sm:$0xff]
      %v2610 = vld [vmem:[%s2581 + $0x150] sm:$0xff]
      %v2611 = vld [vmem:[%s2581 + $0x158] sm:$0xff]
      %v2612 = vld [vmem:[%s2581 + $0x168] sm:$0xff]
      %v2613 = vld [vmem:[%s2581 + $0x170] sm:$0xff]
      %s2614 = scalar_lea.vmem %s293, 48
      %v2615 = vld [vmem:[%s2614] sm:$0xff]
      %v2617 = vsel %vm389, %v2582, 0
      %v2620 = vsel %vm389, %v2583, 0
      %v2623 = vsel %vm389, %v2584, 0
      %v2626 = vsel %vm389, %v2585, 0
      %v2629 = vsel %vm389, %v2586, 0
      %v2632 = vsel %vm389, %v2587, 0
      %v2635 = vsel %vm389, %v2588, 0
      %v2638 = vsel %vm389, %v2589, 0
      %v2641 = vsel %vm389, %v2590, 0
      %v2644 = vsel %vm389, %v2591, 0
      %v2647 = vsel %vm389, %v2592, 0
      %v2650 = vsel %vm389, %v2593, 0
      %v2653 = vsel %vm389, %v2594, 0
      %v2656 = vsel %vm389, %v2595, 0
      %v2659 = vsel %vm389, %v2596, 0
      %v2662 = vsel %vm389, %v2597, 0
      %v2665 = vsel %vm389, %v2598, 0
      %v2668 = vsel %vm389, %v2599, 0
      %v2671 = vsel %vm389, %v2600, 0
      %v2674 = vsel %vm389, %v2601, 0
      %v2677 = vsel %vm389, %v2602, 0
      %v2680 = vsel %vm389, %v2603, 0
      %v2683 = vsel %vm389, %v2604, 0
      %v2686 = vsel %vm389, %v2605, 0
      %v2689 = vsel %vm389, %v2606, 0
      %v2692 = vsel %vm389, %v2607, 0
      %v2695 = vsel %vm389, %v2608, 0
      %v2698 = vsel %vm389, %v2609, 0
      %v2701 = vsel %vm389, %v2610, 0
      %v2704 = vsel %vm389, %v2611, 0
      %v2707 = vsel %vm389, %v2612, 0
      %v2710 = vsel %vm389, %v2613, 0
      %2712 = vmatprep.subr.mxu0 0.0
      %2713 = vmatpush1.msra.mxu0 %v2615
      %2714 = vmatprep.subr.mxu0 0.0
      %2715 = vmatpush1.msra.mxu0 0.0
      %2716 = vmatprep.subr.mxu0 0.0
      %2717 = vmatpush1.msra.mxu0 0.0
      %2718 = vmatprep.subr.mxu0 0.0
      %2719 = vmatpush1.msra.mxu0 0.0
      %2720 = vmatprep.subr.mxu0 0.0
      %2721 = vmatpush1.msra.mxu0 0.0
      %2722 = vmatprep.subr.mxu0 0.0
      %2723 = vmatpush1.msra.mxu0 0.0
      %2724 = vmatprep.subr.mxu0 0.0
      %2725 = vmatpush1.msra.mxu0 0.0
      %2726 = vmatprep.subr.mxu0 0.0
      %2727 = vmatpush1.msra.mxu0 0.0
      %2728 = vmatprep.subr.mxu0 0.0
      %2729 = vmatpush1.msra.mxu0 0.0
      %2730 = vmatprep.subr.mxu0 0.0
      %2731 = vmatpush1.msra.mxu0 0.0
      %2732 = vmatprep.subr.mxu0 0.0
      %2733 = vmatpush1.msra.mxu0 0.0
      %2734 = vmatprep.subr.mxu0 0.0
      %2735 = vmatpush1.msra.mxu0 0.0
      %2736 = vmatprep.subr.mxu0 0.0
      %2737 = vmatpush1.msra.mxu0 0.0
      %2738 = vmatprep.subr.mxu0 0.0
      %2739 = vmatpush1.msra.mxu0 0.0
      %2740 = vmatprep.subr.mxu0 0.0
      %2741 = vmatpush1.msra.mxu0 0.0
      %2742 = vmatprep.subr.mxu0 0.0
      %2743 = vmatpush1.msra.mxu0 0.0
      %2744 = vmatprep.subr.mxu0 0.0
      %2745 = vmatpush1.msra.mxu0 0.0
      %2746 = vmatprep.subr.mxu0 0.0
      %2747 = vmatpush1.msra.mxu0 0.0
      %2748 = vmatprep.subr.mxu0 0.0
      %2749 = vmatpush1.msra.mxu0 0.0
      %2750 = vmatprep.subr.mxu0 0.0
      %2751 = vmatpush1.msra.mxu0 0.0
      %2752 = vmatprep.subr.mxu0 0.0
      %2753 = vmatpush1.msra.mxu0 0.0
      %2754 = vmatprep.subr.mxu0 0.0
      %2755 = vmatpush1.msra.mxu0 0.0
      %2756 = vmatprep.subr.mxu0 0.0
      %2757 = vmatpush1.msra.mxu0 0.0
      %2758 = vmatprep.subr.mxu0 0.0
      %2759 = vmatpush1.msra.mxu0 0.0
      %2760 = vmatprep.subr.mxu0 0.0
      %2761 = vmatpush1.msra.mxu0 0.0
      %2762 = vmatprep.subr.mxu0 0.0
      %2763 = vmatpush1.msra.mxu0 0.0
      %2764 = vmatprep.subr.mxu0 0.0
      %2765 = vmatpush1.msra.mxu0 0.0
      %2766 = vmatprep.subr.mxu0 0.0
      %2767 = vmatpush1.msra.mxu0 0.0
      %2768 = vmatprep.subr.mxu0 0.0
      %2769 = vmatpush1.msra.mxu0 0.0
      %2770 = vmatprep.subr.mxu0 0.0
      %2771 = vmatpush1.msra.mxu0 0.0
      %2772 = vmatprep.subr.mxu0 0.0
      %2773 = vmatpush1.msra.mxu0 0.0
      %2774 = vmatprep.subr.mxu0 0.0
      %2775 = vmatpush1.msra.mxu0 0.0
      %2776 = vmatprep.mubr.f32.mxu0 0.0
      %2777 = vmatmul.mubr.f32.gmra.mrb[0].mxu0 %v2617
      %v2778 = vpop.f32.mrb[0].mxu0
      %v2779 = vadd.f32 0.0, %v2778
      %v2780 = vpop.f32.mrb[0].mxu0
      %2781 = vmatprep.mubr.f32.mxu0 0.0
      %2782 = vmatmul.mubr.f32.gmra.mrb[0].mxu0 %v2620
      %v2783 = vpop.f32.mrb[0].mxu0
      %v2784 = vadd.f32 0.0, %v2783
      %v2785 = vpop.f32.mrb[0].mxu0
      %2786 = vmatprep.mubr.f32.mxu0 0.0
      %2787 = vmatmul.mubr.f32.gmra.mrb[0].mxu0 %v2623
      %v2788 = vpop.f32.mrb[0].mxu0
      %v2789 = vadd.f32 0.0, %v2788
      %v2790 = vpop.f32.mrb[0].mxu0
      %2791 = vmatprep.mubr.f32.mxu0 0.0
      %2792 = vmatmul.mubr.f32.gmra.mrb[0].mxu0 %v2626
      %v2793 = vpop.f32.mrb[0].mxu0
      %v2794 = vadd.f32 0.0, %v2793
      %v2795 = vpop.f32.mrb[0].mxu0
      %2796 = vmatprep.mubr.f32.mxu0 0.0
      %2797 = vmatmul.mubr.f32.gmra.mrb[0].mxu0 %v2629
      %v2798 = vpop.f32.mrb[0].mxu0
      %v2799 = vadd.f32 0.0, %v2798
      %v2800 = vpop.f32.mrb[0].mxu0
      %2801 = vmatprep.mubr.f32.mxu0 0.0
      %2802 = vmatmul.mubr.f32.gmra.mrb[0].mxu0 %v2632
      %v2803 = vpop.f32.mrb[0].mxu0
      %v2804 = vadd.f32 0.0, %v2803
      %v2805 = vpop.f32.mrb[0].mxu0
      %2806 = vmatprep.mubr.f32.mxu0 0.0
      %2807 = vmatmul.mubr.f32.gmra.mrb[0].mxu0 %v2635
      %v2808 = vpop.f32.mrb[0].mxu0
      %v2809 = vadd.f32 0.0, %v2808
      %v2810 = vpop.f32.mrb[0].mxu0
      %2811 = vmatprep.mubr.f32.mxu0 0.0
      %2812 = vmatmul.mubr.f32.gmra.mrb[0].mxu0 %v2638
      %v2813 = vpop.f32.mrb[0].mxu0
      %v2814 = vadd.f32 0.0, %v2813
      %v2815 = vpop.f32.mrb[0].mxu0
      %2816 = vmatprep.mubr.f32.mxu0 0.0
      %2817 = vmatmul.mubr.f32.gmra.mrb[0].mxu0 %v2641
      %v2818 = vpop.f32.mrb[0].mxu0
      %v2819 = vadd.f32 0.0, %v2818
      %v2820 = vpop.f32.mrb[0].mxu0
      %2821 = vmatprep.mubr.f32.mxu0 0.0
      %2822 = vmatmul.mubr.f32.gmra.mrb[0].mxu0 %v2644
      %v2823 = vpop.f32.mrb[0].mxu0
      %v2824 = vadd.f32 0.0, %v2823
      %v2825 = vpop.f32.mrb[0].mxu0
      %2826 = vmatprep.mubr.f32.mxu0 0.0
      %2827 = vmatmul.mubr.f32.gmra.mrb[0].mxu0 %v2647
      %v2828 = vpop.f32.mrb[0].mxu0
      %v2829 = vadd.f32 0.0, %v2828
      %v2830 = vpop.f32.mrb[0].mxu0
      %2831 = vmatprep.mubr.f32.mxu0 0.0
      %2832 = vmatmul.mubr.f32.gmra.mrb[0].mxu0 %v2650
      %v2833 = vpop.f32.mrb[0].mxu0
      %v2834 = vadd.f32 0.0, %v2833
      %v2835 = vpop.f32.mrb[0].mxu0
      %2836 = vmatprep.mubr.f32.mxu0 0.0
      %2837 = vmatmul.mubr.f32.gmra.mrb[0].mxu0 %v2653
      %v2838 = vpop.f32.mrb[0].mxu0
      %v2839 = vadd.f32 0.0, %v2838
      %v2840 = vpop.f32.mrb[0].mxu0
      %2841 = vmatprep.mubr.f32.mxu0 0.0
      %2842 = vmatmul.mubr.f32.gmra.mrb[0].mxu0 %v2656
      %v2843 = vpop.f32.mrb[0].mxu0
      %v2844 = vadd.f32 0.0, %v2843
      %v2845 = vpop.f32.mrb[0].mxu0
      %2846 = vmatprep.mubr.f32.mxu0 0.0
      %2847 = vmatmul.mubr.f32.gmra.mrb[0].mxu0 %v2659
      %v2848 = vpop.f32.mrb[0].mxu0
      %v2849 = vadd.f32 0.0, %v2848
      %v2850 = vpop.f32.mrb[0].mxu0
      %2851 = vmatprep.mubr.f32.mxu0 0.0
      %2852 = vmatmul.mubr.f32.gmra.mrb[0].mxu0 %v2662
      %v2853 = vpop.f32.mrb[0].mxu0
      %v2854 = vadd.f32 0.0, %v2853
      %v2855 = vpop.f32.mrb[0].mxu0
      %2856 = vmatprep.mubr.f32.mxu0 0.0
      %2857 = vmatmul.mubr.f32.gmra.mrb[0].mxu0 %v2665
      %v2858 = vpop.f32.mrb[0].mxu0
      %v2859 = vadd.f32 0.0, %v2858
      %v2860 = vpop.f32.mrb[0].mxu0
      %2861 = vmatprep.mubr.f32.mxu0 0.0
      %2862 = vmatmul.mubr.f32.gmra.mrb[0].mxu0 %v2668
      %v2863 = vpop.f32.mrb[0].mxu0
      %v2864 = vadd.f32 0.0, %v2863
      %v2865 = vpop.f32.mrb[0].mxu0
      %2866 = vmatprep.mubr.f32.mxu0 0.0
      %2867 = vmatmul.mubr.f32.gmra.mrb[0].mxu0 %v2671
      %v2868 = vpop.f32.mrb[0].mxu0
      %v2869 = vadd.f32 0.0, %v2868
      %v2870 = vpop.f32.mrb[0].mxu0
      %2871 = vmatprep.mubr.f32.mxu0 0.0
      %2872 = vmatmul.mubr.f32.gmra.mrb[0].mxu0 %v2674
      %v2873 = vpop.f32.mrb[0].mxu0
      %v2874 = vadd.f32 0.0, %v2873
      %v2875 = vpop.f32.mrb[0].mxu0
      %2876 = vmatprep.mubr.f32.mxu0 0.0
      %2877 = vmatmul.mubr.f32.gmra.mrb[0].mxu0 %v2677
      %v2878 = vpop.f32.mrb[0].mxu0
      %v2879 = vadd.f32 0.0, %v2878
      %v2880 = vpop.f32.mrb[0].mxu0
      %2881 = vmatprep.mubr.f32.mxu0 0.0
      %2882 = vmatmul.mubr.f32.gmra.mrb[0].mxu0 %v2680
      %v2883 = vpop.f32.mrb[0].mxu0
      %v2884 = vadd.f32 0.0, %v2883
      %v2885 = vpop.f32.mrb[0].mxu0
      %2886 = vmatprep.mubr.f32.mxu0 0.0
      %2887 = vmatmul.mubr.f32.gmra.mrb[0].mxu0 %v2683
      %v2888 = vpop.f32.mrb[0].mxu0
      %v2889 = vadd.f32 0.0, %v2888
      %v2890 = vpop.f32.mrb[0].mxu0
      %2891 = vmatprep.mubr.f32.mxu0 0.0
      %2892 = vmatmul.mubr.f32.gmra.mrb[0].mxu0 %v2686
      %v2893 = vpop.f32.mrb[0].mxu0
      %v2894 = vadd.f32 0.0, %v2893
      %v2895 = vpop.f32.mrb[0].mxu0
      %2896 = vmatprep.mubr.f32.mxu0 0.0
      %2897 = vmatmul.mubr.f32.gmra.mrb[0].mxu0 %v2689
      %v2898 = vpop.f32.mrb[0].mxu0
      %v2899 = vadd.f32 0.0, %v2898
      %v2900 = vpop.f32.mrb[0].mxu0
      %2901 = vmatprep.mubr.f32.mxu0 0.0
      %2902 = vmatmul.mubr.f32.gmra.mrb[0].mxu0 %v2692
      %v2903 = vpop.f32.mrb[0].mxu0
      %v2904 = vadd.f32 0.0, %v2903
      %v2905 = vpop.f32.mrb[0].mxu0
      %2906 = vmatprep.mubr.f32.mxu0 0.0
      %2907 = vmatmul.mubr.f32.gmra.mrb[0].mxu0 %v2695
      %v2908 = vpop.f32.mrb[0].mxu0
      %v2909 = vadd.f32 0.0, %v2908
      %v2910 = vpop.f32.mrb[0].mxu0
      %2911 = vmatprep.mubr.f32.mxu0 0.0
      %2912 = vmatmul.mubr.f32.gmra.mrb[0].mxu0 %v2698
      %v2913 = vpop.f32.mrb[0].mxu0
      %v2914 = vadd.f32 0.0, %v2913
      %v2915 = vpop.f32.mrb[0].mxu0
      %2916 = vmatprep.mubr.f32.mxu0 0.0
      %2917 = vmatmul.mubr.f32.gmra.mrb[0].mxu0 %v2701
      %v2918 = vpop.f32.mrb[0].mxu0
      %v2919 = vadd.f32 0.0, %v2918
      %v2920 = vpop.f32.mrb[0].mxu0
      %2921 = vmatprep.mubr.f32.mxu0 0.0
      %2922 = vmatmul.mubr.f32.gmra.mrb[0].mxu0 %v2704
      %v2923 = vpop.f32.mrb[0].mxu0
      %v2924 = vadd.f32 0.0, %v2923
      %v2925 = vpop.f32.mrb[0].mxu0
      %2926 = vmatprep.mubr.f32.mxu0 0.0
      %2927 = vmatmul.mubr.f32.gmra.mrb[0].mxu0 %v2707
      %v2928 = vpop.f32.mrb[0].mxu0
      %v2929 = vadd.f32 0.0, %v2928
      %v2930 = vpop.f32.mrb[0].mxu0
      %2931 = vmatprep.mubr.f32.mxu0 0.0
      %2932 = vmatmul.mubr.f32.gmra.mrb[0].mxu0 %v2710
      %v2933 = vpop.f32.mrb[0].mxu0
      %v2934 = vadd.f32 0.0, %v2933
      %v2935 = vpop.f32.mrb[0].mxu0
      %2936 = vdwg.mxu0
      %v2937 = vadd.f32 %v2549, %v2779
      %v2938 = vadd.f32 %v2550, %v2784
      %v2939 = vadd.f32 %v2551, %v2789
      %v2940 = vadd.f32 %v2552, %v2794
      %v2941 = vadd.f32 %v2553, %v2799
      %v2942 = vadd.f32 %v2554, %v2804
      %v2943 = vadd.f32 %v2555, %v2809
      %v2944 = vadd.f32 %v2556, %v2814
      %v2945 = vadd.f32 %v2557, %v2819
      %v2946 = vadd.f32 %v2558, %v2824
      %v2947 = vadd.f32 %v2559, %v2829
      %v2948 = vadd.f32 %v2560, %v2834
      %v2949 = vadd.f32 %v2561, %v2839
      %v2950 = vadd.f32 %v2562, %v2844
      %v2951 = vadd.f32 %v2563, %v2849
      %v2952 = vadd.f32 %v2564, %v2854
      %v2953 = vadd.f32 %v2565, %v2859
      %v2954 = vadd.f32 %v2566, %v2864
      %v2955 = vadd.f32 %v2567, %v2869
      %v2956 = vadd.f32 %v2568, %v2874
      %v2957 = vadd.f32 %v2569, %v2879
      %v2958 = vadd.f32 %v2570, %v2884
      %v2959 = vadd.f32 %v2571, %v2889
      %v2960 = vadd.f32 %v2572, %v2894
      %v2961 = vadd.f32 %v2573, %v2899
      %v2962 = vadd.f32 %v2574, %v2904
      %v2963 = vadd.f32 %v2575, %v2909
      %v2964 = vadd.f32 %v2576, %v2914
      %v2965 = vadd.f32 %v2577, %v2919
      %v2966 = vadd.f32 %v2578, %v2924
      %v2967 = vadd.f32 %v2579, %v2929
      %v2968 = vadd.f32 %v2580, %v2934
      %v2969 = vld [vmem:[%s2581 + $0x1] sm:$0xff]
      %v2970 = vld [vmem:[%s2581 + $0x9] sm:$0xff]
      %v2971 = vld [vmem:[%s2581 + $0x19] sm:$0xff]
      %v2972 = vld [vmem:[%s2581 + $0x21] sm:$0xff]
      %v2973 = vld [vmem:[%s2581 + $0x31] sm:$0xff]
      %v2974 = vld [vmem:[%s2581 + $0x39] sm:$0xff]
      %v2975 = vld [vmem:[%s2581 + $0x49] sm:$0xff]
      %v2976 = vld [vmem:[%s2581 + $0x51] sm:$0xff]
      %v2977 = vld [vmem:[%s2581 + $0x61] sm:$0xff]
      %v2978 = vld [vmem:[%s2581 + $0x69] sm:$0xff]
      %v2979 = vld [vmem:[%s2581 + $0x79] sm:$0xff]
      %v2980 = vld [vmem:[%s2581 + $0x81] sm:$0xff]
      %v2981 = vld [vmem:[%s2581 + $0x91] sm:$0xff]
      %v2982 = vld [vmem:[%s2581 + $0x99] sm:$0xff]
      %v2983 = vld [vmem:[%s2581 + $0xa9] sm:$0xff]
      %v2984 = vld [vmem:[%s2581 + $0xb1] sm:$0xff]
      %v2985 = vld [vmem:[%s2581 + $0xc1] sm:$0xff]
      %v2986 = vld [vmem:[%s2581 + $0xc9] sm:$0xff]
      %v2987 = vld [vmem:[%s2581 + $0xd9] sm:$0xff]
      %v2988 = vld [vmem:[%s2581 + $0xe1] sm:$0xff]
      %v2989 = vld [vmem:[%s2581 + $0xf1] sm:$0xff]
      %v2990 = vld [vmem:[%s2581 + $0xf9] sm:$0xff]
      %v2991 = vld [vmem:[%s2581 + $0x109] sm:$0xff]
      %v2992 = vld [vmem:[%s2581 + $0x111] sm:$0xff]
      %v2993 = vld [vmem:[%s2581 + $0x121] sm:$0xff]
      %v2994 = vld [vmem:[%s2581 + $0x129] sm:$0xff]
      %v2995 = vld [vmem:[%s2581 + $0x139] sm:$0xff]
      %v2996 = vld [vmem:[%s2581 + $0x141] sm:$0xff]
      %v2997 = vld [vmem:[%s2581 + $0x151] sm:$0xff]
      %v2998 = vld [vmem:[%s2581 + $0x159] sm:$0xff]
      %v2999 = vld [vmem:[%s2581 + $0x169] sm:$0xff]
      %v3000 = vld [vmem:[%s2581 + $0x171] sm:$0xff]
      %s3001 = scalar_lea.vmem %s293, 56
      %v3002 = vld [vmem:[%s3001] sm:$0xff]
      %v3004 = vsel %vm389, %v2969, 0
      %v3007 = vsel %vm389, %v2970, 0
      %v3010 = vsel %vm389, %v2971, 0
      %v3013 = vsel %vm389, %v2972, 0
      %v3016 = vsel %vm389, %v2973, 0
      %v3019 = vsel %vm389, %v2974, 0
      %v3022 = vsel %vm389, %v2975, 0
      %v3025 = vsel %vm389, %v2976, 0
      %v3028 = vsel %vm389, %v2977, 0
      %v3031 = vsel %vm389, %v2978, 0
      %v3034 = vsel %vm389, %v2979, 0
      %v3037 = vsel %vm389, %v2980, 0
      %v3040 = vsel %vm389, %v2981, 0
      %v3043 = vsel %vm389, %v2982, 0
      %v3046 = vsel %vm389, %v2983, 0
      %v3049 = vsel %vm389, %v2984, 0
      %v3052 = vsel %vm389, %v2985, 0
      %v3055 = vsel %vm389, %v2986, 0
      %v3058 = vsel %vm389, %v2987, 0
      %v3061 = vsel %vm389, %v2988, 0
      %v3064 = vsel %vm389, %v2989, 0
      %v3067 = vsel %vm389, %v2990, 0
      %v3070 = vsel %vm389, %v2991, 0
      %v3073 = vsel %vm389, %v2992, 0
      %v3076 = vsel %vm389, %v2993, 0
      %v3079 = vsel %vm389, %v2994, 0
      %v3082 = vsel %vm389, %v2995, 0
      %v3085 = vsel %vm389, %v2996, 0
      %v3088 = vsel %vm389, %v2997, 0
      %v3091 = vsel %vm389, %v2998, 0
      %v3094 = vsel %vm389, %v2999, 0
      %v3097 = vsel %vm389, %v3000, 0
      %3099 = vmatprep.subr.mxu0 0.0
      %3100 = vmatpush1.msra.mxu0 %v3002
      %3101 = vmatprep.subr.mxu0 0.0
      %3102 = vmatpush1.msra.mxu0 0.0
      %3103 = vmatprep.subr.mxu0 0.0
      %3104 = vmatpush1.msra.mxu0 0.0
      %3105 = vmatprep.subr.mxu0 0.0
      %3106 = vmatpush1.msra.mxu0 0.0
      %3107 = vmatprep.subr.mxu0 0.0
      %3108 = vmatpush1.msra.mxu0 0.0
      %3109 = vmatprep.subr.mxu0 0.0
      %3110 = vmatpush1.msra.mxu0 0.0
      %3111 = vmatprep.subr.mxu0 0.0
      %3112 = vmatpush1.msra.mxu0 0.0
      %3113 = vmatprep.subr.mxu0 0.0
      %3114 = vmatpush1.msra.mxu0 0.0
      %3115 = vmatprep.subr.mxu0 0.0
      %3116 = vmatpush1.msra.mxu0 0.0
      %3117 = vmatprep.subr.mxu0 0.0
      %3118 = vmatpush1.msra.mxu0 0.0
      %3119 = vmatprep.subr.mxu0 0.0
      %3120 = vmatpush1.msra.mxu0 0.0
      %3121 = vmatprep.subr.mxu0 0.0
      %3122 = vmatpush1.msra.mxu0 0.0
      %3123 = vmatprep.subr.mxu0 0.0
      %3124 = vmatpush1.msra.mxu0 0.0
      %3125 = vmatprep.subr.mxu0 0.0
      %3126 = vmatpush1.msra.mxu0 0.0
      %3127 = vmatprep.subr.mxu0 0.0
      %3128 = vmatpush1.msra.mxu0 0.0
      %3129 = vmatprep.subr.mxu0 0.0
      %3130 = vmatpush1.msra.mxu0 0.0
      %3131 = vmatprep.subr.mxu0 0.0
      %3132 = vmatpush1.msra.mxu0 0.0
      %3133 = vmatprep.subr.mxu0 0.0
      %3134 = vmatpush1.msra.mxu0 0.0
      %3135 = vmatprep.subr.mxu0 0.0
      %3136 = vmatpush1.msra.mxu0 0.0
      %3137 = vmatprep.subr.mxu0 0.0
      %3138 = vmatpush1.msra.mxu0 0.0
      %3139 = vmatprep.subr.mxu0 0.0
      %3140 = vmatpush1.msra.mxu0 0.0
      %3141 = vmatprep.subr.mxu0 0.0
      %3142 = vmatpush1.msra.mxu0 0.0
      %3143 = vmatprep.subr.mxu0 0.0
      %3144 = vmatpush1.msra.mxu0 0.0
      %3145 = vmatprep.subr.mxu0 0.0
      %3146 = vmatpush1.msra.mxu0 0.0
      %3147 = vmatprep.subr.mxu0 0.0
      %3148 = vmatpush1.msra.mxu0 0.0
      %3149 = vmatprep.subr.mxu0 0.0
      %3150 = vmatpush1.msra.mxu0 0.0
      %3151 = vmatprep.subr.mxu0 0.0
      %3152 = vmatpush1.msra.mxu0 0.0
      %3153 = vmatprep.subr.mxu0 0.0
      %3154 = vmatpush1.msra.mxu0 0.0
      %3155 = vmatprep.subr.mxu0 0.0
      %3156 = vmatpush1.msra.mxu0 0.0
      %3157 = vmatprep.subr.mxu0 0.0
      %3158 = vmatpush1.msra.mxu0 0.0
      %3159 = vmatprep.subr.mxu0 0.0
      %3160 = vmatpush1.msra.mxu0 0.0
      %3161 = vmatprep.subr.mxu0 0.0
      %3162 = vmatpush1.msra.mxu0 0.0
      %3163 = vmatprep.mubr.f32.mxu0 0.0
      %3164 = vmatmul.mubr.f32.gmra.mrb[0].mxu0 %v3004
      %v3165 = vpop.f32.mrb[0].mxu0
      %v3166 = vadd.f32 0.0, %v3165
      %v3167 = vpop.f32.mrb[0].mxu0
      %3168 = vmatprep.mubr.f32.mxu0 0.0
      %3169 = vmatmul.mubr.f32.gmra.mrb[0].mxu0 %v3007
      %v3170 = vpop.f32.mrb[0].mxu0
      %v3171 = vadd.f32 0.0, %v3170
      %v3172 = vpop.f32.mrb[0].mxu0
      %3173 = vmatprep.mubr.f32.mxu0 0.0
      %3174 = vmatmul.mubr.f32.gmra.mrb[0].mxu0 %v3010
      %v3175 = vpop.f32.mrb[0].mxu0
      %v3176 = vadd.f32 0.0, %v3175
      %v3177 = vpop.f32.mrb[0].mxu0
      %3178 = vmatprep.mubr.f32.mxu0 0.0
      %3179 = vmatmul.mubr.f32.gmra.mrb[0].mxu0 %v3013
      %v3180 = vpop.f32.mrb[0].mxu0
      %v3181 = vadd.f32 0.0, %v3180
      %v3182 = vpop.f32.mrb[0].mxu0
      %3183 = vmatprep.mubr.f32.mxu0 0.0
      %3184 = vmatmul.mubr.f32.gmra.mrb[0].mxu0 %v3016
      %v3185 = vpop.f32.mrb[0].mxu0
      %v3186 = vadd.f32 0.0, %v3185
      %v3187 = vpop.f32.mrb[0].mxu0
      %3188 = vmatprep.mubr.f32.mxu0 0.0
      %3189 = vmatmul.mubr.f32.gmra.mrb[0].mxu0 %v3019
      %v3190 = vpop.f32.mrb[0].mxu0
      %v3191 = vadd.f32 0.0, %v3190
      %v3192 = vpop.f32.mrb[0].mxu0
      %3193 = vmatprep.mubr.f32.mxu0 0.0
      %3194 = vmatmul.mubr.f32.gmra.mrb[0].mxu0 %v3022
      %v3195 = vpop.f32.mrb[0].mxu0
      %v3196 = vadd.f32 0.0, %v3195
      %v3197 = vpop.f32.mrb[0].mxu0
      %3198 = vmatprep.mubr.f32.mxu0 0.0
      %3199 = vmatmul.mubr.f32.gmra.mrb[0].mxu0 %v3025
      %v3200 = vpop.f32.mrb[0].mxu0
      %v3201 = vadd.f32 0.0, %v3200
      %v3202 = vpop.f32.mrb[0].mxu0
      %3203 = vmatprep.mubr.f32.mxu0 0.0
      %3204 = vmatmul.mubr.f32.gmra.mrb[0].mxu0 %v3028
      %v3205 = vpop.f32.mrb[0].mxu0
      %v3206 = vadd.f32 0.0, %v3205
      %v3207 = vpop.f32.mrb[0].mxu0
      %3208 = vmatprep.mubr.f32.mxu0 0.0
      %3209 = vmatmul.mubr.f32.gmra.mrb[0].mxu0 %v3031
      %v3210 = vpop.f32.mrb[0].mxu0
      %v3211 = vadd.f32 0.0, %v3210
      %v3212 = vpop.f32.mrb[0].mxu0
      %3213 = vmatprep.mubr.f32.mxu0 0.0
      %3214 = vmatmul.mubr.f32.gmra.mrb[0].mxu0 %v3034
      %v3215 = vpop.f32.mrb[0].mxu0
      %v3216 = vadd.f32 0.0, %v3215
      %v3217 = vpop.f32.mrb[0].mxu0
      %3218 = vmatprep.mubr.f32.mxu0 0.0
      %3219 = vmatmul.mubr.f32.gmra.mrb[0].mxu0 %v3037
      %v3220 = vpop.f32.mrb[0].mxu0
      %v3221 = vadd.f32 0.0, %v3220
      %v3222 = vpop.f32.mrb[0].mxu0
      %3223 = vmatprep.mubr.f32.mxu0 0.0
      %3224 = vmatmul.mubr.f32.gmra.mrb[0].mxu0 %v3040
      %v3225 = vpop.f32.mrb[0].mxu0
      %v3226 = vadd.f32 0.0, %v3225
      %v3227 = vpop.f32.mrb[0].mxu0
      %3228 = vmatprep.mubr.f32.mxu0 0.0
      %3229 = vmatmul.mubr.f32.gmra.mrb[0].mxu0 %v3043
      %v3230 = vpop.f32.mrb[0].mxu0
      %v3231 = vadd.f32 0.0, %v3230
      %v3232 = vpop.f32.mrb[0].mxu0
      %3233 = vmatprep.mubr.f32.mxu0 0.0
      %3234 = vmatmul.mubr.f32.gmra.mrb[0].mxu0 %v3046
      %v3235 = vpop.f32.mrb[0].mxu0
      %v3236 = vadd.f32 0.0, %v3235
      %v3237 = vpop.f32.mrb[0].mxu0
      %3238 = vmatprep.mubr.f32.mxu0 0.0
      %3239 = vmatmul.mubr.f32.gmra.mrb[0].mxu0 %v3049
      %v3240 = vpop.f32.mrb[0].mxu0
      %v3241 = vadd.f32 0.0, %v3240
      %v3242 = vpop.f32.mrb[0].mxu0
      %3243 = vmatprep.mubr.f32.mxu0 0.0
      %3244 = vmatmul.mubr.f32.gmra.mrb[0].mxu0 %v3052
      %v3245 = vpop.f32.mrb[0].mxu0
      %v3246 = vadd.f32 0.0, %v3245
      %v3247 = vpop.f32.mrb[0].mxu0
      %3248 = vmatprep.mubr.f32.mxu0 0.0
      %3249 = vmatmul.mubr.f32.gmra.mrb[0].mxu0 %v3055
      %v3250 = vpop.f32.mrb[0].mxu0
      %v3251 = vadd.f32 0.0, %v3250
      %v3252 = vpop.f32.mrb[0].mxu0
      %3253 = vmatprep.mubr.f32.mxu0 0.0
      %3254 = vmatmul.mubr.f32.gmra.mrb[0].mxu0 %v3058
      %v3255 = vpop.f32.mrb[0].mxu0
      %v3256 = vadd.f32 0.0, %v3255
      %v3257 = vpop.f32.mrb[0].mxu0
      %3258 = vmatprep.mubr.f32.mxu0 0.0
      %3259 = vmatmul.mubr.f32.gmra.mrb[0].mxu0 %v3061
      %v3260 = vpop.f32.mrb[0].mxu0
      %v3261 = vadd.f32 0.0, %v3260
      %v3262 = vpop.f32.mrb[0].mxu0
      %3263 = vmatprep.mubr.f32.mxu0 0.0
      %3264 = vmatmul.mubr.f32.gmra.mrb[0].mxu0 %v3064
      %v3265 = vpop.f32.mrb[0].mxu0
      %v3266 = vadd.f32 0.0, %v3265
      %v3267 = vpop.f32.mrb[0].mxu0
      %3268 = vmatprep.mubr.f32.mxu0 0.0
      %3269 = vmatmul.mubr.f32.gmra.mrb[0].mxu0 %v3067
      %v3270 = vpop.f32.mrb[0].mxu0
      %v3271 = vadd.f32 0.0, %v3270
      %v3272 = vpop.f32.mrb[0].mxu0
      %3273 = vmatprep.mubr.f32.mxu0 0.0
      %3274 = vmatmul.mubr.f32.gmra.mrb[0].mxu0 %v3070
      %v3275 = vpop.f32.mrb[0].mxu0
      %v3276 = vadd.f32 0.0, %v3275
      %v3277 = vpop.f32.mrb[0].mxu0
      %3278 = vmatprep.mubr.f32.mxu0 0.0
      %3279 = vmatmul.mubr.f32.gmra.mrb[0].mxu0 %v3073
      %v3280 = vpop.f32.mrb[0].mxu0
      %v3281 = vadd.f32 0.0, %v3280
      %v3282 = vpop.f32.mrb[0].mxu0
      %3283 = vmatprep.mubr.f32.mxu0 0.0
      %3284 = vmatmul.mubr.f32.gmra.mrb[0].mxu0 %v3076
      %v3285 = vpop.f32.mrb[0].mxu0
      %v3286 = vadd.f32 0.0, %v3285
      %v3287 = vpop.f32.mrb[0].mxu0
      %3288 = vmatprep.mubr.f32.mxu0 0.0
      %3289 = vmatmul.mubr.f32.gmra.mrb[0].mxu0 %v3079
      %v3290 = vpop.f32.mrb[0].mxu0
      %v3291 = vadd.f32 0.0, %v3290
      %v3292 = vpop.f32.mrb[0].mxu0
      %3293 = vmatprep.mubr.f32.mxu0 0.0
      %3294 = vmatmul.mubr.f32.gmra.mrb[0].mxu0 %v3082
      %v3295 = vpop.f32.mrb[0].mxu0
      %v3296 = vadd.f32 0.0, %v3295
      %v3297 = vpop.f32.mrb[0].mxu0
      %3298 = vmatprep.mubr.f32.mxu0 0.0
      %3299 = vmatmul.mubr.f32.gmra.mrb[0].mxu0 %v3085
      %v3300 = vpop.f32.mrb[0].mxu0
      %v3301 = vadd.f32 0.0, %v3300
      %v3302 = vpop.f32.mrb[0].mxu0
      %3303 = vmatprep.mubr.f32.mxu0 0.0
      %3304 = vmatmul.mubr.f32.gmra.mrb[0].mxu0 %v3088
      %v3305 = vpop.f32.mrb[0].mxu0
      %v3306 = vadd.f32 0.0, %v3305
      %v3307 = vpop.f32.mrb[0].mxu0
      %3308 = vmatprep.mubr.f32.mxu0 0.0
      %3309 = vmatmul.mubr.f32.gmra.mrb[0].mxu0 %v3091
      %v3310 = vpop.f32.mrb[0].mxu0
      %v3311 = vadd.f32 0.0, %v3310
      %v3312 = vpop.f32.mrb[0].mxu0
      %3313 = vmatprep.mubr.f32.mxu0 0.0
      %3314 = vmatmul.mubr.f32.gmra.mrb[0].mxu0 %v3094
      %v3315 = vpop.f32.mrb[0].mxu0
      %v3316 = vadd.f32 0.0, %v3315
      %v3317 = vpop.f32.mrb[0].mxu0
      %3318 = vmatprep.mubr.f32.mxu0 0.0
      %3319 = vmatmul.mubr.f32.gmra.mrb[0].mxu0 %v3097
      %v3320 = vpop.f32.mrb[0].mxu0
      %v3321 = vadd.f32 0.0, %v3320
      %v3322 = vpop.f32.mrb[0].mxu0
      %3323 = vdwg.mxu0
      %v3324 = vadd.f32 %v2937, %v3166
      %v3325 = vadd.f32 %v2938, %v3171
      %v3326 = vadd.f32 %v2939, %v3176
      %v3327 = vadd.f32 %v2940, %v3181
      %v3328 = vadd.f32 %v2941, %v3186
      %v3329 = vadd.f32 %v2942, %v3191
      %v3330 = vadd.f32 %v2943, %v3196
      %v3331 = vadd.f32 %v2944, %v3201
      %v3332 = vadd.f32 %v2945, %v3206
      %v3333 = vadd.f32 %v2946, %v3211
      %v3334 = vadd.f32 %v2947, %v3216
      %v3335 = vadd.f32 %v2948, %v3221
      %v3336 = vadd.f32 %v2949, %v3226
      %v3337 = vadd.f32 %v2950, %v3231
      %v3338 = vadd.f32 %v2951, %v3236
      %v3339 = vadd.f32 %v2952, %v3241
      %v3340 = vadd.f32 %v2953, %v3246
      %v3341 = vadd.f32 %v2954, %v3251
      %v3342 = vadd.f32 %v2955, %v3256
      %v3343 = vadd.f32 %v2956, %v3261
      %v3344 = vadd.f32 %v2957, %v3266
      %v3345 = vadd.f32 %v2958, %v3271
      %v3346 = vadd.f32 %v2959, %v3276
      %v3347 = vadd.f32 %v2960, %v3281
      %v3348 = vadd.f32 %v2961, %v3286
      %v3349 = vadd.f32 %v2962, %v3291
      %v3350 = vadd.f32 %v2963, %v3296
      %v3351 = vadd.f32 %v2964, %v3301
      %v3352 = vadd.f32 %v2965, %v3306
      %v3353 = vadd.f32 %v2966, %v3311
      %v3354 = vadd.f32 %v2967, %v3316
      %v3355 = vadd.f32 %v2968, %v3321
      %v3356 = vld [vmem:[%s2581 + $0x2] sm:$0xff]
      %v3357 = vld [vmem:[%s2581 + $0xa] sm:$0xff]
      %v3358 = vld [vmem:[%s2581 + $0x1a] sm:$0xff]
      %v3359 = vld [vmem:[%s2581 + $0x22] sm:$0xff]
      %v3360 = vld [vmem:[%s2581 + $0x32] sm:$0xff]
      %v3361 = vld [vmem:[%s2581 + $0x3a] sm:$0xff]
      %v3362 = vld [vmem:[%s2581 + $0x4a] sm:$0xff]
      %v3363 = vld [vmem:[%s2581 + $0x52] sm:$0xff]
      %v3364 = vld [vmem:[%s2581 + $0x62] sm:$0xff]
      %v3365 = vld [vmem:[%s2581 + $0x6a] sm:$0xff]
      %v3366 = vld [vmem:[%s2581 + $0x7a] sm:$0xff]
      %v3367 = vld [vmem:[%s2581 + $0x82] sm:$0xff]
      %v3368 = vld [vmem:[%s2581 + $0x92] sm:$0xff]
      %v3369 = vld [vmem:[%s2581 + $0x9a] sm:$0xff]
      %v3370 = vld [vmem:[%s2581 + $0xaa] sm:$0xff]
      %v3371 = vld [vmem:[%s2581 + $0xb2] sm:$0xff]
      %v3372 = vld [vmem:[%s2581 + $0xc2] sm:$0xff]
      %v3373 = vld [vmem:[%s2581 + $0xca] sm:$0xff]
      %v3374 = vld [vmem:[%s2581 + $0xda] sm:$0xff]
      %v3375 = vld [vmem:[%s2581 + $0xe2] sm:$0xff]
      %v3376 = vld [vmem:[%s2581 + $0xf2] sm:$0xff]
      %v3377 = vld [vmem:[%s2581 + $0xfa] sm:$0xff]
      %v3378 = vld [vmem:[%s2581 + $0x10a] sm:$0xff]
      %v3379 = vld [vmem:[%s2581 + $0x112] sm:$0xff]
      %v3380 = vld [vmem:[%s2581 + $0x122] sm:$0xff]
      %v3381 = vld [vmem:[%s2581 + $0x12a] sm:$0xff]
      %v3382 = vld [vmem:[%s2581 + $0x13a] sm:$0xff]
      %v3383 = vld [vmem:[%s2581 + $0x142] sm:$0xff]
      %v3384 = vld [vmem:[%s2581 + $0x152] sm:$0xff]
      %v3385 = vld [vmem:[%s2581 + $0x15a] sm:$0xff]
      %v3386 = vld [vmem:[%s2581 + $0x16a] sm:$0xff]
      %v3387 = vld [vmem:[%s2581 + $0x172] sm:$0xff]
      %s3388 = scalar_lea.vmem %s293, 64
      %v3389 = vld [vmem:[%s3388] sm:$0xff]
      %v3391 = vsel %vm389, %v3356, 0
      %v3394 = vsel %vm389, %v3357, 0
      %v3397 = vsel %vm389, %v3358, 0
      %v3400 = vsel %vm389, %v3359, 0
      %v3403 = vsel %vm389, %v3360, 0
      %v3406 = vsel %vm389, %v3361, 0
      %v3409 = vsel %vm389, %v3362, 0
      %v3412 = vsel %vm389, %v3363, 0
      %v3415 = vsel %vm389, %v3364, 0
      %v3418 = vsel %vm389, %v3365, 0
      %v3421 = vsel %vm389, %v3366, 0
      %v3424 = vsel %vm389, %v3367, 0
      %v3427 = vsel %vm389, %v3368, 0
      %v3430 = vsel %vm389, %v3369, 0
      %v3433 = vsel %vm389, %v3370, 0
      %v3436 = vsel %vm389, %v3371, 0
      %v3439 = vsel %vm389, %v3372, 0
      %v3442 = vsel %vm389, %v3373, 0
      %v3445 = vsel %vm389, %v3374, 0
      %v3448 = vsel %vm389, %v3375, 0
      %v3451 = vsel %vm389, %v3376, 0
      %v3454 = vsel %vm389, %v3377, 0
      %v3457 = vsel %vm389, %v3378, 0
      %v3460 = vsel %vm389, %v3379, 0
      %v3463 = vsel %vm389, %v3380, 0
      %v3466 = vsel %vm389, %v3381, 0
      %v3469 = vsel %vm389, %v3382, 0
      %v3472 = vsel %vm389, %v3383, 0
      %v3475 = vsel %vm389, %v3384, 0
      %v3478 = vsel %vm389, %v3385, 0
      %v3481 = vsel %vm389, %v3386, 0
      %v3484 = vsel %vm389, %v3387, 0
      %3486 = vmatprep.subr.mxu0 0.0
      %3487 = vmatpush1.msra.mxu0 %v3389
      %3488 = vmatprep.subr.mxu0 0.0
      %3489 = vmatpush1.msra.mxu0 0.0
      %3490 = vmatprep.subr.mxu0 0.0
      %3491 = vmatpush1.msra.mxu0 0.0
      %3492 = vmatprep.subr.mxu0 0.0
      %3493 = vmatpush1.msra.mxu0 0.0
      %3494 = vmatprep.subr.mxu0 0.0
      %3495 = vmatpush1.msra.mxu0 0.0
      %3496 = vmatprep.subr.mxu0 0.0
      %3497 = vmatpush1.msra.mxu0 0.0
      %3498 = vmatprep.subr.mxu0 0.0
      %3499 = vmatpush1.msra.mxu0 0.0
      %3500 = vmatprep.subr.mxu0 0.0
      %3501 = vmatpush1.msra.mxu0 0.0
      %3502 = vmatprep.subr.mxu0 0.0
      %3503 = vmatpush1.msra.mxu0 0.0
      %3504 = vmatprep.subr.mxu0 0.0
      %3505 = vmatpush1.msra.mxu0 0.0
      %3506 = vmatprep.subr.mxu0 0.0
      %3507 = vmatpush1.msra.mxu0 0.0
      %3508 = vmatprep.subr.mxu0 0.0
      %3509 = vmatpush1.msra.mxu0 0.0
      %3510 = vmatprep.subr.mxu0 0.0
      %3511 = vmatpush1.msra.mxu0 0.0
      %3512 = vmatprep.subr.mxu0 0.0
      %3513 = vmatpush1.msra.mxu0 0.0
      %3514 = vmatprep.subr.mxu0 0.0
      %3515 = vmatpush1.msra.mxu0 0.0
      %3516 = vmatprep.subr.mxu0 0.0
      %3517 = vmatpush1.msra.mxu0 0.0
      %3518 = vmatprep.subr.mxu0 0.0
      %3519 = vmatpush1.msra.mxu0 0.0
      %3520 = vmatprep.subr.mxu0 0.0
      %3521 = vmatpush1.msra.mxu0 0.0
      %3522 = vmatprep.subr.mxu0 0.0
      %3523 = vmatpush1.msra.mxu0 0.0
      %3524 = vmatprep.subr.mxu0 0.0
      %3525 = vmatpush1.msra.mxu0 0.0
      %3526 = vmatprep.subr.mxu0 0.0
      %3527 = vmatpush1.msra.mxu0 0.0
      %3528 = vmatprep.subr.mxu0 0.0
      %3529 = vmatpush1.msra.mxu0 0.0
      %3530 = vmatprep.subr.mxu0 0.0
      %3531 = vmatpush1.msra.mxu0 0.0
      %3532 = vmatprep.subr.mxu0 0.0
      %3533 = vmatpush1.msra.mxu0 0.0
      %3534 = vmatprep.subr.mxu0 0.0
      %3535 = vmatpush1.msra.mxu0 0.0
      %3536 = vmatprep.subr.mxu0 0.0
      %3537 = vmatpush1.msra.mxu0 0.0
      %3538 = vmatprep.subr.mxu0 0.0
      %3539 = vmatpush1.msra.mxu0 0.0
      %3540 = vmatprep.subr.mxu0 0.0
      %3541 = vmatpush1.msra.mxu0 0.0
      %3542 = vmatprep.subr.mxu0 0.0
      %3543 = vmatpush1.msra.mxu0 0.0
      %3544 = vmatprep.subr.mxu0 0.0
      %3545 = vmatpush1.msra.mxu0 0.0
      %3546 = vmatprep.subr.mxu0 0.0
      %3547 = vmatpush1.msra.mxu0 0.0
      %3548 = vmatprep.subr.mxu0 0.0
      %3549 = vmatpush1.msra.mxu0 0.0
      %3550 = vmatprep.mubr.f32.mxu0 0.0
      %3551 = vmatmul.mubr.f32.gmra.mrb[0].mxu0 %v3391
      %v3552 = vpop.f32.mrb[0].mxu0
      %v3553 = vadd.f32 0.0, %v3552
      %v3554 = vpop.f32.mrb[0].mxu0
      %3555 = vmatprep.mubr.f32.mxu0 0.0
      %3556 = vmatmul.mubr.f32.gmra.mrb[0].mxu0 %v3394
      %v3557 = vpop.f32.mrb[0].mxu0
      %v3558 = vadd.f32 0.0, %v3557
      %v3559 = vpop.f32.mrb[0].mxu0
      %3560 = vmatprep.mubr.f32.mxu0 0.0
      %3561 = vmatmul.mubr.f32.gmra.mrb[0].mxu0 %v3397
      %v3562 = vpop.f32.mrb[0].mxu0
      %v3563 = vadd.f32 0.0, %v3562
      %v3564 = vpop.f32.mrb[0].mxu0
      %3565 = vmatprep.mubr.f32.mxu0 0.0
      %3566 = vmatmul.mubr.f32.gmra.mrb[0].mxu0 %v3400
      %v3567 = vpop.f32.mrb[0].mxu0
      %v3568 = vadd.f32 0.0, %v3567
      %v3569 = vpop.f32.mrb[0].mxu0
      %3570 = vmatprep.mubr.f32.mxu0 0.0
      %3571 = vmatmul.mubr.f32.gmra.mrb[0].mxu0 %v3403
      %v3572 = vpop.f32.mrb[0].mxu0
      %v3573 = vadd.f32 0.0, %v3572
      %v3574 = vpop.f32.mrb[0].mxu0
      %3575 = vmatprep.mubr.f32.mxu0 0.0
      %3576 = vmatmul.mubr.f32.gmra.mrb[0].mxu0 %v3406
      %v3577 = vpop.f32.mrb[0].mxu0
      %v3578 = vadd.f32 0.0, %v3577
      %v3579 = vpop.f32.mrb[0].mxu0
      %3580 = vmatprep.mubr.f32.mxu0 0.0
      %3581 = vmatmul.mubr.f32.gmra.mrb[0].mxu0 %v3409
      %v3582 = vpop.f32.mrb[0].mxu0
      %v3583 = vadd.f32 0.0, %v3582
      %v3584 = vpop.f32.mrb[0].mxu0
      %3585 = vmatprep.mubr.f32.mxu0 0.0
      %3586 = vmatmul.mubr.f32.gmra.mrb[0].mxu0 %v3412
      %v3587 = vpop.f32.mrb[0].mxu0
      %v3588 = vadd.f32 0.0, %v3587
      %v3589 = vpop.f32.mrb[0].mxu0
      %3590 = vmatprep.mubr.f32.mxu0 0.0
      %3591 = vmatmul.mubr.f32.gmra.mrb[0].mxu0 %v3415
      %v3592 = vpop.f32.mrb[0].mxu0
      %v3593 = vadd.f32 0.0, %v3592
      %v3594 = vpop.f32.mrb[0].mxu0
      %3595 = vmatprep.mubr.f32.mxu0 0.0
      %3596 = vmatmul.mubr.f32.gmra.mrb[0].mxu0 %v3418
      %v3597 = vpop.f32.mrb[0].mxu0
      %v3598 = vadd.f32 0.0, %v3597
      %v3599 = vpop.f32.mrb[0].mxu0
      %3600 = vmatprep.mubr.f32.mxu0 0.0
      %3601 = vmatmul.mubr.f32.gmra.mrb[0].mxu0 %v3421
      %v3602 = vpop.f32.mrb[0].mxu0
      %v3603 = vadd.f32 0.0, %v3602
      %v3604 = vpop.f32.mrb[0].mxu0
      %3605 = vmatprep.mubr.f32.mxu0 0.0
      %3606 = vmatmul.mubr.f32.gmra.mrb[0].mxu0 %v3424
      %v3607 = vpop.f32.mrb[0].mxu0
      %v3608 = vadd.f32 0.0, %v3607
      %v3609 = vpop.f32.mrb[0].mxu0
      %3610 = vmatprep.mubr.f32.mxu0 0.0
      %3611 = vmatmul.mubr.f32.gmra.mrb[0].mxu0 %v3427
      %v3612 = vpop.f32.mrb[0].mxu0
      %v3613 = vadd.f32 0.0, %v3612
      %v3614 = vpop.f32.mrb[0].mxu0
      %3615 = vmatprep.mubr.f32.mxu0 0.0
      %3616 = vmatmul.mubr.f32.gmra.mrb[0].mxu0 %v3430
      %v3617 = vpop.f32.mrb[0].mxu0
      %v3618 = vadd.f32 0.0, %v3617
      %v3619 = vpop.f32.mrb[0].mxu0
      %3620 = vmatprep.mubr.f32.mxu0 0.0
      %3621 = vmatmul.mubr.f32.gmra.mrb[0].mxu0 %v3433
      %v3622 = vpop.f32.mrb[0].mxu0
      %v3623 = vadd.f32 0.0, %v3622
      %v3624 = vpop.f32.mrb[0].mxu0
      %3625 = vmatprep.mubr.f32.mxu0 0.0
      %3626 = vmatmul.mubr.f32.gmra.mrb[0].mxu0 %v3436
      %v3627 = vpop.f32.mrb[0].mxu0
      %v3628 = vadd.f32 0.0, %v3627
      %v3629 = vpop.f32.mrb[0].mxu0
      %3630 = vmatprep.mubr.f32.mxu0 0.0
      %3631 = vmatmul.mubr.f32.gmra.mrb[0].mxu0 %v3439
      %v3632 = vpop.f32.mrb[0].mxu0
      %v3633 = vadd.f32 0.0, %v3632
      %v3634 = vpop.f32.mrb[0].mxu0
      %3635 = vmatprep.mubr.f32.mxu0 0.0
      %3636 = vmatmul.mubr.f32.gmra.mrb[0].mxu0 %v3442
      %v3637 = vpop.f32.mrb[0].mxu0
      %v3638 = vadd.f32 0.0, %v3637
      %v3639 = vpop.f32.mrb[0].mxu0
      %3640 = vmatprep.mubr.f32.mxu0 0.0
      %3641 = vmatmul.mubr.f32.gmra.mrb[0].mxu0 %v3445
      %v3642 = vpop.f32.mrb[0].mxu0
      %v3643 = vadd.f32 0.0, %v3642
      %v3644 = vpop.f32.mrb[0].mxu0
      %3645 = vmatprep.mubr.f32.mxu0 0.0
      %3646 = vmatmul.mubr.f32.gmra.mrb[0].mxu0 %v3448
      %v3647 = vpop.f32.mrb[0].mxu0
      %v3648 = vadd.f32 0.0, %v3647
      %v3649 = vpop.f32.mrb[0].mxu0
      %3650 = vmatprep.mubr.f32.mxu0 0.0
      %3651 = vmatmul.mubr.f32.gmra.mrb[0].mxu0 %v3451
      %v3652 = vpop.f32.mrb[0].mxu0
      %v3653 = vadd.f32 0.0, %v3652
      %v3654 = vpop.f32.mrb[0].mxu0
      %3655 = vmatprep.mubr.f32.mxu0 0.0
      %3656 = vmatmul.mubr.f32.gmra.mrb[0].mxu0 %v3454
      %v3657 = vpop.f32.mrb[0].mxu0
      %v3658 = vadd.f32 0.0, %v3657
      %v3659 = vpop.f32.mrb[0].mxu0
      %3660 = vmatprep.mubr.f32.mxu0 0.0
      %3661 = vmatmul.mubr.f32.gmra.mrb[0].mxu0 %v3457
      %v3662 = vpop.f32.mrb[0].mxu0
      %v3663 = vadd.f32 0.0, %v3662
      %v3664 = vpop.f32.mrb[0].mxu0
      %3665 = vmatprep.mubr.f32.mxu0 0.0
      %3666 = vmatmul.mubr.f32.gmra.mrb[0].mxu0 %v3460
      %v3667 = vpop.f32.mrb[0].mxu0
      %v3668 = vadd.f32 0.0, %v3667
      %v3669 = vpop.f32.mrb[0].mxu0
      %3670 = vmatprep.mubr.f32.mxu0 0.0
      %3671 = vmatmul.mubr.f32.gmra.mrb[0].mxu0 %v3463
      %v3672 = vpop.f32.mrb[0].mxu0
      %v3673 = vadd.f32 0.0, %v3672
      %v3674 = vpop.f32.mrb[0].mxu0
      %3675 = vmatprep.mubr.f32.mxu0 0.0
      %3676 = vmatmul.mubr.f32.gmra.mrb[0].mxu0 %v3466
      %v3677 = vpop.f32.mrb[0].mxu0
      %v3678 = vadd.f32 0.0, %v3677
      %v3679 = vpop.f32.mrb[0].mxu0
      %3680 = vmatprep.mubr.f32.mxu0 0.0
      %3681 = vmatmul.mubr.f32.gmra.mrb[0].mxu0 %v3469
      %v3682 = vpop.f32.mrb[0].mxu0
      %v3683 = vadd.f32 0.0, %v3682
      %v3684 = vpop.f32.mrb[0].mxu0
      %3685 = vmatprep.mubr.f32.mxu0 0.0
      %3686 = vmatmul.mubr.f32.gmra.mrb[0].mxu0 %v3472
      %v3687 = vpop.f32.mrb[0].mxu0
      %v3688 = vadd.f32 0.0, %v3687
      %v3689 = vpop.f32.mrb[0].mxu0
      %3690 = vmatprep.mubr.f32.mxu0 0.0
      %3691 = vmatmul.mubr.f32.gmra.mrb[0].mxu0 %v3475
      %v3692 = vpop.f32.mrb[0].mxu0
      %v3693 = vadd.f32 0.0, %v3692
      %v3694 = vpop.f32.mrb[0].mxu0
      %3695 = vmatprep.mubr.f32.mxu0 0.0
      %3696 = vmatmul.mubr.f32.gmra.mrb[0].mxu0 %v3478
      %v3697 = vpop.f32.mrb[0].mxu0
      %v3698 = vadd.f32 0.0, %v3697
      %v3699 = vpop.f32.mrb[0].mxu0
      %3700 = vmatprep.mubr.f32.mxu0 0.0
      %3701 = vmatmul.mubr.f32.gmra.mrb[0].mxu0 %v3481
      %v3702 = vpop.f32.mrb[0].mxu0
      %v3703 = vadd.f32 0.0, %v3702
      %v3704 = vpop.f32.mrb[0].mxu0
      %3705 = vmatprep.mubr.f32.mxu0 0.0
      %3706 = vmatmul.mubr.f32.gmra.mrb[0].mxu0 %v3484
      %v3707 = vpop.f32.mrb[0].mxu0
      %v3708 = vadd.f32 0.0, %v3707
      %v3709 = vpop.f32.mrb[0].mxu0
      %3710 = vdwg.mxu0
      %v3711 = vadd.f32 %v3324, %v3553
      %v3712 = vadd.f32 %v3325, %v3558
      %v3713 = vadd.f32 %v3326, %v3563
      %v3714 = vadd.f32 %v3327, %v3568
      %v3715 = vadd.f32 %v3328, %v3573
      %v3716 = vadd.f32 %v3329, %v3578
      %v3717 = vadd.f32 %v3330, %v3583
      %v3718 = vadd.f32 %v3331, %v3588
      %v3719 = vadd.f32 %v3332, %v3593
      %v3720 = vadd.f32 %v3333, %v3598
      %v3721 = vadd.f32 %v3334, %v3603
      %v3722 = vadd.f32 %v3335, %v3608
      %v3723 = vadd.f32 %v3336, %v3613
      %v3724 = vadd.f32 %v3337, %v3618
      %v3725 = vadd.f32 %v3338, %v3623
      %v3726 = vadd.f32 %v3339, %v3628
      %v3727 = vadd.f32 %v3340, %v3633
      %v3728 = vadd.f32 %v3341, %v3638
      %v3729 = vadd.f32 %v3342, %v3643
      %v3730 = vadd.f32 %v3343, %v3648
      %v3731 = vadd.f32 %v3344, %v3653
      %v3732 = vadd.f32 %v3345, %v3658
      %v3733 = vadd.f32 %v3346, %v3663
      %v3734 = vadd.f32 %v3347, %v3668
      %v3735 = vadd.f32 %v3348, %v3673
      %v3736 = vadd.f32 %v3349, %v3678
      %v3737 = vadd.f32 %v3350, %v3683
      %v3738 = vadd.f32 %v3351, %v3688
      %v3739 = vadd.f32 %v3352, %v3693
      %v3740 = vadd.f32 %v3353, %v3698
      %v3741 = vadd.f32 %v3354, %v3703
      %v3742 = vadd.f32 %v3355, %v3708
      %3743 = vst [vmem:[%s302] sm:$0xff] %v3711
      %3744 = vst [vmem:[%s302 + $0x8] sm:$0xff] %v3712
      %3745 = vst [vmem:[%s302 + $0x10] sm:$0xff] %v3713
      %3746 = vst [vmem:[%s302 + $0x18] sm:$0xff] %v3714
      %3747 = vst [vmem:[%s302 + $0x20] sm:$0xff] %v3715
      %3748 = vst [vmem:[%s302 + $0x28] sm:$0xff] %v3716
      %3749 = vst [vmem:[%s302 + $0x30] sm:$0xff] %v3717
      %3750 = vst [vmem:[%s302 + $0x38] sm:$0xff] %v3718
      %3751 = vst [vmem:[%s302 + $0x40] sm:$0xff] %v3719
      %3752 = vst [vmem:[%s302 + $0x48] sm:$0xff] %v3720
      %3753 = vst [vmem:[%s302 + $0x50] sm:$0xff] %v3721
      %3754 = vst [vmem:[%s302 + $0x58] sm:$0xff] %v3722
      %3755 = vst [vmem:[%s302 + $0x60] sm:$0xff] %v3723
      %3756 = vst [vmem:[%s302 + $0x68] sm:$0xff] %v3724
      %3757 = vst [vmem:[%s302 + $0x70] sm:$0xff] %v3725
      %3758 = vst [vmem:[%s302 + $0x78] sm:$0xff] %v3726
      %3759 = vst [vmem:[%s302 + $0x80] sm:$0xff] %v3727
      %3760 = vst [vmem:[%s302 + $0x88] sm:$0xff] %v3728
      %3761 = vst [vmem:[%s302 + $0x90] sm:$0xff] %v3729
      %3762 = vst [vmem:[%s302 + $0x98] sm:$0xff] %v3730
      %3763 = vst [vmem:[%s302 + $0xa0] sm:$0xff] %v3731
      %3764 = vst [vmem:[%s302 + $0xa8] sm:$0xff] %v3732
      %3765 = vst [vmem:[%s302 + $0xb0] sm:$0xff] %v3733
      %3766 = vst [vmem:[%s302 + $0xb8] sm:$0xff] %v3734
      %3767 = vst [vmem:[%s302 + $0xc0] sm:$0xff] %v3735
      %3768 = vst [vmem:[%s302 + $0xc8] sm:$0xff] %v3736
      %3769 = vst [vmem:[%s302 + $0xd0] sm:$0xff] %v3737
      %3770 = vst [vmem:[%s302 + $0xd8] sm:$0xff] %v3738
      %3771 = vst [vmem:[%s302 + $0xe0] sm:$0xff] %v3739
      %3772 = vst [vmem:[%s302 + $0xe8] sm:$0xff] %v3740
      %3773 = vst [vmem:[%s302 + $0xf0] sm:$0xff] %v3741
      %3774 = vst [vmem:[%s302 + $0xf8] sm:$0xff] %v3742
      %v3775 = vadd.f32 %v3711, %v3712
      %v3776 = vadd.f32 %v3775, %v3713
      %v3777 = vadd.f32 %v3776, %v3714
      %v3778 = vadd.f32 %v3777, %v3715
      %v3779 = vadd.f32 %v3778, %v3716
      %v3780 = vadd.f32 %v3779, %v3717
      %v3781 = vadd.f32 %v3780, %v3718
      %v3782 = vadd.f32 %v3781, %v3719
      %v3783 = vadd.f32 %v3782, %v3720
      %v3784 = vadd.f32 %v3783, %v3721
      %v3785 = vadd.f32 %v3784, %v3722
      %v3786 = vadd.f32 %v3785, %v3723
      %v3787 = vadd.f32 %v3786, %v3724
      %v3788 = vadd.f32 %v3787, %v3725
      %v3789 = vadd.f32 %v3788, %v3726
      %v3790 = vadd.f32 %v3789, %v3727
      %v3791 = vadd.f32 %v3790, %v3728
      %v3792 = vadd.f32 %v3791, %v3729
      %v3793 = vadd.f32 %v3792, %v3730
      %v3794 = vadd.f32 %v3793, %v3731
      %v3795 = vadd.f32 %v3794, %v3732
      %v3796 = vadd.f32 %v3795, %v3733
      %v3797 = vadd.f32 %v3796, %v3734
      %v3798 = vadd.f32 %v3797, %v3735
      %v3799 = vadd.f32 %v3798, %v3736
      %v3800 = vadd.f32 %v3799, %v3737
      %v3801 = vadd.f32 %v3800, %v3738
      %v3802 = vadd.f32 %v3801, %v3739
      %v3803 = vadd.f32 %v3802, %v3740
      %v3804 = vadd.f32 %v3803, %v3741
      %v3805 = vadd.f32 %v3804, %v3742
      %3806 = vst [vmem:[%s311] sm:$0xff] %v3805
      %v3807 = vmul.f32 %v3711, %v3711
      %v3808 = vmul.f32 %v3712, %v3712
      %v3809 = vmul.f32 %v3713, %v3713
      %v3810 = vmul.f32 %v3714, %v3714
      %v3811 = vmul.f32 %v3715, %v3715
      %v3812 = vmul.f32 %v3716, %v3716
      %v3813 = vmul.f32 %v3717, %v3717
      %v3814 = vmul.f32 %v3718, %v3718
      %v3815 = vmul.f32 %v3719, %v3719
      %v3816 = vmul.f32 %v3720, %v3720
      %v3817 = vmul.f32 %v3721, %v3721
      %v3818 = vmul.f32 %v3722, %v3722
      %v3819 = vmul.f32 %v3723, %v3723
      %v3820 = vmul.f32 %v3724, %v3724
      %v3821 = vmul.f32 %v3725, %v3725
      %v3822 = vmul.f32 %v3726, %v3726
      %v3823 = vmul.f32 %v3727, %v3727
      %v3824 = vmul.f32 %v3728, %v3728
      %v3825 = vmul.f32 %v3729, %v3729
      %v3826 = vmul.f32 %v3730, %v3730
      %v3827 = vmul.f32 %v3731, %v3731
      %v3828 = vmul.f32 %v3732, %v3732
      %v3829 = vmul.f32 %v3733, %v3733
      %v3830 = vmul.f32 %v3734, %v3734
      %v3831 = vmul.f32 %v3735, %v3735
      %v3832 = vmul.f32 %v3736, %v3736
      %v3833 = vmul.f32 %v3737, %v3737
      %v3834 = vmul.f32 %v3738, %v3738
      %v3835 = vmul.f32 %v3739, %v3739
      %v3836 = vmul.f32 %v3740, %v3740
      %v3837 = vmul.f32 %v3741, %v3741
      %v3838 = vmul.f32 %v3742, %v3742
      %v3839 = vadd.f32 %v3807, %v3808
      %v3840 = vadd.f32 %v3839, %v3809
      %v3841 = vadd.f32 %v3840, %v3810
      %v3842 = vadd.f32 %v3841, %v3811
      %v3843 = vadd.f32 %v3842, %v3812
      %v3844 = vadd.f32 %v3843, %v3813
      %v3845 = vadd.f32 %v3844, %v3814
      %v3846 = vadd.f32 %v3845, %v3815
      %v3847 = vadd.f32 %v3846, %v3816
      %v3848 = vadd.f32 %v3847, %v3817
      %v3849 = vadd.f32 %v3848, %v3818
      %v3850 = vadd.f32 %v3849, %v3819
      %v3851 = vadd.f32 %v3850, %v3820
      %v3852 = vadd.f32 %v3851, %v3821
      %v3853 = vadd.f32 %v3852, %v3822
      %v3854 = vadd.f32 %v3853, %v3823
      %v3855 = vadd.f32 %v3854, %v3824
      %v3856 = vadd.f32 %v3855, %v3825
      %v3857 = vadd.f32 %v3856, %v3826
      %v3858 = vadd.f32 %v3857, %v3827
      %v3859 = vadd.f32 %v3858, %v3828
      %v3860 = vadd.f32 %v3859, %v3829
      %v3861 = vadd.f32 %v3860, %v3830
      %v3862 = vadd.f32 %v3861, %v3831
      %v3863 = vadd.f32 %v3862, %v3832
      %v3864 = vadd.f32 %v3863, %v3833
      %v3865 = vadd.f32 %v3864, %v3834
      %v3866 = vadd.f32 %v3865, %v3835
      %v3867 = vadd.f32 %v3866, %v3836
      %v3868 = vadd.f32 %v3867, %v3837
      %v3869 = vadd.f32 %v3868, %v3838
      %3870 = vst [vmem:[%s320] sm:$0xff] %v3869
      %s3871 = sadd.s32 %s21, %s23
      %p3872 = scmp.lt.s32.totalorder %s22, 1
      %s3873 = scalar_select %p3872, %s22, 1
      %p3874 = scmp.lt.s32.totalorder %s3871, 0
      %s3875 = scalar_select %p3874, %s3871, 0
      %s3876 = smul.addr %s3873, 32
      %s3877 = sadd.s32 %s3875, %s3876
      %s3878 = smul.addr %s3877, 8
      %s3879 = scalar_lea.vmem %s2, %s3878
      %s3880 = sadd.s32 %s21, %s23
      %p3881 = scmp.lt.s32.totalorder %s22, 1
      %s3882 = scalar_select %p3881, %s22, 1
      %p3883 = scmp.lt.s32.totalorder %s3880, 0
      %s3884 = scalar_select %p3883, %s3880, 0
      %s3885 = sadd.s32 %s3884, %s3882
      %s3886 = smul.addr %s3885, 8
      %s3887 = scalar_lea.vmem %s3, %s3886
      %s3888 = sadd.s32 %s21, %s23
      %p3889 = scmp.lt.s32.totalorder %s22, 1
      %s3890 = scalar_select %p3889, %s22, 1
      %p3891 = scmp.lt.s32.totalorder %s3888, 0
      %s3892 = scalar_select %p3891, %s3888, 0
      %s3893 = sadd.s32 %s3892, %s3890
      %s3894 = smul.addr %s3893, 8
      %s3895 = scalar_lea.vmem %s4, %s3894
      // Predicated region
      $region29: #{conv_bn_forward.2} parent=27 // pred_check
        %p3896 = pneg %p113
      $region30: #{conv_bn_forward.2} parent=27 // pred_check_branch
        %3898 = sbr.rel (%p3896) target = $region32
      $region31: #{conv_bn_forward.2} parent=27 // pred_region
        %s3899 = sadd.s32 %s21, %s23
      $region32: #{conv_bn_forward.2} parent=27 // pred_fallthru
        _
      // Predicated region
      $region33: #{conv_bn_forward.2} parent=27 // pred_check
        %p3900 = pneg %p143
      $region34: #{conv_bn_forward.2} parent=27 // pred_check_branch
        %3902 = sbr.rel (%p3900) target = $region36
      $region35: #{conv_bn_forward.2} parent=27 // pred_region
        %s3903 = sadd.s32 %s21, %s23
      $region36: #{conv_bn_forward.2} parent=27 // pred_fallthru
        _
      // Predicated region
      $region37: #{conv_bn_forward.2} parent=27 // pred_check
        %p3904 = pneg %p173
      $region38: #{conv_bn_forward.2} parent=27 // pred_check_branch
        %3906 = sbr.rel (%p3904) target = $region40
      $region39: #{conv_bn_forward.2} parent=27 // pred_region
        %s3907 = sadd.s32 %s21, %s23
      $region40: #{conv_bn_forward.2} parent=27 // pred_fallthru
        _
    $region28: #{conv_bn_forward.2} parent=5 // pred_fallthru
      _
    %p3908 = scmp.le.s32.totalorder 2, %s11
    // Predicated region
    $region41: #{conv_bn_forward.2} parent=5 // pred_check
      %p3909 = pneg %p3908
    $region42: #{conv_bn_forward.2} parent=5 // pred_check_branch
      %3911 = sbr.rel (%p3909) target = $region44
    $region43: #{conv_bn_forward.2} parent=5 // pred_region
      %s3912 = ssub.s32 %s11, 2
      // Predicated region
      $region45: #{conv_bn_forward.2} parent=43 // pred_check
        %p3913 = pneg %p119
      $region46: #{conv_bn_forward.2} parent=43 // pred_check_branch
        %3915 = sbr.rel (%p3913) target = $region48
      $region47: #{conv_bn_forward.2} parent=43 // pred_region
        %s3916 = sadd.s32 %s24, %s26
        %p3917 = scmp.lt.s32.totalorder %s25, 1
        %s3918 = scalar_select %p3917, %s25, 1
        %p3919 = scmp.lt.s32.totalorder %s3916, 0
        %s3920 = scalar_select %p3919, %s3916, 0
        %s3921 = smul.addr %s3918, 32
        %s3922 = sadd.s32 %s3920, %s3921
        %s3923 = smul.addr %s3922, 8
        %s3924 = scalar_lea.vmem %s2, %s3923
      $region48: #{conv_bn_forward.2} parent=43 // pred_fallthru
        _
      // Predicated region
      $region49: #{conv_bn_forward.2} parent=43 // pred_check
        %p3925 = pneg %p149
      $region50: #{conv_bn_forward.2} parent=43 // pred_check_branch
        %3927 = sbr.rel (%p3925) target = $region52
      $region51: #{conv_bn_forward.2} parent=43 // pred_region
        %s3928 = sadd.s32 %s24, %s26
        %p3929 = scmp.lt.s32.totalorder %s25, 1
        %s3930 = scalar_select %p3929, %s25, 1
        %p3931 = scmp.lt.s32.totalorder %s3928, 0
        %s3932 = scalar_select %p3931, %s3928, 0
        %s3933 = sadd.s32 %s3932, %s3930
        %s3934 = smul.addr %s3933, 8
        %s3935 = scalar_lea.vmem %s3, %s3934
      $region52: #{conv_bn_forward.2} parent=43 // pred_fallthru
        _
      // Predicated region
      $region53: #{conv_bn_forward.2} parent=43 // pred_check
        %p3936 = pneg %p179
      $region54: #{conv_bn_forward.2} parent=43 // pred_check_branch
        %3938 = sbr.rel (%p3936) target = $region56
      $region55: #{conv_bn_forward.2} parent=43 // pred_region
        %s3939 = sadd.s32 %s24, %s26
        %p3940 = scmp.lt.s32.totalorder %s25, 1
        %s3941 = scalar_select %p3940, %s25, 1
        %p3942 = scmp.lt.s32.totalorder %s3939, 0
        %s3943 = scalar_select %p3942, %s3939, 0
        %s3944 = sadd.s32 %s3943, %s3941
        %s3945 = smul.addr %s3944, 8
        %s3946 = scalar_lea.vmem %s4, %s3945
      $region56: #{conv_bn_forward.2} parent=43 // pred_fallthru
        _
    $region44: #{conv_bn_forward.2} parent=5 // pred_fallthru
      _
  $region6: #{conv_bn_forward.2} parent=0 // loop_footer
    %s15 = sadd.s32 1, %s11
  $region7: #{conv_bn_forward.2} parent=0 // loop_footer_branch
    %10 = sbr.rel target = $region3
  $region8: #{conv_bn_forward.2} parent=0 // loop_exit
    _

</llo_original>
